<compile_context>
chip_gen: v7x
topology: tpu7x:2x2x1
jax: 0.10.0
libtpu: 0.0.40
codegen_flags: <defaults>
</compile_context>

<pallas_src>
import jax
import jax.numpy as jnp
from jax.experimental import pallas as pl
from jax.experimental.pallas import tpu as pltpu


# (fan_in, fan_out) of fc1..fc5
_DIMS = [(2, 32), (32, 64), (64, 256), (256, 64), (64, 1)]


def mlp_kernel(x_ref,
               w1_ref, b1_ref,
               w2_ref, b2_ref,
               w3_ref, b3_ref,
               w4_ref, b4_ref,
               w5_ref, b5_ref,
               o_ref):
    """One batch tile of the 5-layer MLP, computed feature-major.

    x_ref : (2, TILE_M)    feature-major input tile
    w1..4 : (out, in)      PyTorch-layout weights
    w5    : (1, 64)        fc5 weight row (PyTorch layout already)
    bN    : (out, 1)       column biases (fc5 bias is (1, 1))
    o_ref : (1, TILE_M)    lane-dense output row for this tile
    """
    xT = x_ref[...]                          # (2, TILE_M)
    x0 = xT[0:1, :]                          # (1, TILE_M)
    x1 = xT[1:2, :]                          # (1, TILE_M)

    # fc1: K=2 matmul as a rank-2 broadcast update on the VPU.
    h = jnp.cos(w1_ref[:, 0:1] * x0 + w1_ref[:, 1:2] * x1 + b1_ref[...])    # (32, TILE_M)

    # fc2..fc4: MXU matmuls, f32 accumulation, feature-major W @ h.
    h = jnp.cos(jnp.dot(w2_ref[...], h, preferred_element_type=jnp.float32)
                + b2_ref[...])                                              # (64, TILE_M)
    h = jnp.cos(jnp.dot(w3_ref[...], h, preferred_element_type=jnp.float32)
                + b3_ref[...])                                              # (256, TILE_M)
    h = jnp.cos(jnp.dot(w4_ref[...], h, preferred_element_type=jnp.float32)
                + b4_ref[...])                                              # (64, TILE_M)

    # fc5: (1,64)@(64,TILE_M) on the MXU (MXU has slack; frees the VALU/XLU
    # slots previously spent on the multiply + sublane reduce).
    out = jnp.dot(w5_ref[...], h, preferred_element_type=jnp.float32) + b5_ref[...]
    o_ref[...] = out.astype(o_ref.dtype)                                    # (1, TILE_M)


def _round_up(n, m):
    return -(-n // m) * m


def _select_tiling(batch, tile_m):
    """Pick (tile, num_tiles, padded).

    Priorities: minimal padding; then an even tile count >= 2 (so both v7x
    TensorCores get tiles via the "parallel" grid axis); then the largest tile
    (amortizes ~0.35 us per grid step).  Tiles are multiples of 128 (lane dim).
    """
    tile_m = max(128, (int(tile_m) // 128) * 128)
    batch128 = _round_up(max(int(batch), 1), 128)
    cap = min(tile_m, batch128)
    best = None
    t = cap
    while t >= 128:
        n = -(-batch128 // t)
        padded = n * t
        key = (padded, 0 if (n >= 2 and n % 2 == 0) else 1, -t)
        if best is None or key < best[0]:
            best = (key, t, n, padded)
        t -= 128
    _, tile, num_tiles, padded = best
    return tile, num_tiles, padded


def target_net_forward_fm(xT, params, *, tile_m=1024, interpret=False):
    """Feature-major entry point (no wrapper relayout kernels).

    xT: (2, batch) float32.  Returns (1, batch) float32.
    """
    batch = xT.shape[1]
    tile, num_tiles, padded = _select_tiling(batch, tile_m)
    if padded != batch:
        xT = jnp.pad(xT, ((0, 0), (0, padded - batch)))

    w1, b1, w2, b2, w3, b3, w4, b4, w5, b5 = params

    def const_spec(a):
        # Full-array block with constant block index: weights stay
        # VMEM-resident across all grid steps (no re-DMA).
        return pl.BlockSpec(a.shape, lambda i: (0, 0))

    in_specs = [pl.BlockSpec((2, tile), lambda i: (0, i))]
    in_specs += [const_spec(p) for p in (w1, b1, w2, b2, w3, b3, w4, b4, w5, b5)]
    out_specs = pl.BlockSpec((1, tile), lambda i: (0, i))

    flops_per_row = 2 * sum(fi * fo for fi, fo in _DIMS)
    trans_per_row = sum(fo for _, fo in _DIMS[:-1])
    weight_bytes = 4 * sum(fi * fo + fo for fi, fo in _DIMS)
    cost = pl.CostEstimate(
        flops=flops_per_row * padded,
        transcendentals=trans_per_row * padded,
        bytes_accessed=weight_bytes + padded * (2 + 1) * 4,
    )

    out = pl.pallas_call(
        mlp_kernel,
        out_shape=jax.ShapeDtypeStruct((1, padded), jnp.float32),
        grid=(num_tiles,),
        in_specs=in_specs,
        out_specs=out_specs,
        compiler_params=pltpu.CompilerParams(
            dimension_semantics=("parallel",),   # batch axis shards across TCs on v7x
            # Plenty of headroom: per-tile temporaries ~1.7 KiB * tile
            # ((256, tile) fc3 activation dominates) -> ~3.5 MiB at tile=2048.
            # Re-check if tile_m is raised >= 4096 (v7x has only 64 MiB VMEM).
            vmem_limit_bytes=32 * 1024 * 1024,
        ),
        cost_estimate=cost,
        interpret=interpret,
    )(xT, w1, b1, w2, b2, w3, b3, w4, b4, w5, b5)

    if padded != batch:
        out = out[:, :batch]
    return out


def target_net_forward(x, params, *, tile_m=1024, interpret=False):
    """Module-compatible API: x (batch, 2) float32 -> (batch, 1) float32.

    Thin shim over the feature-major path; callers that can provide (2, batch)
    inputs / consume (1, batch) outputs should use target_net_forward_fm to
    skip the transpose/reshape launches entirely.
    """
    batch = x.shape[0]
    out = target_net_forward_fm(x.T, params, tile_m=tile_m, interpret=interpret)
    return out[0].reshape(batch, 1)


def init_params(key):
    """PyTorch nn.Linear-style init. Weights stored (out, in); biases (out, 1)."""
    params = []
    for (fan_in, fan_out) in _DIMS:
        key, kw, kb = jax.random.split(key, 3)
        bound = 1.0 / float(fan_in) ** 0.5
        w = jax.random.uniform(kw, (fan_out, fan_in), jnp.float32, -bound, bound)
        b = jax.random.uniform(kb, (fan_out, 1), jnp.float32, -bound, bound)
        params += [w, b]
    return params


def reference_forward(x, params):
    """Pure-JAX reference of the same math (PyTorch semantics)."""
    w1, b1, w2, b2, w3, b3, w4, b4, w5, b5 = params
    hp = jax.lax.Precision.HIGHEST
    h = jnp.cos(jnp.dot(x, w1.T, precision=hp) + b1[:, 0])
    h = jnp.cos(jnp.dot(h, w2.T, precision=hp) + b2[:, 0])
    h = jnp.cos(jnp.dot(h, w3.T, precision=hp) + b3[:, 0])
    h = jnp.cos(jnp.dot(h, w4.T, precision=hp) + b4[:, 0])
    return jnp.dot(h, w5.T, precision=hp) + b5      # (batch, 1)


if __name__ == "__main__":
    key = jax.random.PRNGKey(0)
    key, kx = jax.random.split(key)

    batch = 8
    x = jax.random.normal(kx, (batch, 2), dtype=jnp.float32)
    params = init_params(key)

    out = jax.block_until_ready(target_net_forward(x, params))
    ref = reference_forward(x, params)

    assert out.shape == (batch, 1), out.shape
    assert jnp.allclose(out, ref, atol=1e-4, rtol=1e-4), (
        "mismatch vs reference, max abs err = "
        + str(float(jnp.max(jnp.abs(out - ref)))))

    # Also exercise a batch that spans multiple tiles / needs padding.
    batch2 = 1536
    key, kx2 = jax.random.split(key)
    x2 = jax.random.normal(kx2, (batch2, 2), dtype=jnp.float32)
    out2 = jax.block_until_ready(target_net_forward(x2, params, tile_m=1024))
    ref2 = reference_forward(x2, params)
    assert out2.shape == (batch2, 1), out2.shape
    assert jnp.allclose(out2, ref2, atol=1e-4, rtol=1e-4), (
        "mismatch vs reference (multi-tile), max abs err = "
        + str(float(jnp.max(jnp.abs(out2 - ref2)))))

    print("KERNEL_OK")
</pallas_src>

<mosaic_0001>
module attributes {stable_mosaic.version = 11 : i64} {
  func.func @mlp_kernel(%arg0: i32, %arg1: memref<2x128xf32, #tpu.memory_space<vmem>>, %arg2: memref<32x2xf32, #tpu.memory_space<vmem>>, %arg3: memref<32x1xf32, #tpu.memory_space<vmem>>, %arg4: memref<64x32xf32, #tpu.memory_space<vmem>>, %arg5: memref<64x1xf32, #tpu.memory_space<vmem>>, %arg6: memref<256x64xf32, #tpu.memory_space<vmem>>, %arg7: memref<256x1xf32, #tpu.memory_space<vmem>>, %arg8: memref<64x256xf32, #tpu.memory_space<vmem>>, %arg9: memref<64x1xf32, #tpu.memory_space<vmem>>, %arg10: memref<1x64xf32, #tpu.memory_space<vmem>>, %arg11: memref<1x1xf32, #tpu.memory_space<vmem>>, %arg12: memref<1x128xf32, #tpu.memory_space<vmem>>) attributes {dimension_semantics = [#tpu.dimension_semantics<parallel>], iteration_bounds = array<i64: 1>, scalar_prefetch = 0 : i64, scratch_operands = 0 : i64, tpu.core_type = #tpu.core_type<tc>, window_params = [{transform_indices = @transform_0, window_bounds = array<i64: 2, 128>}, {pipeline_mode = #tpu.pipeline_mode<synchronous>, transform_indices = @transform_1, window_bounds = array<i64: 32, 2>}, {pipeline_mode = #tpu.pipeline_mode<synchronous>, transform_indices = @transform_2, window_bounds = array<i64: 32, 1>}, {pipeline_mode = #tpu.pipeline_mode<synchronous>, transform_indices = @transform_3, window_bounds = array<i64: 64, 32>}, {pipeline_mode = #tpu.pipeline_mode<synchronous>, transform_indices = @transform_4, window_bounds = array<i64: 64, 1>}, {pipeline_mode = #tpu.pipeline_mode<synchronous>, transform_indices = @transform_5, window_bounds = array<i64: 256, 64>}, {pipeline_mode = #tpu.pipeline_mode<synchronous>, transform_indices = @transform_6, window_bounds = array<i64: 256, 1>}, {pipeline_mode = #tpu.pipeline_mode<synchronous>, transform_indices = @transform_7, window_bounds = array<i64: 64, 256>}, {pipeline_mode = #tpu.pipeline_mode<synchronous>, transform_indices = @transform_8, window_bounds = array<i64: 64, 1>}, {pipeline_mode = #tpu.pipeline_mode<synchronous>, transform_indices = @transform_9, window_bounds = array<i64: 1, 64>}, {pipeline_mode = #tpu.pipeline_mode<synchronous>, transform_indices = @transform_10, window_bounds = array<i64: 1, 1>}, {transform_indices = @transform_11, window_bounds = array<i64: 1, 128>}]} {
    %c0 = arith.constant 0 : index
    %c0_0 = arith.constant 0 : index
    %0 = vector.load %arg1[%c0, %c0_0] : memref<2x128xf32, #tpu.memory_space<vmem>>, vector<2x128xf32>
    %1 = vector.extract_strided_slice %0 {offsets = [0, 0], sizes = [1, 128], strides = [1, 1]} : vector<2x128xf32> to vector<1x128xf32>
    %2 = vector.extract_strided_slice %0 {offsets = [1, 0], sizes = [1, 128], strides = [1, 1]} : vector<2x128xf32> to vector<1x128xf32>
    %c0_1 = arith.constant 0 : index
    %c0_2 = arith.constant 0 : index
    %3 = vector.load %arg2[%c0_1, %c0_2] : memref<32x2xf32, #tpu.memory_space<vmem>>, vector<32x1xf32>
    %4 = vector.broadcast %3 : vector<32x1xf32> to vector<32x128xf32>
    %5 = vector.broadcast %1 : vector<1x128xf32> to vector<32x128xf32>
    %6 = arith.mulf %4, %5 : vector<32x128xf32>
    %c0_3 = arith.constant 0 : index
    %c1 = arith.constant 1 : index
    %7 = vector.load %arg2[%c0_3, %c1] : memref<32x2xf32, #tpu.memory_space<vmem>>, vector<32x1xf32>
    %8 = vector.broadcast %7 : vector<32x1xf32> to vector<32x128xf32>
    %9 = vector.broadcast %2 : vector<1x128xf32> to vector<32x128xf32>
    %10 = arith.mulf %8, %9 : vector<32x128xf32>
    %11 = arith.addf %6, %10 : vector<32x128xf32>
    %c0_4 = arith.constant 0 : index
    %c0_5 = arith.constant 0 : index
    %12 = vector.load %arg3[%c0_4, %c0_5] : memref<32x1xf32, #tpu.memory_space<vmem>>, vector<32x1xf32>
    %13 = vector.broadcast %12 : vector<32x1xf32> to vector<32x128xf32>
    %14 = arith.addf %11, %13 : vector<32x128xf32>
    %15 = math.cos %14 : vector<32x128xf32>
    %c0_6 = arith.constant 0 : index
    %c0_7 = arith.constant 0 : index
    %16 = vector.load %arg4[%c0_6, %c0_7] : memref<64x32xf32, #tpu.memory_space<vmem>>, vector<64x32xf32>
    %cst = arith.constant dense<0.000000e+00> : vector<64x128xf32>
    %17 = tpu.matmul %16, %15, %cst {dimension_numbers = #tpu.dot_dimension_numbers<[1], [0], [0], [1], [0, 0, 1, 1], [], []>} : vector<64x32xf32>, vector<32x128xf32>, vector<64x128xf32> -> vector<64x128xf32>
    %c0_8 = arith.constant 0 : index
    %c0_9 = arith.constant 0 : index
    %18 = vector.load %arg5[%c0_8, %c0_9] : memref<64x1xf32, #tpu.memory_space<vmem>>, vector<64x1xf32>
    %19 = vector.broadcast %18 : vector<64x1xf32> to vector<64x128xf32>
    %20 = arith.addf %17, %19 : vector<64x128xf32>
    %21 = math.cos %20 : vector<64x128xf32>
    %c0_10 = arith.constant 0 : index
    %c0_11 = arith.constant 0 : index
    %22 = vector.load %arg6[%c0_10, %c0_11] : memref<256x64xf32, #tpu.memory_space<vmem>>, vector<256x64xf32>
    %cst_12 = arith.constant dense<0.000000e+00> : vector<256x128xf32>
    %23 = tpu.matmul %22, %21, %cst_12 {dimension_numbers = #tpu.dot_dimension_numbers<[1], [0], [0], [1], [0, 0, 1, 1], [], []>} : vector<256x64xf32>, vector<64x128xf32>, vector<256x128xf32> -> vector<256x128xf32>
    %c0_13 = arith.constant 0 : index
    %c0_14 = arith.constant 0 : index
    %24 = vector.load %arg7[%c0_13, %c0_14] : memref<256x1xf32, #tpu.memory_space<vmem>>, vector<256x1xf32>
    %25 = vector.broadcast %24 : vector<256x1xf32> to vector<256x128xf32>
    %26 = arith.addf %23, %25 : vector<256x128xf32>
    %27 = math.cos %26 : vector<256x128xf32>
    %c0_15 = arith.constant 0 : index
    %c0_16 = arith.constant 0 : index
    %28 = vector.load %arg8[%c0_15, %c0_16] : memref<64x256xf32, #tpu.memory_space<vmem>>, vector<64x256xf32>
    %cst_17 = arith.constant dense<0.000000e+00> : vector<64x128xf32>
    %29 = tpu.matmul %28, %27, %cst_17 {dimension_numbers = #tpu.dot_dimension_numbers<[1], [0], [0], [1], [0, 0, 1, 1], [], []>} : vector<64x256xf32>, vector<256x128xf32>, vector<64x128xf32> -> vector<64x128xf32>
    %c0_18 = arith.constant 0 : index
    %c0_19 = arith.constant 0 : index
    %30 = vector.load %arg9[%c0_18, %c0_19] : memref<64x1xf32, #tpu.memory_space<vmem>>, vector<64x1xf32>
    %31 = vector.broadcast %30 : vector<64x1xf32> to vector<64x128xf32>
    %32 = arith.addf %29, %31 : vector<64x128xf32>
    %33 = math.cos %32 : vector<64x128xf32>
    %c0_20 = arith.constant 0 : index
    %c0_21 = arith.constant 0 : index
    %34 = vector.load %arg10[%c0_20, %c0_21] : memref<1x64xf32, #tpu.memory_space<vmem>>, vector<1x64xf32>
    %cst_22 = arith.constant dense<0.000000e+00> : vector<1x128xf32>
    %35 = tpu.matmul %34, %33, %cst_22 {dimension_numbers = #tpu.dot_dimension_numbers<[1], [0], [0], [1], [0, 0, 1, 1], [], []>} : vector<1x64xf32>, vector<64x128xf32>, vector<1x128xf32> -> vector<1x128xf32>
    %c0_23 = arith.constant 0 : index
    %c0_24 = arith.constant 0 : index
    %36 = vector.load %arg11[%c0_23, %c0_24] : memref<1x1xf32, #tpu.memory_space<vmem>>, vector<1x1xf32>
    %37 = vector.broadcast %36 : vector<1x1xf32> to vector<1x128xf32>
    %38 = arith.addf %35, %37 : vector<1x128xf32>
    %c0_25 = arith.constant 0 : index
    %c0_26 = arith.constant 0 : index
    %39 = vector.load %arg12[%c0_25, %c0_26] : memref<1x128xf32, #tpu.memory_space<vmem>>, vector<1x128xf32>
    tpu.vector_store %arg12[%c0_25, %c0_26], %38 {strides = array<i32>} : memref<1x128xf32, #tpu.memory_space<vmem>>, vector<1x128xf32>,
    return
  }
  func.func @transform_0(%arg0: i32) -> (i32, i32) {
    %c0_i32 = arith.constant 0 : i32
    %c0_i32_0 = arith.constant 0 : i32
    return %c0_i32, %arg0 : i32, i32
  }
  func.func @transform_1(%arg0: i32) -> (i32, i32) {
    %c0_i32 = arith.constant 0 : i32
    %c0_i32_0 = arith.constant 0 : i32
    %c0_i32_1 = arith.constant 0 : i32
    return %c0_i32, %c0_i32_0 : i32, i32
  }
  func.func @transform_2(%arg0: i32) -> (i32, i32) {
    %c0_i32 = arith.constant 0 : i32
    %c0_i32_0 = arith.constant 0 : i32
    %c0_i32_1 = arith.constant 0 : i32
    return %c0_i32, %c0_i32_0 : i32, i32
  }
  func.func @transform_3(%arg0: i32) -> (i32, i32) {
    %c0_i32 = arith.constant 0 : i32
    %c0_i32_0 = arith.constant 0 : i32
    %c0_i32_1 = arith.constant 0 : i32
    return %c0_i32, %c0_i32_0 : i32, i32
  }
  func.func @transform_4(%arg0: i32) -> (i32, i32) {
    %c0_i32 = arith.constant 0 : i32
    %c0_i32_0 = arith.constant 0 : i32
    %c0_i32_1 = arith.constant 0 : i32
    return %c0_i32, %c0_i32_0 : i32, i32
  }
  func.func @transform_5(%arg0: i32) -> (i32, i32) {
    %c0_i32 = arith.constant 0 : i32
    %c0_i32_0 = arith.constant 0 : i32
    %c0_i32_1 = arith.constant 0 : i32
    return %c0_i32, %c0_i32_0 : i32, i32
  }
  func.func @transform_6(%arg0: i32) -> (i32, i32) {
    %c0_i32 = arith.constant 0 : i32
    %c0_i32_0 = arith.constant 0 : i32
    %c0_i32_1 = arith.constant 0 : i32
    return %c0_i32, %c0_i32_0 : i32, i32
  }
  func.func @transform_7(%arg0: i32) -> (i32, i32) {
    %c0_i32 = arith.constant 0 : i32
    %c0_i32_0 = arith.constant 0 : i32
    %c0_i32_1 = arith.constant 0 : i32
    return %c0_i32, %c0_i32_0 : i32, i32
  }
  func.func @transform_8(%arg0: i32) -> (i32, i32) {
    %c0_i32 = arith.constant 0 : i32
    %c0_i32_0 = arith.constant 0 : i32
    %c0_i32_1 = arith.constant 0 : i32
    return %c0_i32, %c0_i32_0 : i32, i32
  }
  func.func @transform_9(%arg0: i32) -> (i32, i32) {
    %c0_i32 = arith.constant 0 : i32
    %c0_i32_0 = arith.constant 0 : i32
    %c0_i32_1 = arith.constant 0 : i32
    return %c0_i32, %c0_i32_0 : i32, i32
  }
  func.func @transform_10(%arg0: i32) -> (i32, i32) {
    %c0_i32 = arith.constant 0 : i32
    %c0_i32_0 = arith.constant 0 : i32
    %c0_i32_1 = arith.constant 0 : i32
    return %c0_i32, %c0_i32_0 : i32, i32
  }
  func.func @transform_11(%arg0: i32) -> (i32, i32) {
    %c0_i32 = arith.constant 0 : i32
    %c0_i32_0 = arith.constant 0 : i32
    return %c0_i32, %arg0 : i32, i32
  }
}

</mosaic_0001>

<llo_original>
// kernel: tpu_custom_call.1
$region0: #{tpu_custom_call.1}
  #allocation0 [shape = 'u32[]', space=smem, size = 0x4, offset = 0x4, fixed_abs, tag = 'smem constant byte address 0x4 - core index']
  #allocation1 [shape = 'u32[144,128]{1,0:T(1,128)}', space=vmem, size = 0x12000, scoped, tag = 'internal scratch']
  #allocation2 [shape = 'f32[1,1]{1,0:T(1,128)S(1)}', space=vmem, size = 0x200, scoped, tag = 'scoped memory for tpu_custom_call.1']
  %s0 = inlined_call_operand.vmem [shape: f32[2,128], index: 0, kind: input, shape index: {}]
  %s1 = inlined_call_operand.vmem [shape: f32[32,2], index: 1, kind: input, shape index: {}]
  %s2 = inlined_call_operand.vmem [shape: f32[32,1], index: 2, kind: input, shape index: {}]
  %s3 = inlined_call_operand.vmem [shape: f32[64,32], index: 3, kind: input, shape index: {}]
  %s4 = inlined_call_operand.vmem [shape: f32[64,1], index: 4, kind: input, shape index: {}]
  %s5 = inlined_call_operand.vmem [shape: f32[256,64], index: 5, kind: input, shape index: {}]
  %s6 = inlined_call_operand.vmem [shape: f32[256,1], index: 6, kind: input, shape index: {}]
  %s7 = inlined_call_operand.vmem [shape: f32[64,256], index: 7, kind: input, shape index: {}]
  %s8 = inlined_call_operand.vmem [shape: f32[64,1], index: 8, kind: input, shape index: {}]
  %s9 = inlined_call_operand.vmem [shape: f32[1,64], index: 9, kind: input, shape index: {}]
  %s10 = inlined_call_operand.<no memory space> [shape: f32[1,1], index: 10, kind: input, shape index: {}]
  %s11 = inlined_call_operand.hbm [shape: f32[1,128], index: 11, kind: output, shape index: {}]
  %s12 = sld [smem:[#allocation0]]
  $region54: #{tpu_custom_call.1} parent=0
    _
  %s14 = ssub.s32 1, %s12
  %s15 = scalar_select 0, %s14, %s12
  %v16 = vstv %s10
  %17 = vst [vmem:[#allocation2] sm:$0x1] %v16
  $region1: #{tpu_custom_call.1} parent=0
    #allocation3 [shape = 'u8[512]{0}', space=vmem, size = 0x400, scoped, tag = 'output window, operand 0, single buffered']
    #allocation4 [shape = 's32[1]{0}', space=sflag, size = 0x4, scoped, tag = 'scoped memory for tpu_custom_call.1']
    %18 = vsyncpa [#allocation4], 0
    // Predicated region
    $region2: #{tpu_custom_call.1} parent=1 // pred_check
      _
    $region3: #{tpu_custom_call.1} parent=1 // pred_check_branch
      %20 = sbr.rel (0) target = $region5
    $region4: #{tpu_custom_call.1} parent=1 // pred_region
      _
    $region5: #{tpu_custom_call.1} parent=1 // pred_fallthru
      _
    // Predicated region
    $region6: #{tpu_custom_call.1} parent=1 // pred_check
      _
    $region7: #{tpu_custom_call.1} parent=1 // pred_check_branch
      %22 = sbr.rel (0) target = $region9
    $region8: #{tpu_custom_call.1} parent=1 // pred_region
      _
    $region9: #{tpu_custom_call.1} parent=1 // pred_fallthru
      _
    // Predicated region
    $region10: #{tpu_custom_call.1} parent=1 // pred_check
      _
    $region11: #{tpu_custom_call.1} parent=1 // pred_check_branch
      %24 = sbr.rel (0) target = $region13
    $region12: #{tpu_custom_call.1} parent=1 // pred_region
      _
    $region13: #{tpu_custom_call.1} parent=1 // pred_fallthru
      _
    // Predicated region
    $region14: #{tpu_custom_call.1} parent=1 // pred_check
      _
    $region15: #{tpu_custom_call.1} parent=1 // pred_check_branch
      %26 = sbr.rel (0) target = $region17
    $region16: #{tpu_custom_call.1} parent=1 // pred_region
      _
    $region17: #{tpu_custom_call.1} parent=1 // pred_fallthru
      _
    // Predicated region
    $region18: #{tpu_custom_call.1} parent=1 // pred_check
      _
    $region19: #{tpu_custom_call.1} parent=1 // pred_check_branch
      %28 = sbr.rel (0) target = $region21
    $region20: #{tpu_custom_call.1} parent=1 // pred_region
      _
    $region21: #{tpu_custom_call.1} parent=1 // pred_fallthru
      _
    // Predicated region
    $region22: #{tpu_custom_call.1} parent=1 // pred_check
      _
    $region23: #{tpu_custom_call.1} parent=1 // pred_check_branch
      %30 = sbr.rel (0) target = $region25
    $region24: #{tpu_custom_call.1} parent=1 // pred_region
      _
    $region25: #{tpu_custom_call.1} parent=1 // pred_fallthru
      _
    // Predicated region
    $region26: #{tpu_custom_call.1} parent=1 // pred_check
      _
    $region27: #{tpu_custom_call.1} parent=1 // pred_check_branch
      %32 = sbr.rel (0) target = $region29
    $region28: #{tpu_custom_call.1} parent=1 // pred_region
      _
    $region29: #{tpu_custom_call.1} parent=1 // pred_fallthru
      _
    // Predicated region
    $region30: #{tpu_custom_call.1} parent=1 // pred_check
      _
    $region31: #{tpu_custom_call.1} parent=1 // pred_check_branch
      %34 = sbr.rel (0) target = $region33
    $region32: #{tpu_custom_call.1} parent=1 // pred_region
      _
    $region33: #{tpu_custom_call.1} parent=1 // pred_fallthru
      _
    // Predicated region
    $region34: #{tpu_custom_call.1} parent=1 // pred_check
      _
    $region35: #{tpu_custom_call.1} parent=1 // pred_check_branch
      %36 = sbr.rel (0) target = $region37
    $region36: #{tpu_custom_call.1} parent=1 // pred_region
      _
    $region37: #{tpu_custom_call.1} parent=1 // pred_fallthru
      _
    // Predicated region
    $region38: #{tpu_custom_call.1} parent=1 // pred_check
      _
    $region39: #{tpu_custom_call.1} parent=1 // pred_check_branch
      %38 = sbr.rel (0) target = $region41
    $region40: #{tpu_custom_call.1} parent=1 // pred_region
      _
    $region41: #{tpu_custom_call.1} parent=1 // pred_fallthru
      _
    // Predicated region
    $region42: #{tpu_custom_call.1} parent=1 // pred_check
      _
    $region43: #{tpu_custom_call.1} parent=1 // pred_check_branch
      %40 = sbr.rel (0) target = $region45
    $region44: #{tpu_custom_call.1} parent=1 // pred_region
      _
    $region45: #{tpu_custom_call.1} parent=1 // pred_fallthru
      _
    %v41 = vld [vmem:[%s0] sm:$0x3]
    %v42 = vld [vmem:[%s1] sm:$0xff]
    %v43 = vld [vmem:[%s1 + $0x8] sm:$0xff]
    %v44 = vld [vmem:[%s1 + $0x10] sm:$0xff]
    %v45 = vld [vmem:[%s1 + $0x18] sm:$0xff]
    %47 = vset.pattern.permute.xlu0 0
    %48 = vperm.xlu0 %47, %v42
    %v49 = vpop.permute.xlu0 %48
    %52 = vset.pattern.permute.xlu0 0
    %53 = vperm.xlu0 %52, %v43
    %v54 = vpop.permute.xlu0 %53
    %57 = vset.pattern.permute.xlu0 0
    %58 = vperm.xlu0 %57, %v44
    %v59 = vpop.permute.xlu0 %58
    %62 = vset.pattern.permute.xlu0 0
    %63 = vperm.xlu0 %62, %v45
    %v64 = vpop.permute.xlu0 %63
    %v66 = vlaneseq
    %v67 = vshrl.u32 %v66, 7
    %v68 = vsub.s32 0, %v67
    %v69 = vrot.slane %v41, %v68
    %v70 = vmul.f32 %v49, %v69
    %v71 = vmul.f32 %v54, %v69
    %v72 = vmul.f32 %v59, %v69
    %v73 = vmul.f32 %v64, %v69
    %74 = vset.pattern.permute.xlu0 1
    %75 = vperm.xlu0 %74, %v42
    %v76 = vpop.permute.xlu0 %75
    %78 = vset.pattern.permute.xlu0 1
    %79 = vperm.xlu0 %78, %v43
    %v80 = vpop.permute.xlu0 %79
    %82 = vset.pattern.permute.xlu0 1
    %83 = vperm.xlu0 %82, %v44
    %v84 = vpop.permute.xlu0 %83
    %86 = vset.pattern.permute.xlu0 1
    %87 = vperm.xlu0 %86, %v45
    %v88 = vpop.permute.xlu0 %87
    %v90 = vlaneseq
    %v91 = vshrl.u32 %v90, 7
    %v92 = vsub.s32 1, %v91
    %v93 = vrot.slane %v41, %v92
    %v94 = vmul.f32 %v76, %v93
    %v95 = vmul.f32 %v80, %v93
    %v96 = vmul.f32 %v84, %v93
    %v97 = vmul.f32 %v88, %v93
    %v98 = vadd.f32 %v70, %v94
    %v99 = vadd.f32 %v71, %v95
    %v100 = vadd.f32 %v72, %v96
    %v101 = vadd.f32 %v73, %v97
    %v102 = vld [vmem:[%s2] sm:$0xff]
    %v103 = vld [vmem:[%s2 + $0x8] sm:$0xff]
    %v104 = vld [vmem:[%s2 + $0x10] sm:$0xff]
    %v105 = vld [vmem:[%s2 + $0x18] sm:$0xff]
    %107 = vset.pattern.permute.xlu0 0
    %108 = vperm.xlu0 %107, %v102
    %v109 = vpop.permute.xlu0 %108
    %112 = vset.pattern.permute.xlu0 0
    %113 = vperm.xlu0 %112, %v103
    %v114 = vpop.permute.xlu0 %113
    %117 = vset.pattern.permute.xlu0 0
    %118 = vperm.xlu0 %117, %v104
    %v119 = vpop.permute.xlu0 %118
    %122 = vset.pattern.permute.xlu0 0
    %123 = vperm.xlu0 %122, %v105
    %v124 = vpop.permute.xlu0 %123
    %v126 = vadd.f32 %v98, %v109
    %v127 = vadd.f32 %v99, %v114
    %v128 = vadd.f32 %v100, %v119
    %v129 = vadd.f32 %v101, %v124
    %v130 = vand.u32 2147483647, %v126
    %vm131 = vcmp.le.f32.partialorder %v130, 0.7853982
    %vm132 = vcmp.lt.s32.totalorder %v126, 0
    %v133 = vand.u32 %v126, 2139095040
    %v134 = vshrl.u32 %v133, 23
    %v135 = vsub.s32 %v134, 127
    %v136 = vand.u32 2147483647, %v126
    %v137 = vand.u32 %v136, 8388607
    %v138 = vor.u32 %v137, 8388608
    %v139 = vsub.s32 0, %v138
    %v140 = vadd.s32 %v135, 1
    %vm141 = vcmp.gt.s32.totalorder %v140, 0
    %v142 = vsel %vm141, %v140, 0
    %v143 = vshrl.u32 %v142, 5
    %v144 = vand.u32 %v142, 31
    %v145 = vsub.s32 32, %v144
    %v146 = vshrl.u32 683565275, %v145
    %v147 = vshll.u32 683565275, %v144
    %v148 = vshrl.u32 2475754826, %v145
    %v149 = vor.u32 %v147, %v148
    %v150 = vshll.u32 2475754826, %v144
    %v151 = vshrl.u32 2131351028, %v145
    %v152 = vor.u32 %v150, %v151
    %v153 = vshll.u32 2131351028, %v144
    %v154 = vshrl.u32 2102212464, %v145
    %v155 = vor.u32 %v153, %v154
    %v156 = vshll.u32 2102212464, %v144
    %v157 = vshrl.u32 920167782, %v145
    %v158 = vor.u32 %v156, %v157
    %v159 = vshll.u32 920167782, %v144
    %v160 = vshrl.u32 1326507024, %v145
    %v161 = vor.u32 %v159, %v160
    %vm162 = vcmp.lt.s32.totalorder %v143, 1
    %vm163 = vcmp.lt.s32.totalorder %v143, 2
    %vm164 = vcmp.lt.s32.totalorder %v143, 3
    %vm165 = vcmp.lt.s32.totalorder %v143, 4
    %v166 = vsel %vm162, %v146, %v149
    %v167 = vsel %vm165, %v155, 2102212464
    %v168 = vsel %vm164, %v152, %v167
    %v169 = vsel %vm163, %v166, %v168
    %v170 = vsel %vm162, %v149, %v152
    %v171 = vsel %vm165, %v158, 920167782
    %v172 = vsel %vm164, %v155, %v171
    %v173 = vsel %vm163, %v170, %v172
    %v174 = vsel %vm162, %v152, %v155
    %v175 = vsel %vm165, %v161, 1326507024
    %v176 = vsel %vm164, %v158, %v175
    %v177 = vsel %vm163, %v174, %v176
    %v178 = vshll.u32 %v138, 8
    %v179 = vmul.u32.u64.compose %v178, %v177
    %v180 = vextract.low.u32 %v179
    %v181 = vextract.high.u32 %v179
    %v182 = vmul.u32.u64.compose %v178, %v173
    %v183 = vextract.low.u32 %v182
    %v184 = vextract.high.u32 %v182
    %v185 = vmul.u32 %v178, %v169
    %v186 = vadd.s32 %v181, %v183
    %vm187 = vc.u32 %v181, %v183
    %v188 = vadd.s32 %v184, 1
    %v189 = vsel %vm187, %v188, %v184
    %v190 = vadd.s32 %v185, %v189
    %v191 = vadd.s32 %v190, 536870912
    %v192 = vshrl.u32 %v191, 30
    %v193 = vshll.u32 %v192, 30
    %v194 = vsub.s32 %v190, %v193
    %vm195 = vcmp.lt.s32.totalorder %v194, 0
    %v196 = vsub.s32 0, %v194
    %v197 = vsel %vm195, %v196, %v194
    %v198 = vclz %v197
    %v199 = vsub.s32 %v198, 2
    %vm200 = vcmp.gt.s32.totalorder 0, %v199
    %v201 = vsel %vm200, 0, %v199
    %v202 = vsub.s32 32, %v201
    %v203 = vshll.u32 %v194, %v201
    %v204 = vshrl.u32 %v186, %v202
    %v205 = vor.u32 %v203, %v204
    %v206 = vsub.s32 4294967266, %v201
    %v207 = vadd.s32 %v206, 127
    %v208 = vshll.u32 %v207, 23
    %v209 = vor.u32 4788187, %v208
    %v210 = vand.u32 2147483647, %v209
    %v212 = vcvt.s32.f32 %v205
    %v213 = vmul.f32 %v212, %v210
    %v214 = vxor.u32 %v213, 2147483648
    %v215 = vsel %vm132, %v214, %v213
    %v216 = vsub.s32 4, %v192
    %v217 = vsel %vm132, %v216, %v192
    %v218 = vsel %vm131, %v126, %v215
    %v219 = vsel %vm131, 0, %v217
    %v220 = vcosq.f32.pop %v218
    %v221 = vsinq.f32.pop %v218
    %vm222 = vweird.f32 %v126
    %v223 = vand.u32 %v219, 3
    %vm224 = vcmp.lt.s32.totalorder %v223, 2
    %vm225 = vcmp.eq.s32.totalorder %v223, 0
    %v226 = vxor.u32 %v221, 2147483648
    %v227 = vsel %vm225, %v220, %v226
    %vm228 = vcmp.eq.s32.totalorder %v223, 2
    %v229 = vxor.u32 %v220, 2147483648
    %v230 = vsel %vm228, %v229, %v221
    %v231 = vsel %vm224, %v227, %v230
    %v232 = vsel %vm222, nan, %v231
    %v233 = vand.u32 2147483647, %v127
    %vm234 = vcmp.le.f32.partialorder %v233, 0.7853982
    %vm235 = vcmp.lt.s32.totalorder %v127, 0
    %v236 = vand.u32 %v127, 2139095040
    %v237 = vshrl.u32 %v236, 23
    %v238 = vsub.s32 %v237, 127
    %v239 = vand.u32 2147483647, %v127
    %v240 = vand.u32 %v239, 8388607
    %v241 = vor.u32 %v240, 8388608
    %v242 = vsub.s32 0, %v241
    %v243 = vadd.s32 %v238, 1
    %vm244 = vcmp.gt.s32.totalorder %v243, 0
    %v245 = vsel %vm244, %v243, 0
    %v246 = vshrl.u32 %v245, 5
    %v247 = vand.u32 %v245, 31
    %v248 = vsub.s32 32, %v247
    %v249 = vshrl.u32 683565275, %v248
    %v250 = vshll.u32 683565275, %v247
    %v251 = vshrl.u32 2475754826, %v248
    %v252 = vor.u32 %v250, %v251
    %v253 = vshll.u32 2475754826, %v247
    %v254 = vshrl.u32 2131351028, %v248
    %v255 = vor.u32 %v253, %v254
    %v256 = vshll.u32 2131351028, %v247
    %v257 = vshrl.u32 2102212464, %v248
    %v258 = vor.u32 %v256, %v257
    %v259 = vshll.u32 2102212464, %v247
    %v260 = vshrl.u32 920167782, %v248
    %v261 = vor.u32 %v259, %v260
    %v262 = vshll.u32 920167782, %v247
    %v263 = vshrl.u32 1326507024, %v248
    %v264 = vor.u32 %v262, %v263
    %vm265 = vcmp.lt.s32.totalorder %v246, 1
    %vm266 = vcmp.lt.s32.totalorder %v246, 2
    %vm267 = vcmp.lt.s32.totalorder %v246, 3
    %vm268 = vcmp.lt.s32.totalorder %v246, 4
    %v269 = vsel %vm265, %v249, %v252
    %v270 = vsel %vm268, %v258, 2102212464
    %v271 = vsel %vm267, %v255, %v270
    %v272 = vsel %vm266, %v269, %v271
    %v273 = vsel %vm265, %v252, %v255
    %v274 = vsel %vm268, %v261, 920167782
    %v275 = vsel %vm267, %v258, %v274
    %v276 = vsel %vm266, %v273, %v275
    %v277 = vsel %vm265, %v255, %v258
    %v278 = vsel %vm268, %v264, 1326507024
    %v279 = vsel %vm267, %v261, %v278
    %v280 = vsel %vm266, %v277, %v279
    %v281 = vshll.u32 %v241, 8
    %v282 = vmul.u32.u64.compose %v281, %v280
    %v283 = vextract.low.u32 %v282
    %v284 = vextract.high.u32 %v282
    %v285 = vmul.u32.u64.compose %v281, %v276
    %v286 = vextract.low.u32 %v285
    %v287 = vextract.high.u32 %v285
    %v288 = vmul.u32 %v281, %v272
    %v289 = vadd.s32 %v284, %v286
    %vm290 = vc.u32 %v284, %v286
    %v291 = vadd.s32 %v287, 1
    %v292 = vsel %vm290, %v291, %v287
    %v293 = vadd.s32 %v288, %v292
    %v294 = vadd.s32 %v293, 536870912
    %v295 = vshrl.u32 %v294, 30
    %v296 = vshll.u32 %v295, 30
    %v297 = vsub.s32 %v293, %v296
    %vm298 = vcmp.lt.s32.totalorder %v297, 0
    %v299 = vsub.s32 0, %v297
    %v300 = vsel %vm298, %v299, %v297
    %v301 = vclz %v300
    %v302 = vsub.s32 %v301, 2
    %vm303 = vcmp.gt.s32.totalorder 0, %v302
    %v304 = vsel %vm303, 0, %v302
    %v305 = vsub.s32 32, %v304
    %v306 = vshll.u32 %v297, %v304
    %v307 = vshrl.u32 %v289, %v305
    %v308 = vor.u32 %v306, %v307
    %v309 = vsub.s32 4294967266, %v304
    %v310 = vadd.s32 %v309, 127
    %v311 = vshll.u32 %v310, 23
    %v312 = vor.u32 4788187, %v311
    %v313 = vand.u32 2147483647, %v312
    %v315 = vcvt.s32.f32 %v308
    %v316 = vmul.f32 %v315, %v313
    %v317 = vxor.u32 %v316, 2147483648
    %v318 = vsel %vm235, %v317, %v316
    %v319 = vsub.s32 4, %v295
    %v320 = vsel %vm235, %v319, %v295
    %v321 = vsel %vm234, %v127, %v318
    %v322 = vsel %vm234, 0, %v320
    %v323 = vcosq.f32.pop %v321
    %v324 = vsinq.f32.pop %v321
    %vm325 = vweird.f32 %v127
    %v326 = vand.u32 %v322, 3
    %vm327 = vcmp.lt.s32.totalorder %v326, 2
    %vm328 = vcmp.eq.s32.totalorder %v326, 0
    %v329 = vxor.u32 %v324, 2147483648
    %v330 = vsel %vm328, %v323, %v329
    %vm331 = vcmp.eq.s32.totalorder %v326, 2
    %v332 = vxor.u32 %v323, 2147483648
    %v333 = vsel %vm331, %v332, %v324
    %v334 = vsel %vm327, %v330, %v333
    %v335 = vsel %vm325, nan, %v334
    %v336 = vand.u32 2147483647, %v128
    %vm337 = vcmp.le.f32.partialorder %v336, 0.7853982
    %vm338 = vcmp.lt.s32.totalorder %v128, 0
    %v339 = vand.u32 %v128, 2139095040
    %v340 = vshrl.u32 %v339, 23
    %v341 = vsub.s32 %v340, 127
    %v342 = vand.u32 2147483647, %v128
    %v343 = vand.u32 %v342, 8388607
    %v344 = vor.u32 %v343, 8388608
    %v345 = vsub.s32 0, %v344
    %v346 = vadd.s32 %v341, 1
    %vm347 = vcmp.gt.s32.totalorder %v346, 0
    %v348 = vsel %vm347, %v346, 0
    %v349 = vshrl.u32 %v348, 5
    %v350 = vand.u32 %v348, 31
    %v351 = vsub.s32 32, %v350
    %v352 = vshrl.u32 683565275, %v351
    %v353 = vshll.u32 683565275, %v350
    %v354 = vshrl.u32 2475754826, %v351
    %v355 = vor.u32 %v353, %v354
    %v356 = vshll.u32 2475754826, %v350
    %v357 = vshrl.u32 2131351028, %v351
    %v358 = vor.u32 %v356, %v357
    %v359 = vshll.u32 2131351028, %v350
    %v360 = vshrl.u32 2102212464, %v351
    %v361 = vor.u32 %v359, %v360
    %v362 = vshll.u32 2102212464, %v350
    %v363 = vshrl.u32 920167782, %v351
    %v364 = vor.u32 %v362, %v363
    %v365 = vshll.u32 920167782, %v350
    %v366 = vshrl.u32 1326507024, %v351
    %v367 = vor.u32 %v365, %v366
    %vm368 = vcmp.lt.s32.totalorder %v349, 1
    %vm369 = vcmp.lt.s32.totalorder %v349, 2
    %vm370 = vcmp.lt.s32.totalorder %v349, 3
    %vm371 = vcmp.lt.s32.totalorder %v349, 4
    %v372 = vsel %vm368, %v352, %v355
    %v373 = vsel %vm371, %v361, 2102212464
    %v374 = vsel %vm370, %v358, %v373
    %v375 = vsel %vm369, %v372, %v374
    %v376 = vsel %vm368, %v355, %v358
    %v377 = vsel %vm371, %v364, 920167782
    %v378 = vsel %vm370, %v361, %v377
    %v379 = vsel %vm369, %v376, %v378
    %v380 = vsel %vm368, %v358, %v361
    %v381 = vsel %vm371, %v367, 1326507024
    %v382 = vsel %vm370, %v364, %v381
    %v383 = vsel %vm369, %v380, %v382
    %v384 = vshll.u32 %v344, 8
    %v385 = vmul.u32.u64.compose %v384, %v383
    %v386 = vextract.low.u32 %v385
    %v387 = vextract.high.u32 %v385
    %v388 = vmul.u32.u64.compose %v384, %v379
    %v389 = vextract.low.u32 %v388
    %v390 = vextract.high.u32 %v388
    %v391 = vmul.u32 %v384, %v375
    %v392 = vadd.s32 %v387, %v389
    %vm393 = vc.u32 %v387, %v389
    %v394 = vadd.s32 %v390, 1
    %v395 = vsel %vm393, %v394, %v390
    %v396 = vadd.s32 %v391, %v395
    %v397 = vadd.s32 %v396, 536870912
    %v398 = vshrl.u32 %v397, 30
    %v399 = vshll.u32 %v398, 30
    %v400 = vsub.s32 %v396, %v399
    %vm401 = vcmp.lt.s32.totalorder %v400, 0
    %v402 = vsub.s32 0, %v400
    %v403 = vsel %vm401, %v402, %v400
    %v404 = vclz %v403
    %v405 = vsub.s32 %v404, 2
    %vm406 = vcmp.gt.s32.totalorder 0, %v405
    %v407 = vsel %vm406, 0, %v405
    %v408 = vsub.s32 32, %v407
    %v409 = vshll.u32 %v400, %v407
    %v410 = vshrl.u32 %v392, %v408
    %v411 = vor.u32 %v409, %v410
    %v412 = vsub.s32 4294967266, %v407
    %v413 = vadd.s32 %v412, 127
    %v414 = vshll.u32 %v413, 23
    %v415 = vor.u32 4788187, %v414
    %v416 = vand.u32 2147483647, %v415
    %v418 = vcvt.s32.f32 %v411
    %v419 = vmul.f32 %v418, %v416
    %v420 = vxor.u32 %v419, 2147483648
    %v421 = vsel %vm338, %v420, %v419
    %v422 = vsub.s32 4, %v398
    %v423 = vsel %vm338, %v422, %v398
    %v424 = vsel %vm337, %v128, %v421
    %v425 = vsel %vm337, 0, %v423
    %v426 = vcosq.f32.pop %v424
    %v427 = vsinq.f32.pop %v424
    %vm428 = vweird.f32 %v128
    %v429 = vand.u32 %v425, 3
    %vm430 = vcmp.lt.s32.totalorder %v429, 2
    %vm431 = vcmp.eq.s32.totalorder %v429, 0
    %v432 = vxor.u32 %v427, 2147483648
    %v433 = vsel %vm431, %v426, %v432
    %vm434 = vcmp.eq.s32.totalorder %v429, 2
    %v435 = vxor.u32 %v426, 2147483648
    %v436 = vsel %vm434, %v435, %v427
    %v437 = vsel %vm430, %v433, %v436
    %v438 = vsel %vm428, nan, %v437
    %v439 = vand.u32 2147483647, %v129
    %vm440 = vcmp.le.f32.partialorder %v439, 0.7853982
    %vm441 = vcmp.lt.s32.totalorder %v129, 0
    %v442 = vand.u32 %v129, 2139095040
    %v443 = vshrl.u32 %v442, 23
    %v444 = vsub.s32 %v443, 127
    %v445 = vand.u32 2147483647, %v129
    %v446 = vand.u32 %v445, 8388607
    %v447 = vor.u32 %v446, 8388608
    %v448 = vsub.s32 0, %v447
    %v449 = vadd.s32 %v444, 1
    %vm450 = vcmp.gt.s32.totalorder %v449, 0
    %v451 = vsel %vm450, %v449, 0
    %v452 = vshrl.u32 %v451, 5
    %v453 = vand.u32 %v451, 31
    %v454 = vsub.s32 32, %v453
    %v455 = vshrl.u32 683565275, %v454
    %v456 = vshll.u32 683565275, %v453
    %v457 = vshrl.u32 2475754826, %v454
    %v458 = vor.u32 %v456, %v457
    %v459 = vshll.u32 2475754826, %v453
    %v460 = vshrl.u32 2131351028, %v454
    %v461 = vor.u32 %v459, %v460
    %v462 = vshll.u32 2131351028, %v453
    %v463 = vshrl.u32 2102212464, %v454
    %v464 = vor.u32 %v462, %v463
    %v465 = vshll.u32 2102212464, %v453
    %v466 = vshrl.u32 920167782, %v454
    %v467 = vor.u32 %v465, %v466
    %v468 = vshll.u32 920167782, %v453
    %v469 = vshrl.u32 1326507024, %v454
    %v470 = vor.u32 %v468, %v469
    %vm471 = vcmp.lt.s32.totalorder %v452, 1
    %vm472 = vcmp.lt.s32.totalorder %v452, 2
    %vm473 = vcmp.lt.s32.totalorder %v452, 3
    %vm474 = vcmp.lt.s32.totalorder %v452, 4
    %v475 = vsel %vm471, %v455, %v458
    %v476 = vsel %vm474, %v464, 2102212464
    %v477 = vsel %vm473, %v461, %v476
    %v478 = vsel %vm472, %v475, %v477
    %v479 = vsel %vm471, %v458, %v461
    %v480 = vsel %vm474, %v467, 920167782
    %v481 = vsel %vm473, %v464, %v480
    %v482 = vsel %vm472, %v479, %v481
    %v483 = vsel %vm471, %v461, %v464
    %v484 = vsel %vm474, %v470, 1326507024
    %v485 = vsel %vm473, %v467, %v484
    %v486 = vsel %vm472, %v483, %v485
    %v487 = vshll.u32 %v447, 8
    %v488 = vmul.u32.u64.compose %v487, %v486
    %v489 = vextract.low.u32 %v488
    %v490 = vextract.high.u32 %v488
    %v491 = vmul.u32.u64.compose %v487, %v482
    %v492 = vextract.low.u32 %v491
    %v493 = vextract.high.u32 %v491
    %v494 = vmul.u32 %v487, %v478
    %v495 = vadd.s32 %v490, %v492
    %vm496 = vc.u32 %v490, %v492
    %v497 = vadd.s32 %v493, 1
    %v498 = vsel %vm496, %v497, %v493
    %v499 = vadd.s32 %v494, %v498
    %v500 = vadd.s32 %v499, 536870912
    %v501 = vshrl.u32 %v500, 30
    %v502 = vshll.u32 %v501, 30
    %v503 = vsub.s32 %v499, %v502
    %vm504 = vcmp.lt.s32.totalorder %v503, 0
    %v505 = vsub.s32 0, %v503
    %v506 = vsel %vm504, %v505, %v503
    %v507 = vclz %v506
    %v508 = vsub.s32 %v507, 2
    %vm509 = vcmp.gt.s32.totalorder 0, %v508
    %v510 = vsel %vm509, 0, %v508
    %v511 = vsub.s32 32, %v510
    %v512 = vshll.u32 %v503, %v510
    %v513 = vshrl.u32 %v495, %v511
    %v514 = vor.u32 %v512, %v513
    %v515 = vsub.s32 4294967266, %v510
    %v516 = vadd.s32 %v515, 127
    %v517 = vshll.u32 %v516, 23
    %v518 = vor.u32 4788187, %v517
    %v519 = vand.u32 2147483647, %v518
    %v521 = vcvt.s32.f32 %v514
    %v522 = vmul.f32 %v521, %v519
    %v523 = vxor.u32 %v522, 2147483648
    %v524 = vsel %vm441, %v523, %v522
    %v525 = vsub.s32 4, %v501
    %v526 = vsel %vm441, %v525, %v501
    %v527 = vsel %vm440, %v129, %v524
    %v528 = vsel %vm440, 0, %v526
    %v529 = vcosq.f32.pop %v527
    %v530 = vsinq.f32.pop %v527
    %vm531 = vweird.f32 %v129
    %v532 = vand.u32 %v528, 3
    %vm533 = vcmp.lt.s32.totalorder %v532, 2
    %vm534 = vcmp.eq.s32.totalorder %v532, 0
    %v535 = vxor.u32 %v530, 2147483648
    %v536 = vsel %vm534, %v529, %v535
    %vm537 = vcmp.eq.s32.totalorder %v532, 2
    %v538 = vxor.u32 %v529, 2147483648
    %v539 = vsel %vm537, %v538, %v530
    %v540 = vsel %vm533, %v536, %v539
    %v541 = vsel %vm531, nan, %v540
    %v542 = vld [vmem:[%s3] sm:$0xff]
    %v543 = vld [vmem:[%s3 + $0x8] sm:$0xff]
    %v544 = vld [vmem:[%s3 + $0x10] sm:$0xff]
    %v545 = vld [vmem:[%s3 + $0x18] sm:$0xff]
    %v546 = vld [vmem:[%s3 + $0x20] sm:$0xff]
    %v547 = vld [vmem:[%s3 + $0x28] sm:$0xff]
    %v548 = vld [vmem:[%s3 + $0x30] sm:$0xff]
    %v549 = vld [vmem:[%s3 + $0x38] sm:$0xff]
    %v550 = vld [vmem:[%s4] sm:$0xff]
    %v551 = vld [vmem:[%s4 + $0x8] sm:$0xff]
    %v552 = vld [vmem:[%s4 + $0x10] sm:$0xff]
    %v553 = vld [vmem:[%s4 + $0x18] sm:$0xff]
    %v554 = vld [vmem:[%s4 + $0x20] sm:$0xff]
    %v555 = vld [vmem:[%s4 + $0x28] sm:$0xff]
    %v556 = vld [vmem:[%s4 + $0x30] sm:$0xff]
    %v557 = vld [vmem:[%s4 + $0x38] sm:$0xff]
    %559 = vset.pattern.permute.xlu0 0
    %560 = vperm.xlu0 %559, %v550
    %v561 = vpop.permute.xlu0 %560
    %564 = vset.pattern.permute.xlu0 0
    %565 = vperm.xlu0 %564, %v551
    %v566 = vpop.permute.xlu0 %565
    %569 = vset.pattern.permute.xlu0 0
    %570 = vperm.xlu0 %569, %v552
    %v571 = vpop.permute.xlu0 %570
    %574 = vset.pattern.permute.xlu0 0
    %575 = vperm.xlu0 %574, %v553
    %v576 = vpop.permute.xlu0 %575
    %579 = vset.pattern.permute.xlu0 0
    %580 = vperm.xlu0 %579, %v554
    %v581 = vpop.permute.xlu0 %580
    %584 = vset.pattern.permute.xlu0 0
    %585 = vperm.xlu0 %584, %v555
    %v586 = vpop.permute.xlu0 %585
    %589 = vset.pattern.permute.xlu0 0
    %590 = vperm.xlu0 %589, %v556
    %v591 = vpop.permute.xlu0 %590
    %594 = vset.pattern.permute.xlu0 0
    %595 = vperm.xlu0 %594, %v557
    %v596 = vpop.permute.xlu0 %595
    %vm598 = vcmask 261120
    %v600 = vsel %vm598, %v542, 0
    %v603 = vsel %vm598, %v543, 0
    %v606 = vsel %vm598, %v544, 0
    %v609 = vsel %vm598, %v545, 0
    %v612 = vsel %vm598, %v546, 0
    %v615 = vsel %vm598, %v547, 0
    %v618 = vsel %vm598, %v548, 0
    %v621 = vsel %vm598, %v549, 0
    %623 = vmatprep.subr.mxu0 0.0
    %624 = vmatpush1.msra.mxu0 %v232
    %625 = vmatprep.subr.mxu0 0.0
    %626 = vmatpush1.msra.mxu0 %v335
    %627 = vmatprep.subr.mxu0 0.0
    %628 = vmatpush1.msra.mxu0 %v438
    %629 = vmatprep.subr.mxu0 0.0
    %630 = vmatpush1.msra.mxu0 %v541
    %631 = vmatprep.subr.mxu0 0.0
    %632 = vmatpush1.msra.mxu0 0.0
    %633 = vmatprep.subr.mxu0 0.0
    %634 = vmatpush1.msra.mxu0 0.0
    %635 = vmatprep.subr.mxu0 0.0
    %636 = vmatpush1.msra.mxu0 0.0
    %637 = vmatprep.subr.mxu0 0.0
    %638 = vmatpush1.msra.mxu0 0.0
    %639 = vmatprep.subr.mxu0 0.0
    %640 = vmatpush1.msra.mxu0 0.0
    %641 = vmatprep.subr.mxu0 0.0
    %642 = vmatpush1.msra.mxu0 0.0
    %643 = vmatprep.subr.mxu0 0.0
    %644 = vmatpush1.msra.mxu0 0.0
    %645 = vmatprep.subr.mxu0 0.0
    %646 = vmatpush1.msra.mxu0 0.0
    %647 = vmatprep.subr.mxu0 0.0
    %648 = vmatpush1.msra.mxu0 0.0
    %649 = vmatprep.subr.mxu0 0.0
    %650 = vmatpush1.msra.mxu0 0.0
    %651 = vmatprep.subr.mxu0 0.0
    %652 = vmatpush1.msra.mxu0 0.0
    %653 = vmatprep.subr.mxu0 0.0
    %654 = vmatpush1.msra.mxu0 0.0
    %655 = vmatprep.subr.mxu0 0.0
    %656 = vmatpush1.msra.mxu0 0.0
    %657 = vmatprep.subr.mxu0 0.0
    %658 = vmatpush1.msra.mxu0 0.0
    %659 = vmatprep.subr.mxu0 0.0
    %660 = vmatpush1.msra.mxu0 0.0
    %661 = vmatprep.subr.mxu0 0.0
    %662 = vmatpush1.msra.mxu0 0.0
    %663 = vmatprep.subr.mxu0 0.0
    %664 = vmatpush1.msra.mxu0 0.0
    %665 = vmatprep.subr.mxu0 0.0
    %666 = vmatpush1.msra.mxu0 0.0
    %667 = vmatprep.subr.mxu0 0.0
    %668 = vmatpush1.msra.mxu0 0.0
    %669 = vmatprep.subr.mxu0 0.0
    %670 = vmatpush1.msra.mxu0 0.0
    %671 = vmatprep.subr.mxu0 0.0
    %672 = vmatpush1.msra.mxu0 0.0
    %673 = vmatprep.subr.mxu0 0.0
    %674 = vmatpush1.msra.mxu0 0.0
    %675 = vmatprep.subr.mxu0 0.0
    %676 = vmatpush1.msra.mxu0 0.0
    %677 = vmatprep.subr.mxu0 0.0
    %678 = vmatpush1.msra.mxu0 0.0
    %679 = vmatprep.subr.mxu0 0.0
    %680 = vmatpush1.msra.mxu0 0.0
    %681 = vmatprep.subr.mxu0 0.0
    %682 = vmatpush1.msra.mxu0 0.0
    %683 = vmatprep.subr.mxu0 0.0
    %684 = vmatpush1.msra.mxu0 0.0
    %685 = vmatprep.subr.mxu0 0.0
    %686 = vmatpush1.msra.mxu0 0.0
    %687 = vmatprep.mubr.f32.mxu0 0.0
    %688 = vmatmul.mubr.f32.gmra.mrb[0].mxu0 %v600
    %v689 = vpop.f32.mrb[0].mxu0
    %v690 = vadd.f32 %v561, %v689
    %v691 = vpop.f32.mrb[0].mxu0
    %692 = vmatprep.mubr.f32.mxu0 0.0
    %693 = vmatmul.mubr.f32.gmra.mrb[0].mxu0 %v603
    %v694 = vpop.f32.mrb[0].mxu0
    %v695 = vadd.f32 %v566, %v694
    %v696 = vpop.f32.mrb[0].mxu0
    %697 = vmatprep.mubr.f32.mxu0 0.0
    %698 = vmatmul.mubr.f32.gmra.mrb[0].mxu0 %v606
    %v699 = vpop.f32.mrb[0].mxu0
    %v700 = vadd.f32 %v571, %v699
    %v701 = vpop.f32.mrb[0].mxu0
    %702 = vmatprep.mubr.f32.mxu0 0.0
    %703 = vmatmul.mubr.f32.gmra.mrb[0].mxu0 %v609
    %v704 = vpop.f32.mrb[0].mxu0
    %v705 = vadd.f32 %v576, %v704
    %v706 = vpop.f32.mrb[0].mxu0
    %707 = vmatprep.mubr.f32.mxu0 0.0
    %708 = vmatmul.mubr.f32.gmra.mrb[0].mxu0 %v612
    %v709 = vpop.f32.mrb[0].mxu0
    %v710 = vadd.f32 %v581, %v709
    %v711 = vpop.f32.mrb[0].mxu0
    %712 = vmatprep.mubr.f32.mxu0 0.0
    %713 = vmatmul.mubr.f32.gmra.mrb[0].mxu0 %v615
    %v714 = vpop.f32.mrb[0].mxu0
    %v715 = vadd.f32 %v586, %v714
    %v716 = vpop.f32.mrb[0].mxu0
    %717 = vmatprep.mubr.f32.mxu0 0.0
    %718 = vmatmul.mubr.f32.gmra.mrb[0].mxu0 %v618
    %v719 = vpop.f32.mrb[0].mxu0
    %v720 = vadd.f32 %v591, %v719
    %v721 = vpop.f32.mrb[0].mxu0
    %722 = vmatprep.mubr.f32.mxu0 0.0
    %723 = vmatmul.mubr.f32.gmra.mrb[0].mxu0 %v621
    %v724 = vpop.f32.mrb[0].mxu0
    %v725 = vadd.f32 %v596, %v724
    %v726 = vpop.f32.mrb[0].mxu0
    %727 = vdwg.mxu0
    %v728 = vand.u32 2147483647, %v690
    %vm729 = vcmp.le.f32.partialorder %v728, 0.7853982
    %vm730 = vcmp.lt.s32.totalorder %v690, 0
    %v731 = vand.u32 %v690, 2139095040
    %v732 = vshrl.u32 %v731, 23
    %v733 = vsub.s32 %v732, 127
    %v734 = vand.u32 2147483647, %v690
    %v735 = vand.u32 %v734, 8388607
    %v736 = vor.u32 %v735, 8388608
    %v737 = vsub.s32 0, %v736
    %v738 = vadd.s32 %v733, 1
    %vm739 = vcmp.gt.s32.totalorder %v738, 0
    %v740 = vsel %vm739, %v738, 0
    %v741 = vshrl.u32 %v740, 5
    %v742 = vand.u32 %v740, 31
    %v743 = vsub.s32 32, %v742
    %v744 = vshrl.u32 683565275, %v743
    %v745 = vshll.u32 683565275, %v742
    %v746 = vshrl.u32 2475754826, %v743
    %v747 = vor.u32 %v745, %v746
    %v748 = vshll.u32 2475754826, %v742
    %v749 = vshrl.u32 2131351028, %v743
    %v750 = vor.u32 %v748, %v749
    %v751 = vshll.u32 2131351028, %v742
    %v752 = vshrl.u32 2102212464, %v743
    %v753 = vor.u32 %v751, %v752
    %v754 = vshll.u32 2102212464, %v742
    %v755 = vshrl.u32 920167782, %v743
    %v756 = vor.u32 %v754, %v755
    %v757 = vshll.u32 920167782, %v742
    %v758 = vshrl.u32 1326507024, %v743
    %v759 = vor.u32 %v757, %v758
    %vm760 = vcmp.lt.s32.totalorder %v741, 1
    %vm761 = vcmp.lt.s32.totalorder %v741, 2
    %vm762 = vcmp.lt.s32.totalorder %v741, 3
    %vm763 = vcmp.lt.s32.totalorder %v741, 4
    %v764 = vsel %vm760, %v744, %v747
    %v765 = vsel %vm763, %v753, 2102212464
    %v766 = vsel %vm762, %v750, %v765
    %v767 = vsel %vm761, %v764, %v766
    %v768 = vsel %vm760, %v747, %v750
    %v769 = vsel %vm763, %v756, 920167782
    %v770 = vsel %vm762, %v753, %v769
    %v771 = vsel %vm761, %v768, %v770
    %v772 = vsel %vm760, %v750, %v753
    %v773 = vsel %vm763, %v759, 1326507024
    %v774 = vsel %vm762, %v756, %v773
    %v775 = vsel %vm761, %v772, %v774
    %v776 = vshll.u32 %v736, 8
    %v777 = vmul.u32.u64.compose %v776, %v775
    %v778 = vextract.low.u32 %v777
    %v779 = vextract.high.u32 %v777
    %v780 = vmul.u32.u64.compose %v776, %v771
    %v781 = vextract.low.u32 %v780
    %v782 = vextract.high.u32 %v780
    %v783 = vmul.u32 %v776, %v767
    %v784 = vadd.s32 %v779, %v781
    %vm785 = vc.u32 %v779, %v781
    %v786 = vadd.s32 %v782, 1
    %v787 = vsel %vm785, %v786, %v782
    %v788 = vadd.s32 %v783, %v787
    %v789 = vadd.s32 %v788, 536870912
    %v790 = vshrl.u32 %v789, 30
    %v791 = vshll.u32 %v790, 30
    %v792 = vsub.s32 %v788, %v791
    %vm793 = vcmp.lt.s32.totalorder %v792, 0
    %v794 = vsub.s32 0, %v792
    %v795 = vsel %vm793, %v794, %v792
    %v796 = vclz %v795
    %v797 = vsub.s32 %v796, 2
    %vm798 = vcmp.gt.s32.totalorder 0, %v797
    %v799 = vsel %vm798, 0, %v797
    %v800 = vsub.s32 32, %v799
    %v801 = vshll.u32 %v792, %v799
    %v802 = vshrl.u32 %v784, %v800
    %v803 = vor.u32 %v801, %v802
    %v804 = vsub.s32 4294967266, %v799
    %v805 = vadd.s32 %v804, 127
    %v806 = vshll.u32 %v805, 23
    %v807 = vor.u32 4788187, %v806
    %v808 = vand.u32 2147483647, %v807
    %v810 = vcvt.s32.f32 %v803
    %v811 = vmul.f32 %v810, %v808
    %v812 = vxor.u32 %v811, 2147483648
    %v813 = vsel %vm730, %v812, %v811
    %v814 = vsub.s32 4, %v790
    %v815 = vsel %vm730, %v814, %v790
    %v816 = vsel %vm729, %v690, %v813
    %v817 = vsel %vm729, 0, %v815
    %v818 = vcosq.f32.pop %v816
    %v819 = vsinq.f32.pop %v816
    %vm820 = vweird.f32 %v690
    %v821 = vand.u32 %v817, 3
    %vm822 = vcmp.lt.s32.totalorder %v821, 2
    %vm823 = vcmp.eq.s32.totalorder %v821, 0
    %v824 = vxor.u32 %v819, 2147483648
    %v825 = vsel %vm823, %v818, %v824
    %vm826 = vcmp.eq.s32.totalorder %v821, 2
    %v827 = vxor.u32 %v818, 2147483648
    %v828 = vsel %vm826, %v827, %v819
    %v829 = vsel %vm822, %v825, %v828
    %v830 = vsel %vm820, nan, %v829
    %v831 = vand.u32 2147483647, %v695
    %vm832 = vcmp.le.f32.partialorder %v831, 0.7853982
    %vm833 = vcmp.lt.s32.totalorder %v695, 0
    %v834 = vand.u32 %v695, 2139095040
    %v835 = vshrl.u32 %v834, 23
    %v836 = vsub.s32 %v835, 127
    %v837 = vand.u32 2147483647, %v695
    %v838 = vand.u32 %v837, 8388607
    %v839 = vor.u32 %v838, 8388608
    %v840 = vsub.s32 0, %v839
    %v841 = vadd.s32 %v836, 1
    %vm842 = vcmp.gt.s32.totalorder %v841, 0
    %v843 = vsel %vm842, %v841, 0
    %v844 = vshrl.u32 %v843, 5
    %v845 = vand.u32 %v843, 31
    %v846 = vsub.s32 32, %v845
    %v847 = vshrl.u32 683565275, %v846
    %v848 = vshll.u32 683565275, %v845
    %v849 = vshrl.u32 2475754826, %v846
    %v850 = vor.u32 %v848, %v849
    %v851 = vshll.u32 2475754826, %v845
    %v852 = vshrl.u32 2131351028, %v846
    %v853 = vor.u32 %v851, %v852
    %v854 = vshll.u32 2131351028, %v845
    %v855 = vshrl.u32 2102212464, %v846
    %v856 = vor.u32 %v854, %v855
    %v857 = vshll.u32 2102212464, %v845
    %v858 = vshrl.u32 920167782, %v846
    %v859 = vor.u32 %v857, %v858
    %v860 = vshll.u32 920167782, %v845
    %v861 = vshrl.u32 1326507024, %v846
    %v862 = vor.u32 %v860, %v861
    %vm863 = vcmp.lt.s32.totalorder %v844, 1
    %vm864 = vcmp.lt.s32.totalorder %v844, 2
    %vm865 = vcmp.lt.s32.totalorder %v844, 3
    %vm866 = vcmp.lt.s32.totalorder %v844, 4
    %v867 = vsel %vm863, %v847, %v850
    %v868 = vsel %vm866, %v856, 2102212464
    %v869 = vsel %vm865, %v853, %v868
    %v870 = vsel %vm864, %v867, %v869
    %v871 = vsel %vm863, %v850, %v853
    %v872 = vsel %vm866, %v859, 920167782
    %v873 = vsel %vm865, %v856, %v872
    %v874 = vsel %vm864, %v871, %v873
    %v875 = vsel %vm863, %v853, %v856
    %v876 = vsel %vm866, %v862, 1326507024
    %v877 = vsel %vm865, %v859, %v876
    %v878 = vsel %vm864, %v875, %v877
    %v879 = vshll.u32 %v839, 8
    %v880 = vmul.u32.u64.compose %v879, %v878
    %v881 = vextract.low.u32 %v880
    %v882 = vextract.high.u32 %v880
    %v883 = vmul.u32.u64.compose %v879, %v874
    %v884 = vextract.low.u32 %v883
    %v885 = vextract.high.u32 %v883
    %v886 = vmul.u32 %v879, %v870
    %v887 = vadd.s32 %v882, %v884
    %vm888 = vc.u32 %v882, %v884
    %v889 = vadd.s32 %v885, 1
    %v890 = vsel %vm888, %v889, %v885
    %v891 = vadd.s32 %v886, %v890
    %v892 = vadd.s32 %v891, 536870912
    %v893 = vshrl.u32 %v892, 30
    %v894 = vshll.u32 %v893, 30
    %v895 = vsub.s32 %v891, %v894
    %vm896 = vcmp.lt.s32.totalorder %v895, 0
    %v897 = vsub.s32 0, %v895
    %v898 = vsel %vm896, %v897, %v895
    %v899 = vclz %v898
    %v900 = vsub.s32 %v899, 2
    %vm901 = vcmp.gt.s32.totalorder 0, %v900
    %v902 = vsel %vm901, 0, %v900
    %v903 = vsub.s32 32, %v902
    %v904 = vshll.u32 %v895, %v902
    %v905 = vshrl.u32 %v887, %v903
    %v906 = vor.u32 %v904, %v905
    %v907 = vsub.s32 4294967266, %v902
    %v908 = vadd.s32 %v907, 127
    %v909 = vshll.u32 %v908, 23
    %v910 = vor.u32 4788187, %v909
    %v911 = vand.u32 2147483647, %v910
    %v913 = vcvt.s32.f32 %v906
    %v914 = vmul.f32 %v913, %v911
    %v915 = vxor.u32 %v914, 2147483648
    %v916 = vsel %vm833, %v915, %v914
    %v917 = vsub.s32 4, %v893
    %v918 = vsel %vm833, %v917, %v893
    %v919 = vsel %vm832, %v695, %v916
    %v920 = vsel %vm832, 0, %v918
    %v921 = vcosq.f32.pop %v919
    %v922 = vsinq.f32.pop %v919
    %vm923 = vweird.f32 %v695
    %v924 = vand.u32 %v920, 3
    %vm925 = vcmp.lt.s32.totalorder %v924, 2
    %vm926 = vcmp.eq.s32.totalorder %v924, 0
    %v927 = vxor.u32 %v922, 2147483648
    %v928 = vsel %vm926, %v921, %v927
    %vm929 = vcmp.eq.s32.totalorder %v924, 2
    %v930 = vxor.u32 %v921, 2147483648
    %v931 = vsel %vm929, %v930, %v922
    %v932 = vsel %vm925, %v928, %v931
    %v933 = vsel %vm923, nan, %v932
    %v934 = vand.u32 2147483647, %v700
    %vm935 = vcmp.le.f32.partialorder %v934, 0.7853982
    %vm936 = vcmp.lt.s32.totalorder %v700, 0
    %v937 = vand.u32 %v700, 2139095040
    %v938 = vshrl.u32 %v937, 23
    %v939 = vsub.s32 %v938, 127
    %v940 = vand.u32 2147483647, %v700
    %v941 = vand.u32 %v940, 8388607
    %v942 = vor.u32 %v941, 8388608
    %v943 = vsub.s32 0, %v942
    %v944 = vadd.s32 %v939, 1
    %vm945 = vcmp.gt.s32.totalorder %v944, 0
    %v946 = vsel %vm945, %v944, 0
    %v947 = vshrl.u32 %v946, 5
    %v948 = vand.u32 %v946, 31
    %v949 = vsub.s32 32, %v948
    %v950 = vshrl.u32 683565275, %v949
    %v951 = vshll.u32 683565275, %v948
    %v952 = vshrl.u32 2475754826, %v949
    %v953 = vor.u32 %v951, %v952
    %v954 = vshll.u32 2475754826, %v948
    %v955 = vshrl.u32 2131351028, %v949
    %v956 = vor.u32 %v954, %v955
    %v957 = vshll.u32 2131351028, %v948
    %v958 = vshrl.u32 2102212464, %v949
    %v959 = vor.u32 %v957, %v958
    %v960 = vshll.u32 2102212464, %v948
    %v961 = vshrl.u32 920167782, %v949
    %v962 = vor.u32 %v960, %v961
    %v963 = vshll.u32 920167782, %v948
    %v964 = vshrl.u32 1326507024, %v949
    %v965 = vor.u32 %v963, %v964
    %vm966 = vcmp.lt.s32.totalorder %v947, 1
    %vm967 = vcmp.lt.s32.totalorder %v947, 2
    %vm968 = vcmp.lt.s32.totalorder %v947, 3
    %vm969 = vcmp.lt.s32.totalorder %v947, 4
    %v970 = vsel %vm966, %v950, %v953
    %v971 = vsel %vm969, %v959, 2102212464
    %v972 = vsel %vm968, %v956, %v971
    %v973 = vsel %vm967, %v970, %v972
    %v974 = vsel %vm966, %v953, %v956
    %v975 = vsel %vm969, %v962, 920167782
    %v976 = vsel %vm968, %v959, %v975
    %v977 = vsel %vm967, %v974, %v976
    %v978 = vsel %vm966, %v956, %v959
    %v979 = vsel %vm969, %v965, 1326507024
    %v980 = vsel %vm968, %v962, %v979
    %v981 = vsel %vm967, %v978, %v980
    %v982 = vshll.u32 %v942, 8
    %v983 = vmul.u32.u64.compose %v982, %v981
    %v984 = vextract.low.u32 %v983
    %v985 = vextract.high.u32 %v983
    %v986 = vmul.u32.u64.compose %v982, %v977
    %v987 = vextract.low.u32 %v986
    %v988 = vextract.high.u32 %v986
    %v989 = vmul.u32 %v982, %v973
    %v990 = vadd.s32 %v985, %v987
    %vm991 = vc.u32 %v985, %v987
    %v992 = vadd.s32 %v988, 1
    %v993 = vsel %vm991, %v992, %v988
    %v994 = vadd.s32 %v989, %v993
    %v995 = vadd.s32 %v994, 536870912
    %v996 = vshrl.u32 %v995, 30
    %v997 = vshll.u32 %v996, 30
    %v998 = vsub.s32 %v994, %v997
    %vm999 = vcmp.lt.s32.totalorder %v998, 0
    %v1000 = vsub.s32 0, %v998
    %v1001 = vsel %vm999, %v1000, %v998
    %v1002 = vclz %v1001
    %v1003 = vsub.s32 %v1002, 2
    %vm1004 = vcmp.gt.s32.totalorder 0, %v1003
    %v1005 = vsel %vm1004, 0, %v1003
    %v1006 = vsub.s32 32, %v1005
    %v1007 = vshll.u32 %v998, %v1005
    %v1008 = vshrl.u32 %v990, %v1006
    %v1009 = vor.u32 %v1007, %v1008
    %v1010 = vsub.s32 4294967266, %v1005
    %v1011 = vadd.s32 %v1010, 127
    %v1012 = vshll.u32 %v1011, 23
    %v1013 = vor.u32 4788187, %v1012
    %v1014 = vand.u32 2147483647, %v1013
    %v1016 = vcvt.s32.f32 %v1009
    %v1017 = vmul.f32 %v1016, %v1014
    %v1018 = vxor.u32 %v1017, 2147483648
    %v1019 = vsel %vm936, %v1018, %v1017
    %v1020 = vsub.s32 4, %v996
    %v1021 = vsel %vm936, %v1020, %v996
    %v1022 = vsel %vm935, %v700, %v1019
    %v1023 = vsel %vm935, 0, %v1021
    %v1024 = vcosq.f32.pop %v1022
    %v1025 = vsinq.f32.pop %v1022
    %vm1026 = vweird.f32 %v700
    %v1027 = vand.u32 %v1023, 3
    %vm1028 = vcmp.lt.s32.totalorder %v1027, 2
    %vm1029 = vcmp.eq.s32.totalorder %v1027, 0
    %v1030 = vxor.u32 %v1025, 2147483648
    %v1031 = vsel %vm1029, %v1024, %v1030
    %vm1032 = vcmp.eq.s32.totalorder %v1027, 2
    %v1033 = vxor.u32 %v1024, 2147483648
    %v1034 = vsel %vm1032, %v1033, %v1025
    %v1035 = vsel %vm1028, %v1031, %v1034
    %v1036 = vsel %vm1026, nan, %v1035
    %v1037 = vand.u32 2147483647, %v705
    %vm1038 = vcmp.le.f32.partialorder %v1037, 0.7853982
    %vm1039 = vcmp.lt.s32.totalorder %v705, 0
    %v1040 = vand.u32 %v705, 2139095040
    %v1041 = vshrl.u32 %v1040, 23
    %v1042 = vsub.s32 %v1041, 127
    %v1043 = vand.u32 2147483647, %v705
    %v1044 = vand.u32 %v1043, 8388607
    %v1045 = vor.u32 %v1044, 8388608
    %v1046 = vsub.s32 0, %v1045
    %v1047 = vadd.s32 %v1042, 1
    %vm1048 = vcmp.gt.s32.totalorder %v1047, 0
    %v1049 = vsel %vm1048, %v1047, 0
    %v1050 = vshrl.u32 %v1049, 5
    %v1051 = vand.u32 %v1049, 31
    %v1052 = vsub.s32 32, %v1051
    %v1053 = vshrl.u32 683565275, %v1052
    %v1054 = vshll.u32 683565275, %v1051
    %v1055 = vshrl.u32 2475754826, %v1052
    %v1056 = vor.u32 %v1054, %v1055
    %v1057 = vshll.u32 2475754826, %v1051
    %v1058 = vshrl.u32 2131351028, %v1052
    %v1059 = vor.u32 %v1057, %v1058
    %v1060 = vshll.u32 2131351028, %v1051
    %v1061 = vshrl.u32 2102212464, %v1052
    %v1062 = vor.u32 %v1060, %v1061
    %v1063 = vshll.u32 2102212464, %v1051
    %v1064 = vshrl.u32 920167782, %v1052
    %v1065 = vor.u32 %v1063, %v1064
    %v1066 = vshll.u32 920167782, %v1051
    %v1067 = vshrl.u32 1326507024, %v1052
    %v1068 = vor.u32 %v1066, %v1067
    %vm1069 = vcmp.lt.s32.totalorder %v1050, 1
    %vm1070 = vcmp.lt.s32.totalorder %v1050, 2
    %vm1071 = vcmp.lt.s32.totalorder %v1050, 3
    %vm1072 = vcmp.lt.s32.totalorder %v1050, 4
    %v1073 = vsel %vm1069, %v1053, %v1056
    %v1074 = vsel %vm1072, %v1062, 2102212464
    %v1075 = vsel %vm1071, %v1059, %v1074
    %v1076 = vsel %vm1070, %v1073, %v1075
    %v1077 = vsel %vm1069, %v1056, %v1059
    %v1078 = vsel %vm1072, %v1065, 920167782
    %v1079 = vsel %vm1071, %v1062, %v1078
    %v1080 = vsel %vm1070, %v1077, %v1079
    %v1081 = vsel %vm1069, %v1059, %v1062
    %v1082 = vsel %vm1072, %v1068, 1326507024
    %v1083 = vsel %vm1071, %v1065, %v1082
    %v1084 = vsel %vm1070, %v1081, %v1083
    %v1085 = vshll.u32 %v1045, 8
    %v1086 = vmul.u32.u64.compose %v1085, %v1084
    %v1087 = vextract.low.u32 %v1086
    %v1088 = vextract.high.u32 %v1086
    %v1089 = vmul.u32.u64.compose %v1085, %v1080
    %v1090 = vextract.low.u32 %v1089
    %v1091 = vextract.high.u32 %v1089
    %v1092 = vmul.u32 %v1085, %v1076
    %v1093 = vadd.s32 %v1088, %v1090
    %vm1094 = vc.u32 %v1088, %v1090
    %v1095 = vadd.s32 %v1091, 1
    %v1096 = vsel %vm1094, %v1095, %v1091
    %v1097 = vadd.s32 %v1092, %v1096
    %v1098 = vadd.s32 %v1097, 536870912
    %v1099 = vshrl.u32 %v1098, 30
    %v1100 = vshll.u32 %v1099, 30
    %v1101 = vsub.s32 %v1097, %v1100
    %vm1102 = vcmp.lt.s32.totalorder %v1101, 0
    %v1103 = vsub.s32 0, %v1101
    %v1104 = vsel %vm1102, %v1103, %v1101
    %v1105 = vclz %v1104
    %v1106 = vsub.s32 %v1105, 2
    %vm1107 = vcmp.gt.s32.totalorder 0, %v1106
    %v1108 = vsel %vm1107, 0, %v1106
    %v1109 = vsub.s32 32, %v1108
    %v1110 = vshll.u32 %v1101, %v1108
    %v1111 = vshrl.u32 %v1093, %v1109
    %v1112 = vor.u32 %v1110, %v1111
    %v1113 = vsub.s32 4294967266, %v1108
    %v1114 = vadd.s32 %v1113, 127
    %v1115 = vshll.u32 %v1114, 23
    %v1116 = vor.u32 4788187, %v1115
    %v1117 = vand.u32 2147483647, %v1116
    %v1119 = vcvt.s32.f32 %v1112
    %v1120 = vmul.f32 %v1119, %v1117
    %v1121 = vxor.u32 %v1120, 2147483648
    %v1122 = vsel %vm1039, %v1121, %v1120
    %v1123 = vsub.s32 4, %v1099
    %v1124 = vsel %vm1039, %v1123, %v1099
    %v1125 = vsel %vm1038, %v705, %v1122
    %v1126 = vsel %vm1038, 0, %v1124
    %v1127 = vcosq.f32.pop %v1125
    %v1128 = vsinq.f32.pop %v1125
    %vm1129 = vweird.f32 %v705
    %v1130 = vand.u32 %v1126, 3
    %vm1131 = vcmp.lt.s32.totalorder %v1130, 2
    %vm1132 = vcmp.eq.s32.totalorder %v1130, 0
    %v1133 = vxor.u32 %v1128, 2147483648
    %v1134 = vsel %vm1132, %v1127, %v1133
    %vm1135 = vcmp.eq.s32.totalorder %v1130, 2
    %v1136 = vxor.u32 %v1127, 2147483648
    %v1137 = vsel %vm1135, %v1136, %v1128
    %v1138 = vsel %vm1131, %v1134, %v1137
    %v1139 = vsel %vm1129, nan, %v1138
    %v1140 = vand.u32 2147483647, %v710
    %vm1141 = vcmp.le.f32.partialorder %v1140, 0.7853982
    %vm1142 = vcmp.lt.s32.totalorder %v710, 0
    %v1143 = vand.u32 %v710, 2139095040
    %v1144 = vshrl.u32 %v1143, 23
    %v1145 = vsub.s32 %v1144, 127
    %v1146 = vand.u32 2147483647, %v710
    %v1147 = vand.u32 %v1146, 8388607
    %v1148 = vor.u32 %v1147, 8388608
    %v1149 = vsub.s32 0, %v1148
    %v1150 = vadd.s32 %v1145, 1
    %vm1151 = vcmp.gt.s32.totalorder %v1150, 0
    %v1152 = vsel %vm1151, %v1150, 0
    %v1153 = vshrl.u32 %v1152, 5
    %v1154 = vand.u32 %v1152, 31
    %v1155 = vsub.s32 32, %v1154
    %v1156 = vshrl.u32 683565275, %v1155
    %v1157 = vshll.u32 683565275, %v1154
    %v1158 = vshrl.u32 2475754826, %v1155
    %v1159 = vor.u32 %v1157, %v1158
    %v1160 = vshll.u32 2475754826, %v1154
    %v1161 = vshrl.u32 2131351028, %v1155
    %v1162 = vor.u32 %v1160, %v1161
    %v1163 = vshll.u32 2131351028, %v1154
    %v1164 = vshrl.u32 2102212464, %v1155
    %v1165 = vor.u32 %v1163, %v1164
    %v1166 = vshll.u32 2102212464, %v1154
    %v1167 = vshrl.u32 920167782, %v1155
    %v1168 = vor.u32 %v1166, %v1167
    %v1169 = vshll.u32 920167782, %v1154
    %v1170 = vshrl.u32 1326507024, %v1155
    %v1171 = vor.u32 %v1169, %v1170
    %vm1172 = vcmp.lt.s32.totalorder %v1153, 1
    %vm1173 = vcmp.lt.s32.totalorder %v1153, 2
    %vm1174 = vcmp.lt.s32.totalorder %v1153, 3
    %vm1175 = vcmp.lt.s32.totalorder %v1153, 4
    %v1176 = vsel %vm1172, %v1156, %v1159
    %v1177 = vsel %vm1175, %v1165, 2102212464
    %v1178 = vsel %vm1174, %v1162, %v1177
    %v1179 = vsel %vm1173, %v1176, %v1178
    %v1180 = vsel %vm1172, %v1159, %v1162
    %v1181 = vsel %vm1175, %v1168, 920167782
    %v1182 = vsel %vm1174, %v1165, %v1181
    %v1183 = vsel %vm1173, %v1180, %v1182
    %v1184 = vsel %vm1172, %v1162, %v1165
    %v1185 = vsel %vm1175, %v1171, 1326507024
    %v1186 = vsel %vm1174, %v1168, %v1185
    %v1187 = vsel %vm1173, %v1184, %v1186
    %v1188 = vshll.u32 %v1148, 8
    %v1189 = vmul.u32.u64.compose %v1188, %v1187
    %v1190 = vextract.low.u32 %v1189
    %v1191 = vextract.high.u32 %v1189
    %v1192 = vmul.u32.u64.compose %v1188, %v1183
    %v1193 = vextract.low.u32 %v1192
    %v1194 = vextract.high.u32 %v1192
    %v1195 = vmul.u32 %v1188, %v1179
    %v1196 = vadd.s32 %v1191, %v1193
    %vm1197 = vc.u32 %v1191, %v1193
    %v1198 = vadd.s32 %v1194, 1
    %v1199 = vsel %vm1197, %v1198, %v1194
    %v1200 = vadd.s32 %v1195, %v1199
    %v1201 = vadd.s32 %v1200, 536870912
    %v1202 = vshrl.u32 %v1201, 30
    %v1203 = vshll.u32 %v1202, 30
    %v1204 = vsub.s32 %v1200, %v1203
    %vm1205 = vcmp.lt.s32.totalorder %v1204, 0
    %v1206 = vsub.s32 0, %v1204
    %v1207 = vsel %vm1205, %v1206, %v1204
    %v1208 = vclz %v1207
    %v1209 = vsub.s32 %v1208, 2
    %vm1210 = vcmp.gt.s32.totalorder 0, %v1209
    %v1211 = vsel %vm1210, 0, %v1209
    %v1212 = vsub.s32 32, %v1211
    %v1213 = vshll.u32 %v1204, %v1211
    %v1214 = vshrl.u32 %v1196, %v1212
    %v1215 = vor.u32 %v1213, %v1214
    %v1216 = vsub.s32 4294967266, %v1211
    %v1217 = vadd.s32 %v1216, 127
    %v1218 = vshll.u32 %v1217, 23
    %v1219 = vor.u32 4788187, %v1218
    %v1220 = vand.u32 2147483647, %v1219
    %v1222 = vcvt.s32.f32 %v1215
    %v1223 = vmul.f32 %v1222, %v1220
    %v1224 = vxor.u32 %v1223, 2147483648
    %v1225 = vsel %vm1142, %v1224, %v1223
    %v1226 = vsub.s32 4, %v1202
    %v1227 = vsel %vm1142, %v1226, %v1202
    %v1228 = vsel %vm1141, %v710, %v1225
    %v1229 = vsel %vm1141, 0, %v1227
    %v1230 = vcosq.f32.pop %v1228
    %v1231 = vsinq.f32.pop %v1228
    %vm1232 = vweird.f32 %v710
    %v1233 = vand.u32 %v1229, 3
    %vm1234 = vcmp.lt.s32.totalorder %v1233, 2
    %vm1235 = vcmp.eq.s32.totalorder %v1233, 0
    %v1236 = vxor.u32 %v1231, 2147483648
    %v1237 = vsel %vm1235, %v1230, %v1236
    %vm1238 = vcmp.eq.s32.totalorder %v1233, 2
    %v1239 = vxor.u32 %v1230, 2147483648
    %v1240 = vsel %vm1238, %v1239, %v1231
    %v1241 = vsel %vm1234, %v1237, %v1240
    %v1242 = vsel %vm1232, nan, %v1241
    %v1243 = vand.u32 2147483647, %v715
    %vm1244 = vcmp.le.f32.partialorder %v1243, 0.7853982
    %vm1245 = vcmp.lt.s32.totalorder %v715, 0
    %v1246 = vand.u32 %v715, 2139095040
    %v1247 = vshrl.u32 %v1246, 23
    %v1248 = vsub.s32 %v1247, 127
    %v1249 = vand.u32 2147483647, %v715
    %v1250 = vand.u32 %v1249, 8388607
    %v1251 = vor.u32 %v1250, 8388608
    %v1252 = vsub.s32 0, %v1251
    %v1253 = vadd.s32 %v1248, 1
    %vm1254 = vcmp.gt.s32.totalorder %v1253, 0
    %v1255 = vsel %vm1254, %v1253, 0
    %v1256 = vshrl.u32 %v1255, 5
    %v1257 = vand.u32 %v1255, 31
    %v1258 = vsub.s32 32, %v1257
    %v1259 = vshrl.u32 683565275, %v1258
    %v1260 = vshll.u32 683565275, %v1257
    %v1261 = vshrl.u32 2475754826, %v1258
    %v1262 = vor.u32 %v1260, %v1261
    %v1263 = vshll.u32 2475754826, %v1257
    %v1264 = vshrl.u32 2131351028, %v1258
    %v1265 = vor.u32 %v1263, %v1264
    %v1266 = vshll.u32 2131351028, %v1257
    %v1267 = vshrl.u32 2102212464, %v1258
    %v1268 = vor.u32 %v1266, %v1267
    %v1269 = vshll.u32 2102212464, %v1257
    %v1270 = vshrl.u32 920167782, %v1258
    %v1271 = vor.u32 %v1269, %v1270
    %v1272 = vshll.u32 920167782, %v1257
    %v1273 = vshrl.u32 1326507024, %v1258
    %v1274 = vor.u32 %v1272, %v1273
    %vm1275 = vcmp.lt.s32.totalorder %v1256, 1
    %vm1276 = vcmp.lt.s32.totalorder %v1256, 2
    %vm1277 = vcmp.lt.s32.totalorder %v1256, 3
    %vm1278 = vcmp.lt.s32.totalorder %v1256, 4
    %v1279 = vsel %vm1275, %v1259, %v1262
    %v1280 = vsel %vm1278, %v1268, 2102212464
    %v1281 = vsel %vm1277, %v1265, %v1280
    %v1282 = vsel %vm1276, %v1279, %v1281
    %v1283 = vsel %vm1275, %v1262, %v1265
    %v1284 = vsel %vm1278, %v1271, 920167782
    %v1285 = vsel %vm1277, %v1268, %v1284
    %v1286 = vsel %vm1276, %v1283, %v1285
    %v1287 = vsel %vm1275, %v1265, %v1268
    %v1288 = vsel %vm1278, %v1274, 1326507024
    %v1289 = vsel %vm1277, %v1271, %v1288
    %v1290 = vsel %vm1276, %v1287, %v1289
    %v1291 = vshll.u32 %v1251, 8
    %v1292 = vmul.u32.u64.compose %v1291, %v1290
    %v1293 = vextract.low.u32 %v1292
    %v1294 = vextract.high.u32 %v1292
    %v1295 = vmul.u32.u64.compose %v1291, %v1286
    %v1296 = vextract.low.u32 %v1295
    %v1297 = vextract.high.u32 %v1295
    %v1298 = vmul.u32 %v1291, %v1282
    %v1299 = vadd.s32 %v1294, %v1296
    %vm1300 = vc.u32 %v1294, %v1296
    %v1301 = vadd.s32 %v1297, 1
    %v1302 = vsel %vm1300, %v1301, %v1297
    %v1303 = vadd.s32 %v1298, %v1302
    %v1304 = vadd.s32 %v1303, 536870912
    %v1305 = vshrl.u32 %v1304, 30
    %v1306 = vshll.u32 %v1305, 30
    %v1307 = vsub.s32 %v1303, %v1306
    %vm1308 = vcmp.lt.s32.totalorder %v1307, 0
    %v1309 = vsub.s32 0, %v1307
    %v1310 = vsel %vm1308, %v1309, %v1307
    %v1311 = vclz %v1310
    %v1312 = vsub.s32 %v1311, 2
    %vm1313 = vcmp.gt.s32.totalorder 0, %v1312
    %v1314 = vsel %vm1313, 0, %v1312
    %v1315 = vsub.s32 32, %v1314
    %v1316 = vshll.u32 %v1307, %v1314
    %v1317 = vshrl.u32 %v1299, %v1315
    %v1318 = vor.u32 %v1316, %v1317
    %v1319 = vsub.s32 4294967266, %v1314
    %v1320 = vadd.s32 %v1319, 127
    %v1321 = vshll.u32 %v1320, 23
    %v1322 = vor.u32 4788187, %v1321
    %v1323 = vand.u32 2147483647, %v1322
    %v1325 = vcvt.s32.f32 %v1318
    %v1326 = vmul.f32 %v1325, %v1323
    %v1327 = vxor.u32 %v1326, 2147483648
    %v1328 = vsel %vm1245, %v1327, %v1326
    %v1329 = vsub.s32 4, %v1305
    %v1330 = vsel %vm1245, %v1329, %v1305
    %v1331 = vsel %vm1244, %v715, %v1328
    %v1332 = vsel %vm1244, 0, %v1330
    %v1333 = vcosq.f32.pop %v1331
    %v1334 = vsinq.f32.pop %v1331
    %vm1335 = vweird.f32 %v715
    %v1336 = vand.u32 %v1332, 3
    %vm1337 = vcmp.lt.s32.totalorder %v1336, 2
    %vm1338 = vcmp.eq.s32.totalorder %v1336, 0
    %v1339 = vxor.u32 %v1334, 2147483648
    %v1340 = vsel %vm1338, %v1333, %v1339
    %vm1341 = vcmp.eq.s32.totalorder %v1336, 2
    %v1342 = vxor.u32 %v1333, 2147483648
    %v1343 = vsel %vm1341, %v1342, %v1334
    %v1344 = vsel %vm1337, %v1340, %v1343
    %v1345 = vsel %vm1335, nan, %v1344
    %v1346 = vand.u32 2147483647, %v720
    %vm1347 = vcmp.le.f32.partialorder %v1346, 0.7853982
    %vm1348 = vcmp.lt.s32.totalorder %v720, 0
    %v1349 = vand.u32 %v720, 2139095040
    %v1350 = vshrl.u32 %v1349, 23
    %v1351 = vsub.s32 %v1350, 127
    %v1352 = vand.u32 2147483647, %v720
    %v1353 = vand.u32 %v1352, 8388607
    %v1354 = vor.u32 %v1353, 8388608
    %v1355 = vsub.s32 0, %v1354
    %v1356 = vadd.s32 %v1351, 1
    %vm1357 = vcmp.gt.s32.totalorder %v1356, 0
    %v1358 = vsel %vm1357, %v1356, 0
    %v1359 = vshrl.u32 %v1358, 5
    %v1360 = vand.u32 %v1358, 31
    %v1361 = vsub.s32 32, %v1360
    %v1362 = vshrl.u32 683565275, %v1361
    %v1363 = vshll.u32 683565275, %v1360
    %v1364 = vshrl.u32 2475754826, %v1361
    %v1365 = vor.u32 %v1363, %v1364
    %v1366 = vshll.u32 2475754826, %v1360
    %v1367 = vshrl.u32 2131351028, %v1361
    %v1368 = vor.u32 %v1366, %v1367
    %v1369 = vshll.u32 2131351028, %v1360
    %v1370 = vshrl.u32 2102212464, %v1361
    %v1371 = vor.u32 %v1369, %v1370
    %v1372 = vshll.u32 2102212464, %v1360
    %v1373 = vshrl.u32 920167782, %v1361
    %v1374 = vor.u32 %v1372, %v1373
    %v1375 = vshll.u32 920167782, %v1360
    %v1376 = vshrl.u32 1326507024, %v1361
    %v1377 = vor.u32 %v1375, %v1376
    %vm1378 = vcmp.lt.s32.totalorder %v1359, 1
    %vm1379 = vcmp.lt.s32.totalorder %v1359, 2
    %vm1380 = vcmp.lt.s32.totalorder %v1359, 3
    %vm1381 = vcmp.lt.s32.totalorder %v1359, 4
    %v1382 = vsel %vm1378, %v1362, %v1365
    %v1383 = vsel %vm1381, %v1371, 2102212464
    %v1384 = vsel %vm1380, %v1368, %v1383
    %v1385 = vsel %vm1379, %v1382, %v1384
    %v1386 = vsel %vm1378, %v1365, %v1368
    %v1387 = vsel %vm1381, %v1374, 920167782
    %v1388 = vsel %vm1380, %v1371, %v1387
    %v1389 = vsel %vm1379, %v1386, %v1388
    %v1390 = vsel %vm1378, %v1368, %v1371
    %v1391 = vsel %vm1381, %v1377, 1326507024
    %v1392 = vsel %vm1380, %v1374, %v1391
    %v1393 = vsel %vm1379, %v1390, %v1392
    %v1394 = vshll.u32 %v1354, 8
    %v1395 = vmul.u32.u64.compose %v1394, %v1393
    %v1396 = vextract.low.u32 %v1395
    %v1397 = vextract.high.u32 %v1395
    %v1398 = vmul.u32.u64.compose %v1394, %v1389
    %v1399 = vextract.low.u32 %v1398
    %v1400 = vextract.high.u32 %v1398
    %v1401 = vmul.u32 %v1394, %v1385
    %v1402 = vadd.s32 %v1397, %v1399
    %vm1403 = vc.u32 %v1397, %v1399
    %v1404 = vadd.s32 %v1400, 1
    %v1405 = vsel %vm1403, %v1404, %v1400
    %v1406 = vadd.s32 %v1401, %v1405
    %v1407 = vadd.s32 %v1406, 536870912
    %v1408 = vshrl.u32 %v1407, 30
    %v1409 = vshll.u32 %v1408, 30
    %v1410 = vsub.s32 %v1406, %v1409
    %vm1411 = vcmp.lt.s32.totalorder %v1410, 0
    %v1412 = vsub.s32 0, %v1410
    %v1413 = vsel %vm1411, %v1412, %v1410
    %v1414 = vclz %v1413
    %v1415 = vsub.s32 %v1414, 2
    %vm1416 = vcmp.gt.s32.totalorder 0, %v1415
    %v1417 = vsel %vm1416, 0, %v1415
    %v1418 = vsub.s32 32, %v1417
    %v1419 = vshll.u32 %v1410, %v1417
    %v1420 = vshrl.u32 %v1402, %v1418
    %v1421 = vor.u32 %v1419, %v1420
    %v1422 = vsub.s32 4294967266, %v1417
    %v1423 = vadd.s32 %v1422, 127
    %v1424 = vshll.u32 %v1423, 23
    %v1425 = vor.u32 4788187, %v1424
    %v1426 = vand.u32 2147483647, %v1425
    %v1428 = vcvt.s32.f32 %v1421
    %v1429 = vmul.f32 %v1428, %v1426
    %v1430 = vxor.u32 %v1429, 2147483648
    %v1431 = vsel %vm1348, %v1430, %v1429
    %v1432 = vsub.s32 4, %v1408
    %v1433 = vsel %vm1348, %v1432, %v1408
    %v1434 = vsel %vm1347, %v720, %v1431
    %v1435 = vsel %vm1347, 0, %v1433
    %v1436 = vcosq.f32.pop %v1434
    %v1437 = vsinq.f32.pop %v1434
    %vm1438 = vweird.f32 %v720
    %v1439 = vand.u32 %v1435, 3
    %vm1440 = vcmp.lt.s32.totalorder %v1439, 2
    %vm1441 = vcmp.eq.s32.totalorder %v1439, 0
    %v1442 = vxor.u32 %v1437, 2147483648
    %v1443 = vsel %vm1441, %v1436, %v1442
    %vm1444 = vcmp.eq.s32.totalorder %v1439, 2
    %v1445 = vxor.u32 %v1436, 2147483648
    %v1446 = vsel %vm1444, %v1445, %v1437
    %v1447 = vsel %vm1440, %v1443, %v1446
    %v1448 = vsel %vm1438, nan, %v1447
    %v1449 = vand.u32 2147483647, %v725
    %vm1450 = vcmp.le.f32.partialorder %v1449, 0.7853982
    %vm1451 = vcmp.lt.s32.totalorder %v725, 0
    %v1452 = vand.u32 %v725, 2139095040
    %v1453 = vshrl.u32 %v1452, 23
    %v1454 = vsub.s32 %v1453, 127
    %v1455 = vand.u32 2147483647, %v725
    %v1456 = vand.u32 %v1455, 8388607
    %v1457 = vor.u32 %v1456, 8388608
    %v1458 = vsub.s32 0, %v1457
    %v1459 = vadd.s32 %v1454, 1
    %vm1460 = vcmp.gt.s32.totalorder %v1459, 0
    %v1461 = vsel %vm1460, %v1459, 0
    %v1462 = vshrl.u32 %v1461, 5
    %v1463 = vand.u32 %v1461, 31
    %v1464 = vsub.s32 32, %v1463
    %v1465 = vshrl.u32 683565275, %v1464
    %v1466 = vshll.u32 683565275, %v1463
    %v1467 = vshrl.u32 2475754826, %v1464
    %v1468 = vor.u32 %v1466, %v1467
    %v1469 = vshll.u32 2475754826, %v1463
    %v1470 = vshrl.u32 2131351028, %v1464
    %v1471 = vor.u32 %v1469, %v1470
    %v1472 = vshll.u32 2131351028, %v1463
    %v1473 = vshrl.u32 2102212464, %v1464
    %v1474 = vor.u32 %v1472, %v1473
    %v1475 = vshll.u32 2102212464, %v1463
    %v1476 = vshrl.u32 920167782, %v1464
    %v1477 = vor.u32 %v1475, %v1476
    %v1478 = vshll.u32 920167782, %v1463
    %v1479 = vshrl.u32 1326507024, %v1464
    %v1480 = vor.u32 %v1478, %v1479
    %vm1481 = vcmp.lt.s32.totalorder %v1462, 1
    %vm1482 = vcmp.lt.s32.totalorder %v1462, 2
    %vm1483 = vcmp.lt.s32.totalorder %v1462, 3
    %vm1484 = vcmp.lt.s32.totalorder %v1462, 4
    %v1485 = vsel %vm1481, %v1465, %v1468
    %v1486 = vsel %vm1484, %v1474, 2102212464
    %v1487 = vsel %vm1483, %v1471, %v1486
    %v1488 = vsel %vm1482, %v1485, %v1487
    %v1489 = vsel %vm1481, %v1468, %v1471
    %v1490 = vsel %vm1484, %v1477, 920167782
    %v1491 = vsel %vm1483, %v1474, %v1490
    %v1492 = vsel %vm1482, %v1489, %v1491
    %v1493 = vsel %vm1481, %v1471, %v1474
    %v1494 = vsel %vm1484, %v1480, 1326507024
    %v1495 = vsel %vm1483, %v1477, %v1494
    %v1496 = vsel %vm1482, %v1493, %v1495
    %v1497 = vshll.u32 %v1457, 8
    %v1498 = vmul.u32.u64.compose %v1497, %v1496
    %v1499 = vextract.low.u32 %v1498
    %v1500 = vextract.high.u32 %v1498
    %v1501 = vmul.u32.u64.compose %v1497, %v1492
    %v1502 = vextract.low.u32 %v1501
    %v1503 = vextract.high.u32 %v1501
    %v1504 = vmul.u32 %v1497, %v1488
    %v1505 = vadd.s32 %v1500, %v1502
    %vm1506 = vc.u32 %v1500, %v1502
    %v1507 = vadd.s32 %v1503, 1
    %v1508 = vsel %vm1506, %v1507, %v1503
    %v1509 = vadd.s32 %v1504, %v1508
    %v1510 = vadd.s32 %v1509, 536870912
    %v1511 = vshrl.u32 %v1510, 30
    %v1512 = vshll.u32 %v1511, 30
    %v1513 = vsub.s32 %v1509, %v1512
    %vm1514 = vcmp.lt.s32.totalorder %v1513, 0
    %v1515 = vsub.s32 0, %v1513
    %v1516 = vsel %vm1514, %v1515, %v1513
    %v1517 = vclz %v1516
    %v1518 = vsub.s32 %v1517, 2
    %vm1519 = vcmp.gt.s32.totalorder 0, %v1518
    %v1520 = vsel %vm1519, 0, %v1518
    %v1521 = vsub.s32 32, %v1520
    %v1522 = vshll.u32 %v1513, %v1520
    %v1523 = vshrl.u32 %v1505, %v1521
    %v1524 = vor.u32 %v1522, %v1523
    %v1525 = vsub.s32 4294967266, %v1520
    %v1526 = vadd.s32 %v1525, 127
    %v1527 = vshll.u32 %v1526, 23
    %v1528 = vor.u32 4788187, %v1527
    %v1529 = vand.u32 2147483647, %v1528
    %v1531 = vcvt.s32.f32 %v1524
    %v1532 = vmul.f32 %v1531, %v1529
    %v1533 = vxor.u32 %v1532, 2147483648
    %v1534 = vsel %vm1451, %v1533, %v1532
    %v1535 = vsub.s32 4, %v1511
    %v1536 = vsel %vm1451, %v1535, %v1511
    %v1537 = vsel %vm1450, %v725, %v1534
    %v1538 = vsel %vm1450, 0, %v1536
    %v1539 = vcosq.f32.pop %v1537
    %v1540 = vsinq.f32.pop %v1537
    %vm1541 = vweird.f32 %v725
    %v1542 = vand.u32 %v1538, 3
    %vm1543 = vcmp.lt.s32.totalorder %v1542, 2
    %vm1544 = vcmp.eq.s32.totalorder %v1542, 0
    %v1545 = vxor.u32 %v1540, 2147483648
    %v1546 = vsel %vm1544, %v1539, %v1545
    %vm1547 = vcmp.eq.s32.totalorder %v1542, 2
    %v1548 = vxor.u32 %v1539, 2147483648
    %v1549 = vsel %vm1547, %v1548, %v1540
    %v1550 = vsel %vm1543, %v1546, %v1549
    %v1551 = vsel %vm1541, nan, %v1550
    %v1552 = vld [vmem:[%s5] sm:$0xff]
    %v1553 = vld [vmem:[%s5 + $0x8] sm:$0xff]
    %v1554 = vld [vmem:[%s5 + $0x10] sm:$0xff]
    %v1555 = vld [vmem:[%s5 + $0x18] sm:$0xff]
    %v1556 = vld [vmem:[%s5 + $0x20] sm:$0xff]
    %v1557 = vld [vmem:[%s5 + $0x28] sm:$0xff]
    %v1558 = vld [vmem:[%s5 + $0x30] sm:$0xff]
    %v1559 = vld [vmem:[%s5 + $0x38] sm:$0xff]
    %v1560 = vld [vmem:[%s5 + $0x40] sm:$0xff]
    %v1561 = vld [vmem:[%s5 + $0x48] sm:$0xff]
    %v1562 = vld [vmem:[%s5 + $0x50] sm:$0xff]
    %v1563 = vld [vmem:[%s5 + $0x58] sm:$0xff]
    %v1564 = vld [vmem:[%s5 + $0x60] sm:$0xff]
    %v1565 = vld [vmem:[%s5 + $0x68] sm:$0xff]
    %v1566 = vld [vmem:[%s5 + $0x70] sm:$0xff]
    %v1567 = vld [vmem:[%s5 + $0x78] sm:$0xff]
    %v1568 = vld [vmem:[%s5 + $0x80] sm:$0xff]
    %v1569 = vld [vmem:[%s5 + $0x88] sm:$0xff]
    %v1570 = vld [vmem:[%s5 + $0x90] sm:$0xff]
    %v1571 = vld [vmem:[%s5 + $0x98] sm:$0xff]
    %v1572 = vld [vmem:[%s5 + $0xa0] sm:$0xff]
    %v1573 = vld [vmem:[%s5 + $0xa8] sm:$0xff]
    %v1574 = vld [vmem:[%s5 + $0xb0] sm:$0xff]
    %v1575 = vld [vmem:[%s5 + $0xb8] sm:$0xff]
    %v1576 = vld [vmem:[%s5 + $0xc0] sm:$0xff]
    %v1577 = vld [vmem:[%s5 + $0xc8] sm:$0xff]
    %v1578 = vld [vmem:[%s5 + $0xd0] sm:$0xff]
    %v1579 = vld [vmem:[%s5 + $0xd8] sm:$0xff]
    %v1580 = vld [vmem:[%s5 + $0xe0] sm:$0xff]
    %v1581 = vld [vmem:[%s5 + $0xe8] sm:$0xff]
    %v1582 = vld [vmem:[%s5 + $0xf0] sm:$0xff]
    %v1583 = vld [vmem:[%s5 + $0xf8] sm:$0xff]
    %v1584 = vld [vmem:[%s6] sm:$0xff]
    %v1585 = vld [vmem:[%s6 + $0x8] sm:$0xff]
    %v1586 = vld [vmem:[%s6 + $0x10] sm:$0xff]
    %v1587 = vld [vmem:[%s6 + $0x18] sm:$0xff]
    %v1588 = vld [vmem:[%s6 + $0x20] sm:$0xff]
    %v1589 = vld [vmem:[%s6 + $0x28] sm:$0xff]
    %v1590 = vld [vmem:[%s6 + $0x30] sm:$0xff]
    %v1591 = vld [vmem:[%s6 + $0x38] sm:$0xff]
    %v1592 = vld [vmem:[%s6 + $0x40] sm:$0xff]
    %v1593 = vld [vmem:[%s6 + $0x48] sm:$0xff]
    %v1594 = vld [vmem:[%s6 + $0x50] sm:$0xff]
    %v1595 = vld [vmem:[%s6 + $0x58] sm:$0xff]
    %v1596 = vld [vmem:[%s6 + $0x60] sm:$0xff]
    %v1597 = vld [vmem:[%s6 + $0x68] sm:$0xff]
    %v1598 = vld [vmem:[%s6 + $0x70] sm:$0xff]
    %v1599 = vld [vmem:[%s6 + $0x78] sm:$0xff]
    %v1600 = vld [vmem:[%s6 + $0x80] sm:$0xff]
    %v1601 = vld [vmem:[%s6 + $0x88] sm:$0xff]
    %v1602 = vld [vmem:[%s6 + $0x90] sm:$0xff]
    %v1603 = vld [vmem:[%s6 + $0x98] sm:$0xff]
    %v1604 = vld [vmem:[%s6 + $0xa0] sm:$0xff]
    %v1605 = vld [vmem:[%s6 + $0xa8] sm:$0xff]
    %v1606 = vld [vmem:[%s6 + $0xb0] sm:$0xff]
    %v1607 = vld [vmem:[%s6 + $0xb8] sm:$0xff]
    %v1608 = vld [vmem:[%s6 + $0xc0] sm:$0xff]
    %v1609 = vld [vmem:[%s6 + $0xc8] sm:$0xff]
    %v1610 = vld [vmem:[%s6 + $0xd0] sm:$0xff]
    %v1611 = vld [vmem:[%s6 + $0xd8] sm:$0xff]
    %v1612 = vld [vmem:[%s6 + $0xe0] sm:$0xff]
    %v1613 = vld [vmem:[%s6 + $0xe8] sm:$0xff]
    %v1614 = vld [vmem:[%s6 + $0xf0] sm:$0xff]
    %v1615 = vld [vmem:[%s6 + $0xf8] sm:$0xff]
    %1617 = vset.pattern.permute.xlu0 0
    %1618 = vperm.xlu0 %1617, %v1584
    %v1619 = vpop.permute.xlu0 %1618
    %1622 = vset.pattern.permute.xlu0 0
    %1623 = vperm.xlu0 %1622, %v1585
    %v1624 = vpop.permute.xlu0 %1623
    %1627 = vset.pattern.permute.xlu0 0
    %1628 = vperm.xlu0 %1627, %v1586
    %v1629 = vpop.permute.xlu0 %1628
    %1632 = vset.pattern.permute.xlu0 0
    %1633 = vperm.xlu0 %1632, %v1587
    %v1634 = vpop.permute.xlu0 %1633
    %1637 = vset.pattern.permute.xlu0 0
    %1638 = vperm.xlu0 %1637, %v1588
    %v1639 = vpop.permute.xlu0 %1638
    %1642 = vset.pattern.permute.xlu0 0
    %1643 = vperm.xlu0 %1642, %v1589
    %v1644 = vpop.permute.xlu0 %1643
    %1647 = vset.pattern.permute.xlu0 0
    %1648 = vperm.xlu0 %1647, %v1590
    %v1649 = vpop.permute.xlu0 %1648
    %1652 = vset.pattern.permute.xlu0 0
    %1653 = vperm.xlu0 %1652, %v1591
    %v1654 = vpop.permute.xlu0 %1653
    %1657 = vset.pattern.permute.xlu0 0
    %1658 = vperm.xlu0 %1657, %v1592
    %v1659 = vpop.permute.xlu0 %1658
    %1662 = vset.pattern.permute.xlu0 0
    %1663 = vperm.xlu0 %1662, %v1593
    %v1664 = vpop.permute.xlu0 %1663
    %1667 = vset.pattern.permute.xlu0 0
    %1668 = vperm.xlu0 %1667, %v1594
    %v1669 = vpop.permute.xlu0 %1668
    %1672 = vset.pattern.permute.xlu0 0
    %1673 = vperm.xlu0 %1672, %v1595
    %v1674 = vpop.permute.xlu0 %1673
    %1677 = vset.pattern.permute.xlu0 0
    %1678 = vperm.xlu0 %1677, %v1596
    %v1679 = vpop.permute.xlu0 %1678
    %1682 = vset.pattern.permute.xlu0 0
    %1683 = vperm.xlu0 %1682, %v1597
    %v1684 = vpop.permute.xlu0 %1683
    %1687 = vset.pattern.permute.xlu0 0
    %1688 = vperm.xlu0 %1687, %v1598
    %v1689 = vpop.permute.xlu0 %1688
    %1692 = vset.pattern.permute.xlu0 0
    %1693 = vperm.xlu0 %1692, %v1599
    %v1694 = vpop.permute.xlu0 %1693
    %1697 = vset.pattern.permute.xlu0 0
    %1698 = vperm.xlu0 %1697, %v1600
    %v1699 = vpop.permute.xlu0 %1698
    %1702 = vset.pattern.permute.xlu0 0
    %1703 = vperm.xlu0 %1702, %v1601
    %v1704 = vpop.permute.xlu0 %1703
    %1707 = vset.pattern.permute.xlu0 0
    %1708 = vperm.xlu0 %1707, %v1602
    %v1709 = vpop.permute.xlu0 %1708
    %1712 = vset.pattern.permute.xlu0 0
    %1713 = vperm.xlu0 %1712, %v1603
    %v1714 = vpop.permute.xlu0 %1713
    %1717 = vset.pattern.permute.xlu0 0
    %1718 = vperm.xlu0 %1717, %v1604
    %v1719 = vpop.permute.xlu0 %1718
    %1722 = vset.pattern.permute.xlu0 0
    %1723 = vperm.xlu0 %1722, %v1605
    %v1724 = vpop.permute.xlu0 %1723
    %1727 = vset.pattern.permute.xlu0 0
    %1728 = vperm.xlu0 %1727, %v1606
    %v1729 = vpop.permute.xlu0 %1728
    %1732 = vset.pattern.permute.xlu0 0
    %1733 = vperm.xlu0 %1732, %v1607
    %v1734 = vpop.permute.xlu0 %1733
    %1737 = vset.pattern.permute.xlu0 0
    %1738 = vperm.xlu0 %1737, %v1608
    %v1739 = vpop.permute.xlu0 %1738
    %1742 = vset.pattern.permute.xlu0 0
    %1743 = vperm.xlu0 %1742, %v1609
    %v1744 = vpop.permute.xlu0 %1743
    %1747 = vset.pattern.permute.xlu0 0
    %1748 = vperm.xlu0 %1747, %v1610
    %v1749 = vpop.permute.xlu0 %1748
    %1752 = vset.pattern.permute.xlu0 0
    %1753 = vperm.xlu0 %1752, %v1611
    %v1754 = vpop.permute.xlu0 %1753
    %1757 = vset.pattern.permute.xlu0 0
    %1758 = vperm.xlu0 %1757, %v1612
    %v1759 = vpop.permute.xlu0 %1758
    %1762 = vset.pattern.permute.xlu0 0
    %1763 = vperm.xlu0 %1762, %v1613
    %v1764 = vpop.permute.xlu0 %1763
    %1767 = vset.pattern.permute.xlu0 0
    %1768 = vperm.xlu0 %1767, %v1614
    %v1769 = vpop.permute.xlu0 %1768
    %1772 = vset.pattern.permute.xlu0 0
    %1773 = vperm.xlu0 %1772, %v1615
    %v1774 = vpop.permute.xlu0 %1773
    %vm1776 = vcmask 523264
    %v1778 = vsel %vm1776, %v1552, 0
    %v1781 = vsel %vm1776, %v1553, 0
    %v1784 = vsel %vm1776, %v1554, 0
    %v1787 = vsel %vm1776, %v1555, 0
    %v1790 = vsel %vm1776, %v1556, 0
    %v1793 = vsel %vm1776, %v1557, 0
    %v1796 = vsel %vm1776, %v1558, 0
    %v1799 = vsel %vm1776, %v1559, 0
    %v1802 = vsel %vm1776, %v1560, 0
    %v1805 = vsel %vm1776, %v1561, 0
    %v1808 = vsel %vm1776, %v1562, 0
    %v1811 = vsel %vm1776, %v1563, 0
    %v1814 = vsel %vm1776, %v1564, 0
    %v1817 = vsel %vm1776, %v1565, 0
    %v1820 = vsel %vm1776, %v1566, 0
    %v1823 = vsel %vm1776, %v1567, 0
    %v1826 = vsel %vm1776, %v1568, 0
    %v1829 = vsel %vm1776, %v1569, 0
    %v1832 = vsel %vm1776, %v1570, 0
    %v1835 = vsel %vm1776, %v1571, 0
    %v1838 = vsel %vm1776, %v1572, 0
    %v1841 = vsel %vm1776, %v1573, 0
    %v1844 = vsel %vm1776, %v1574, 0
    %v1847 = vsel %vm1776, %v1575, 0
    %v1850 = vsel %vm1776, %v1576, 0
    %v1853 = vsel %vm1776, %v1577, 0
    %v1856 = vsel %vm1776, %v1578, 0
    %v1859 = vsel %vm1776, %v1579, 0
    %v1862 = vsel %vm1776, %v1580, 0
    %v1865 = vsel %vm1776, %v1581, 0
    %v1868 = vsel %vm1776, %v1582, 0
    %v1871 = vsel %vm1776, %v1583, 0
    %1873 = vmatprep.subr.mxu0 0.0
    %1874 = vmatpush1.msra.mxu0 %v830
    %1875 = vmatprep.subr.mxu0 0.0
    %1876 = vmatpush1.msra.mxu0 %v933
    %1877 = vmatprep.subr.mxu0 0.0
    %1878 = vmatpush1.msra.mxu0 %v1036
    %1879 = vmatprep.subr.mxu0 0.0
    %1880 = vmatpush1.msra.mxu0 %v1139
    %1881 = vmatprep.subr.mxu0 0.0
    %1882 = vmatpush1.msra.mxu0 %v1242
    %1883 = vmatprep.subr.mxu0 0.0
    %1884 = vmatpush1.msra.mxu0 %v1345
    %1885 = vmatprep.subr.mxu0 0.0
    %1886 = vmatpush1.msra.mxu0 %v1448
    %1887 = vmatprep.subr.mxu0 0.0
    %1888 = vmatpush1.msra.mxu0 %v1551
    %1889 = vmatprep.subr.mxu0 0.0
    %1890 = vmatpush1.msra.mxu0 0.0
    %1891 = vmatprep.subr.mxu0 0.0
    %1892 = vmatpush1.msra.mxu0 0.0
    %1893 = vmatprep.subr.mxu0 0.0
    %1894 = vmatpush1.msra.mxu0 0.0
    %1895 = vmatprep.subr.mxu0 0.0
    %1896 = vmatpush1.msra.mxu0 0.0
    %1897 = vmatprep.subr.mxu0 0.0
    %1898 = vmatpush1.msra.mxu0 0.0
    %1899 = vmatprep.subr.mxu0 0.0
    %1900 = vmatpush1.msra.mxu0 0.0
    %1901 = vmatprep.subr.mxu0 0.0
    %1902 = vmatpush1.msra.mxu0 0.0
    %1903 = vmatprep.subr.mxu0 0.0
    %1904 = vmatpush1.msra.mxu0 0.0
    %1905 = vmatprep.subr.mxu0 0.0
    %1906 = vmatpush1.msra.mxu0 0.0
    %1907 = vmatprep.subr.mxu0 0.0
    %1908 = vmatpush1.msra.mxu0 0.0
    %1909 = vmatprep.subr.mxu0 0.0
    %1910 = vmatpush1.msra.mxu0 0.0
    %1911 = vmatprep.subr.mxu0 0.0
    %1912 = vmatpush1.msra.mxu0 0.0
    %1913 = vmatprep.subr.mxu0 0.0
    %1914 = vmatpush1.msra.mxu0 0.0
    %1915 = vmatprep.subr.mxu0 0.0
    %1916 = vmatpush1.msra.mxu0 0.0
    %1917 = vmatprep.subr.mxu0 0.0
    %1918 = vmatpush1.msra.mxu0 0.0
    %1919 = vmatprep.subr.mxu0 0.0
    %1920 = vmatpush1.msra.mxu0 0.0
    %1921 = vmatprep.subr.mxu0 0.0
    %1922 = vmatpush1.msra.mxu0 0.0
    %1923 = vmatprep.subr.mxu0 0.0
    %1924 = vmatpush1.msra.mxu0 0.0
    %1925 = vmatprep.subr.mxu0 0.0
    %1926 = vmatpush1.msra.mxu0 0.0
    %1927 = vmatprep.subr.mxu0 0.0
    %1928 = vmatpush1.msra.mxu0 0.0
    %1929 = vmatprep.subr.mxu0 0.0
    %1930 = vmatpush1.msra.mxu0 0.0
    %1931 = vmatprep.subr.mxu0 0.0
    %1932 = vmatpush1.msra.mxu0 0.0
    %1933 = vmatprep.subr.mxu0 0.0
    %1934 = vmatpush1.msra.mxu0 0.0
    %1935 = vmatprep.subr.mxu0 0.0
    %1936 = vmatpush1.msra.mxu0 0.0
    %1937 = vmatprep.mubr.f32.mxu0 0.0
    %1938 = vmatmul.mubr.f32.gmra.mrb[0].mxu0 %v1778
    %v1939 = vpop.f32.mrb[0].mxu0
    %v1940 = vadd.f32 %v1619, %v1939
    %v1941 = vpop.f32.mrb[0].mxu0
    %1942 = vmatprep.mubr.f32.mxu0 0.0
    %1943 = vmatmul.mubr.f32.gmra.mrb[0].mxu0 %v1781
    %v1944 = vpop.f32.mrb[0].mxu0
    %v1945 = vadd.f32 %v1624, %v1944
    %v1946 = vpop.f32.mrb[0].mxu0
    %1947 = vmatprep.mubr.f32.mxu0 0.0
    %1948 = vmatmul.mubr.f32.gmra.mrb[0].mxu0 %v1784
    %v1949 = vpop.f32.mrb[0].mxu0
    %v1950 = vadd.f32 %v1629, %v1949
    %v1951 = vpop.f32.mrb[0].mxu0
    %1952 = vmatprep.mubr.f32.mxu0 0.0
    %1953 = vmatmul.mubr.f32.gmra.mrb[0].mxu0 %v1787
    %v1954 = vpop.f32.mrb[0].mxu0
    %v1955 = vadd.f32 %v1634, %v1954
    %v1956 = vpop.f32.mrb[0].mxu0
    %1957 = vmatprep.mubr.f32.mxu0 0.0
    %1958 = vmatmul.mubr.f32.gmra.mrb[0].mxu0 %v1790
    %v1959 = vpop.f32.mrb[0].mxu0
    %v1960 = vadd.f32 %v1639, %v1959
    %v1961 = vpop.f32.mrb[0].mxu0
    %1962 = vmatprep.mubr.f32.mxu0 0.0
    %1963 = vmatmul.mubr.f32.gmra.mrb[0].mxu0 %v1793
    %v1964 = vpop.f32.mrb[0].mxu0
    %v1965 = vadd.f32 %v1644, %v1964
    %v1966 = vpop.f32.mrb[0].mxu0
    %1967 = vmatprep.mubr.f32.mxu0 0.0
    %1968 = vmatmul.mubr.f32.gmra.mrb[0].mxu0 %v1796
    %v1969 = vpop.f32.mrb[0].mxu0
    %v1970 = vadd.f32 %v1649, %v1969
    %v1971 = vpop.f32.mrb[0].mxu0
    %1972 = vmatprep.mubr.f32.mxu0 0.0
    %1973 = vmatmul.mubr.f32.gmra.mrb[0].mxu0 %v1799
    %v1974 = vpop.f32.mrb[0].mxu0
    %v1975 = vadd.f32 %v1654, %v1974
    %v1976 = vpop.f32.mrb[0].mxu0
    %1977 = vmatprep.mubr.f32.mxu0 0.0
    %1978 = vmatmul.mubr.f32.gmra.mrb[0].mxu0 %v1802
    %v1979 = vpop.f32.mrb[0].mxu0
    %v1980 = vadd.f32 %v1659, %v1979
    %v1981 = vpop.f32.mrb[0].mxu0
    %1982 = vmatprep.mubr.f32.mxu0 0.0
    %1983 = vmatmul.mubr.f32.gmra.mrb[0].mxu0 %v1805
    %v1984 = vpop.f32.mrb[0].mxu0
    %v1985 = vadd.f32 %v1664, %v1984
    %v1986 = vpop.f32.mrb[0].mxu0
    %1987 = vmatprep.mubr.f32.mxu0 0.0
    %1988 = vmatmul.mubr.f32.gmra.mrb[0].mxu0 %v1808
    %v1989 = vpop.f32.mrb[0].mxu0
    %v1990 = vadd.f32 %v1669, %v1989
    %v1991 = vpop.f32.mrb[0].mxu0
    %1992 = vmatprep.mubr.f32.mxu0 0.0
    %1993 = vmatmul.mubr.f32.gmra.mrb[0].mxu0 %v1811
    %v1994 = vpop.f32.mrb[0].mxu0
    %v1995 = vadd.f32 %v1674, %v1994
    %v1996 = vpop.f32.mrb[0].mxu0
    %1997 = vmatprep.mubr.f32.mxu0 0.0
    %1998 = vmatmul.mubr.f32.gmra.mrb[0].mxu0 %v1814
    %v1999 = vpop.f32.mrb[0].mxu0
    %v2000 = vadd.f32 %v1679, %v1999
    %v2001 = vpop.f32.mrb[0].mxu0
    %2002 = vmatprep.mubr.f32.mxu0 0.0
    %2003 = vmatmul.mubr.f32.gmra.mrb[0].mxu0 %v1817
    %v2004 = vpop.f32.mrb[0].mxu0
    %v2005 = vadd.f32 %v1684, %v2004
    %v2006 = vpop.f32.mrb[0].mxu0
    %2007 = vmatprep.mubr.f32.mxu0 0.0
    %2008 = vmatmul.mubr.f32.gmra.mrb[0].mxu0 %v1820
    %v2009 = vpop.f32.mrb[0].mxu0
    %v2010 = vadd.f32 %v1689, %v2009
    %v2011 = vpop.f32.mrb[0].mxu0
    %2012 = vmatprep.mubr.f32.mxu0 0.0
    %2013 = vmatmul.mubr.f32.gmra.mrb[0].mxu0 %v1823
    %v2014 = vpop.f32.mrb[0].mxu0
    %v2015 = vadd.f32 %v1694, %v2014
    %v2016 = vpop.f32.mrb[0].mxu0
    %2017 = vmatprep.mubr.f32.mxu0 0.0
    %2018 = vmatmul.mubr.f32.gmra.mrb[0].mxu0 %v1826
    %v2019 = vpop.f32.mrb[0].mxu0
    %v2020 = vadd.f32 %v1699, %v2019
    %v2021 = vpop.f32.mrb[0].mxu0
    %2022 = vmatprep.mubr.f32.mxu0 0.0
    %2023 = vmatmul.mubr.f32.gmra.mrb[0].mxu0 %v1829
    %v2024 = vpop.f32.mrb[0].mxu0
    %v2025 = vadd.f32 %v1704, %v2024
    %v2026 = vpop.f32.mrb[0].mxu0
    %2027 = vmatprep.mubr.f32.mxu0 0.0
    %2028 = vmatmul.mubr.f32.gmra.mrb[0].mxu0 %v1832
    %v2029 = vpop.f32.mrb[0].mxu0
    %v2030 = vadd.f32 %v1709, %v2029
    %v2031 = vpop.f32.mrb[0].mxu0
    %2032 = vmatprep.mubr.f32.mxu0 0.0
    %2033 = vmatmul.mubr.f32.gmra.mrb[0].mxu0 %v1835
    %v2034 = vpop.f32.mrb[0].mxu0
    %v2035 = vadd.f32 %v1714, %v2034
    %v2036 = vpop.f32.mrb[0].mxu0
    %2037 = vmatprep.mubr.f32.mxu0 0.0
    %2038 = vmatmul.mubr.f32.gmra.mrb[0].mxu0 %v1838
    %v2039 = vpop.f32.mrb[0].mxu0
    %v2040 = vadd.f32 %v1719, %v2039
    %v2041 = vpop.f32.mrb[0].mxu0
    %2042 = vmatprep.mubr.f32.mxu0 0.0
    %2043 = vmatmul.mubr.f32.gmra.mrb[0].mxu0 %v1841
    %v2044 = vpop.f32.mrb[0].mxu0
    %v2045 = vadd.f32 %v1724, %v2044
    %v2046 = vpop.f32.mrb[0].mxu0
    %2047 = vmatprep.mubr.f32.mxu0 0.0
    %2048 = vmatmul.mubr.f32.gmra.mrb[0].mxu0 %v1844
    %v2049 = vpop.f32.mrb[0].mxu0
    %v2050 = vadd.f32 %v1729, %v2049
    %v2051 = vpop.f32.mrb[0].mxu0
    %2052 = vmatprep.mubr.f32.mxu0 0.0
    %2053 = vmatmul.mubr.f32.gmra.mrb[0].mxu0 %v1847
    %v2054 = vpop.f32.mrb[0].mxu0
    %v2055 = vadd.f32 %v1734, %v2054
    %v2056 = vpop.f32.mrb[0].mxu0
    %2057 = vmatprep.mubr.f32.mxu0 0.0
    %2058 = vmatmul.mubr.f32.gmra.mrb[0].mxu0 %v1850
    %v2059 = vpop.f32.mrb[0].mxu0
    %v2060 = vadd.f32 %v1739, %v2059
    %v2061 = vpop.f32.mrb[0].mxu0
    %2062 = vmatprep.mubr.f32.mxu0 0.0
    %2063 = vmatmul.mubr.f32.gmra.mrb[0].mxu0 %v1853
    %v2064 = vpop.f32.mrb[0].mxu0
    %v2065 = vadd.f32 %v1744, %v2064
    %v2066 = vpop.f32.mrb[0].mxu0
    %2067 = vmatprep.mubr.f32.mxu0 0.0
    %2068 = vmatmul.mubr.f32.gmra.mrb[0].mxu0 %v1856
    %v2069 = vpop.f32.mrb[0].mxu0
    %v2070 = vadd.f32 %v1749, %v2069
    %v2071 = vpop.f32.mrb[0].mxu0
    %2072 = vmatprep.mubr.f32.mxu0 0.0
    %2073 = vmatmul.mubr.f32.gmra.mrb[0].mxu0 %v1859
    %v2074 = vpop.f32.mrb[0].mxu0
    %v2075 = vadd.f32 %v1754, %v2074
    %v2076 = vpop.f32.mrb[0].mxu0
    %2077 = vmatprep.mubr.f32.mxu0 0.0
    %2078 = vmatmul.mubr.f32.gmra.mrb[0].mxu0 %v1862
    %v2079 = vpop.f32.mrb[0].mxu0
    %v2080 = vadd.f32 %v1759, %v2079
    %v2081 = vpop.f32.mrb[0].mxu0
    %2082 = vmatprep.mubr.f32.mxu0 0.0
    %2083 = vmatmul.mubr.f32.gmra.mrb[0].mxu0 %v1865
    %v2084 = vpop.f32.mrb[0].mxu0
    %v2085 = vadd.f32 %v1764, %v2084
    %v2086 = vpop.f32.mrb[0].mxu0
    %2087 = vmatprep.mubr.f32.mxu0 0.0
    %2088 = vmatmul.mubr.f32.gmra.mrb[0].mxu0 %v1868
    %v2089 = vpop.f32.mrb[0].mxu0
    %v2090 = vadd.f32 %v1769, %v2089
    %v2091 = vpop.f32.mrb[0].mxu0
    %2092 = vmatprep.mubr.f32.mxu0 0.0
    %2093 = vmatmul.mubr.f32.gmra.mrb[0].mxu0 %v1871
    %v2094 = vpop.f32.mrb[0].mxu0
    %v2095 = vadd.f32 %v1774, %v2094
    %v2096 = vpop.f32.mrb[0].mxu0
    %2097 = vdwg.mxu0
    %v2098 = vand.u32 2147483647, %v1940
    %vm2099 = vcmp.le.f32.partialorder %v2098, 0.7853982
    %vm2100 = vcmp.lt.s32.totalorder %v1940, 0
    %v2101 = vand.u32 %v1940, 2139095040
    %v2102 = vshrl.u32 %v2101, 23
    %v2103 = vsub.s32 %v2102, 127
    %v2104 = vand.u32 2147483647, %v1940
    %v2105 = vand.u32 %v2104, 8388607
    %v2106 = vor.u32 %v2105, 8388608
    %v2107 = vsub.s32 0, %v2106
    %v2108 = vadd.s32 %v2103, 1
    %vm2109 = vcmp.gt.s32.totalorder %v2108, 0
    %v2110 = vsel %vm2109, %v2108, 0
    %v2111 = vshrl.u32 %v2110, 5
    %v2112 = vand.u32 %v2110, 31
    %v2113 = vsub.s32 32, %v2112
    %v2114 = vshrl.u32 683565275, %v2113
    %v2115 = vshll.u32 683565275, %v2112
    %v2116 = vshrl.u32 2475754826, %v2113
    %v2117 = vor.u32 %v2115, %v2116
    %v2118 = vshll.u32 2475754826, %v2112
    %v2119 = vshrl.u32 2131351028, %v2113
    %v2120 = vor.u32 %v2118, %v2119
    %v2121 = vshll.u32 2131351028, %v2112
    %v2122 = vshrl.u32 2102212464, %v2113
    %v2123 = vor.u32 %v2121, %v2122
    %v2124 = vshll.u32 2102212464, %v2112
    %v2125 = vshrl.u32 920167782, %v2113
    %v2126 = vor.u32 %v2124, %v2125
    %v2127 = vshll.u32 920167782, %v2112
    %v2128 = vshrl.u32 1326507024, %v2113
    %v2129 = vor.u32 %v2127, %v2128
    %vm2130 = vcmp.lt.s32.totalorder %v2111, 1
    %vm2131 = vcmp.lt.s32.totalorder %v2111, 2
    %vm2132 = vcmp.lt.s32.totalorder %v2111, 3
    %vm2133 = vcmp.lt.s32.totalorder %v2111, 4
    %v2134 = vsel %vm2130, %v2114, %v2117
    %v2135 = vsel %vm2133, %v2123, 2102212464
    %v2136 = vsel %vm2132, %v2120, %v2135
    %v2137 = vsel %vm2131, %v2134, %v2136
    %v2138 = vsel %vm2130, %v2117, %v2120
    %v2139 = vsel %vm2133, %v2126, 920167782
    %v2140 = vsel %vm2132, %v2123, %v2139
    %v2141 = vsel %vm2131, %v2138, %v2140
    %v2142 = vsel %vm2130, %v2120, %v2123
    %v2143 = vsel %vm2133, %v2129, 1326507024
    %v2144 = vsel %vm2132, %v2126, %v2143
    %v2145 = vsel %vm2131, %v2142, %v2144
    %v2146 = vshll.u32 %v2106, 8
    %v2147 = vmul.u32.u64.compose %v2146, %v2145
    %v2148 = vextract.low.u32 %v2147
    %v2149 = vextract.high.u32 %v2147
    %v2150 = vmul.u32.u64.compose %v2146, %v2141
    %v2151 = vextract.low.u32 %v2150
    %v2152 = vextract.high.u32 %v2150
    %v2153 = vmul.u32 %v2146, %v2137
    %v2154 = vadd.s32 %v2149, %v2151
    %vm2155 = vc.u32 %v2149, %v2151
    %v2156 = vadd.s32 %v2152, 1
    %v2157 = vsel %vm2155, %v2156, %v2152
    %v2158 = vadd.s32 %v2153, %v2157
    %v2159 = vadd.s32 %v2158, 536870912
    %v2160 = vshrl.u32 %v2159, 30
    %v2161 = vshll.u32 %v2160, 30
    %v2162 = vsub.s32 %v2158, %v2161
    %vm2163 = vcmp.lt.s32.totalorder %v2162, 0
    %v2164 = vsub.s32 0, %v2162
    %v2165 = vsel %vm2163, %v2164, %v2162
    %v2166 = vclz %v2165
    %v2167 = vsub.s32 %v2166, 2
    %vm2168 = vcmp.gt.s32.totalorder 0, %v2167
    %v2169 = vsel %vm2168, 0, %v2167
    %v2170 = vsub.s32 32, %v2169
    %v2171 = vshll.u32 %v2162, %v2169
    %v2172 = vshrl.u32 %v2154, %v2170
    %v2173 = vor.u32 %v2171, %v2172
    %v2174 = vsub.s32 4294967266, %v2169
    %v2175 = vadd.s32 %v2174, 127
    %v2176 = vshll.u32 %v2175, 23
    %v2177 = vor.u32 4788187, %v2176
    %v2178 = vand.u32 2147483647, %v2177
    %v2180 = vcvt.s32.f32 %v2173
    %v2181 = vmul.f32 %v2180, %v2178
    %v2182 = vxor.u32 %v2181, 2147483648
    %v2183 = vsel %vm2100, %v2182, %v2181
    %v2184 = vsub.s32 4, %v2160
    %v2185 = vsel %vm2100, %v2184, %v2160
    %v2186 = vsel %vm2099, %v1940, %v2183
    %v2187 = vsel %vm2099, 0, %v2185
    %v2188 = vcosq.f32.pop %v2186
    %v2189 = vsinq.f32.pop %v2186
    %vm2190 = vweird.f32 %v1940
    %v2191 = vand.u32 %v2187, 3
    %vm2192 = vcmp.lt.s32.totalorder %v2191, 2
    %vm2193 = vcmp.eq.s32.totalorder %v2191, 0
    %v2194 = vxor.u32 %v2189, 2147483648
    %v2195 = vsel %vm2193, %v2188, %v2194
    %vm2196 = vcmp.eq.s32.totalorder %v2191, 2
    %v2197 = vxor.u32 %v2188, 2147483648
    %v2198 = vsel %vm2196, %v2197, %v2189
    %v2199 = vsel %vm2192, %v2195, %v2198
    %v2200 = vsel %vm2190, nan, %v2199
    %v2201 = vand.u32 2147483647, %v1945
    %vm2202 = vcmp.le.f32.partialorder %v2201, 0.7853982
    %vm2203 = vcmp.lt.s32.totalorder %v1945, 0
    %v2204 = vand.u32 %v1945, 2139095040
    %v2205 = vshrl.u32 %v2204, 23
    %v2206 = vsub.s32 %v2205, 127
    %v2207 = vand.u32 2147483647, %v1945
    %v2208 = vand.u32 %v2207, 8388607
    %v2209 = vor.u32 %v2208, 8388608
    %v2210 = vsub.s32 0, %v2209
    %v2211 = vadd.s32 %v2206, 1
    %vm2212 = vcmp.gt.s32.totalorder %v2211, 0
    %v2213 = vsel %vm2212, %v2211, 0
    %v2214 = vshrl.u32 %v2213, 5
    %v2215 = vand.u32 %v2213, 31
    %v2216 = vsub.s32 32, %v2215
    %v2217 = vshrl.u32 683565275, %v2216
    %v2218 = vshll.u32 683565275, %v2215
    %v2219 = vshrl.u32 2475754826, %v2216
    %v2220 = vor.u32 %v2218, %v2219
    %v2221 = vshll.u32 2475754826, %v2215
    %v2222 = vshrl.u32 2131351028, %v2216
    %v2223 = vor.u32 %v2221, %v2222
    %v2224 = vshll.u32 2131351028, %v2215
    %v2225 = vshrl.u32 2102212464, %v2216
    %v2226 = vor.u32 %v2224, %v2225
    %v2227 = vshll.u32 2102212464, %v2215
    %v2228 = vshrl.u32 920167782, %v2216
    %v2229 = vor.u32 %v2227, %v2228
    %v2230 = vshll.u32 920167782, %v2215
    %v2231 = vshrl.u32 1326507024, %v2216
    %v2232 = vor.u32 %v2230, %v2231
    %vm2233 = vcmp.lt.s32.totalorder %v2214, 1
    %vm2234 = vcmp.lt.s32.totalorder %v2214, 2
    %vm2235 = vcmp.lt.s32.totalorder %v2214, 3
    %vm2236 = vcmp.lt.s32.totalorder %v2214, 4
    %v2237 = vsel %vm2233, %v2217, %v2220
    %v2238 = vsel %vm2236, %v2226, 2102212464
    %v2239 = vsel %vm2235, %v2223, %v2238
    %v2240 = vsel %vm2234, %v2237, %v2239
    %v2241 = vsel %vm2233, %v2220, %v2223
    %v2242 = vsel %vm2236, %v2229, 920167782
    %v2243 = vsel %vm2235, %v2226, %v2242
    %v2244 = vsel %vm2234, %v2241, %v2243
    %v2245 = vsel %vm2233, %v2223, %v2226
    %v2246 = vsel %vm2236, %v2232, 1326507024
    %v2247 = vsel %vm2235, %v2229, %v2246
    %v2248 = vsel %vm2234, %v2245, %v2247
    %v2249 = vshll.u32 %v2209, 8
    %v2250 = vmul.u32.u64.compose %v2249, %v2248
    %v2251 = vextract.low.u32 %v2250
    %v2252 = vextract.high.u32 %v2250
    %v2253 = vmul.u32.u64.compose %v2249, %v2244
    %v2254 = vextract.low.u32 %v2253
    %v2255 = vextract.high.u32 %v2253
    %v2256 = vmul.u32 %v2249, %v2240
    %v2257 = vadd.s32 %v2252, %v2254
    %vm2258 = vc.u32 %v2252, %v2254
    %v2259 = vadd.s32 %v2255, 1
    %v2260 = vsel %vm2258, %v2259, %v2255
    %v2261 = vadd.s32 %v2256, %v2260
    %v2262 = vadd.s32 %v2261, 536870912
    %v2263 = vshrl.u32 %v2262, 30
    %v2264 = vshll.u32 %v2263, 30
    %v2265 = vsub.s32 %v2261, %v2264
    %vm2266 = vcmp.lt.s32.totalorder %v2265, 0
    %v2267 = vsub.s32 0, %v2265
    %v2268 = vsel %vm2266, %v2267, %v2265
    %v2269 = vclz %v2268
    %v2270 = vsub.s32 %v2269, 2
    %vm2271 = vcmp.gt.s32.totalorder 0, %v2270
    %v2272 = vsel %vm2271, 0, %v2270
    %v2273 = vsub.s32 32, %v2272
    %v2274 = vshll.u32 %v2265, %v2272
    %v2275 = vshrl.u32 %v2257, %v2273
    %v2276 = vor.u32 %v2274, %v2275
    %v2277 = vsub.s32 4294967266, %v2272
    %v2278 = vadd.s32 %v2277, 127
    %v2279 = vshll.u32 %v2278, 23
    %v2280 = vor.u32 4788187, %v2279
    %v2281 = vand.u32 2147483647, %v2280
    %v2283 = vcvt.s32.f32 %v2276
    %v2284 = vmul.f32 %v2283, %v2281
    %v2285 = vxor.u32 %v2284, 2147483648
    %v2286 = vsel %vm2203, %v2285, %v2284
    %v2287 = vsub.s32 4, %v2263
    %v2288 = vsel %vm2203, %v2287, %v2263
    %v2289 = vsel %vm2202, %v1945, %v2286
    %v2290 = vsel %vm2202, 0, %v2288
    %v2291 = vcosq.f32.pop %v2289
    %v2292 = vsinq.f32.pop %v2289
    %vm2293 = vweird.f32 %v1945
    %v2294 = vand.u32 %v2290, 3
    %vm2295 = vcmp.lt.s32.totalorder %v2294, 2
    %vm2296 = vcmp.eq.s32.totalorder %v2294, 0
    %v2297 = vxor.u32 %v2292, 2147483648
    %v2298 = vsel %vm2296, %v2291, %v2297
    %vm2299 = vcmp.eq.s32.totalorder %v2294, 2
    %v2300 = vxor.u32 %v2291, 2147483648
    %v2301 = vsel %vm2299, %v2300, %v2292
    %v2302 = vsel %vm2295, %v2298, %v2301
    %v2303 = vsel %vm2293, nan, %v2302
    %v2304 = vand.u32 2147483647, %v1950
    %vm2305 = vcmp.le.f32.partialorder %v2304, 0.7853982
    %vm2306 = vcmp.lt.s32.totalorder %v1950, 0
    %v2307 = vand.u32 %v1950, 2139095040
    %v2308 = vshrl.u32 %v2307, 23
    %v2309 = vsub.s32 %v2308, 127
    %v2310 = vand.u32 2147483647, %v1950
    %v2311 = vand.u32 %v2310, 8388607
    %v2312 = vor.u32 %v2311, 8388608
    %v2313 = vsub.s32 0, %v2312
    %v2314 = vadd.s32 %v2309, 1
    %vm2315 = vcmp.gt.s32.totalorder %v2314, 0
    %v2316 = vsel %vm2315, %v2314, 0
    %v2317 = vshrl.u32 %v2316, 5
    %v2318 = vand.u32 %v2316, 31
    %v2319 = vsub.s32 32, %v2318
    %v2320 = vshrl.u32 683565275, %v2319
    %v2321 = vshll.u32 683565275, %v2318
    %v2322 = vshrl.u32 2475754826, %v2319
    %v2323 = vor.u32 %v2321, %v2322
    %v2324 = vshll.u32 2475754826, %v2318
    %v2325 = vshrl.u32 2131351028, %v2319
    %v2326 = vor.u32 %v2324, %v2325
    %v2327 = vshll.u32 2131351028, %v2318
    %v2328 = vshrl.u32 2102212464, %v2319
    %v2329 = vor.u32 %v2327, %v2328
    %v2330 = vshll.u32 2102212464, %v2318
    %v2331 = vshrl.u32 920167782, %v2319
    %v2332 = vor.u32 %v2330, %v2331
    %v2333 = vshll.u32 920167782, %v2318
    %v2334 = vshrl.u32 1326507024, %v2319
    %v2335 = vor.u32 %v2333, %v2334
    %vm2336 = vcmp.lt.s32.totalorder %v2317, 1
    %vm2337 = vcmp.lt.s32.totalorder %v2317, 2
    %vm2338 = vcmp.lt.s32.totalorder %v2317, 3
    %vm2339 = vcmp.lt.s32.totalorder %v2317, 4
    %v2340 = vsel %vm2336, %v2320, %v2323
    %v2341 = vsel %vm2339, %v2329, 2102212464
    %v2342 = vsel %vm2338, %v2326, %v2341
    %v2343 = vsel %vm2337, %v2340, %v2342
    %v2344 = vsel %vm2336, %v2323, %v2326
    %v2345 = vsel %vm2339, %v2332, 920167782
    %v2346 = vsel %vm2338, %v2329, %v2345
    %v2347 = vsel %vm2337, %v2344, %v2346
    %v2348 = vsel %vm2336, %v2326, %v2329
    %v2349 = vsel %vm2339, %v2335, 1326507024
    %v2350 = vsel %vm2338, %v2332, %v2349
    %v2351 = vsel %vm2337, %v2348, %v2350
    %v2352 = vshll.u32 %v2312, 8
    %v2353 = vmul.u32.u64.compose %v2352, %v2351
    %v2354 = vextract.low.u32 %v2353
    %v2355 = vextract.high.u32 %v2353
    %v2356 = vmul.u32.u64.compose %v2352, %v2347
    %v2357 = vextract.low.u32 %v2356
    %v2358 = vextract.high.u32 %v2356
    %v2359 = vmul.u32 %v2352, %v2343
    %v2360 = vadd.s32 %v2355, %v2357
    %vm2361 = vc.u32 %v2355, %v2357
    %v2362 = vadd.s32 %v2358, 1
    %v2363 = vsel %vm2361, %v2362, %v2358
    %v2364 = vadd.s32 %v2359, %v2363
    %v2365 = vadd.s32 %v2364, 536870912
    %v2366 = vshrl.u32 %v2365, 30
    %v2367 = vshll.u32 %v2366, 30
    %v2368 = vsub.s32 %v2364, %v2367
    %vm2369 = vcmp.lt.s32.totalorder %v2368, 0
    %v2370 = vsub.s32 0, %v2368
    %v2371 = vsel %vm2369, %v2370, %v2368
    %v2372 = vclz %v2371
    %v2373 = vsub.s32 %v2372, 2
    %vm2374 = vcmp.gt.s32.totalorder 0, %v2373
    %v2375 = vsel %vm2374, 0, %v2373
    %v2376 = vsub.s32 32, %v2375
    %v2377 = vshll.u32 %v2368, %v2375
    %v2378 = vshrl.u32 %v2360, %v2376
    %v2379 = vor.u32 %v2377, %v2378
    %v2380 = vsub.s32 4294967266, %v2375
    %v2381 = vadd.s32 %v2380, 127
    %v2382 = vshll.u32 %v2381, 23
    %v2383 = vor.u32 4788187, %v2382
    %v2384 = vand.u32 2147483647, %v2383
    %v2386 = vcvt.s32.f32 %v2379
    %v2387 = vmul.f32 %v2386, %v2384
    %v2388 = vxor.u32 %v2387, 2147483648
    %v2389 = vsel %vm2306, %v2388, %v2387
    %v2390 = vsub.s32 4, %v2366
    %v2391 = vsel %vm2306, %v2390, %v2366
    %v2392 = vsel %vm2305, %v1950, %v2389
    %v2393 = vsel %vm2305, 0, %v2391
    %v2394 = vcosq.f32.pop %v2392
    %v2395 = vsinq.f32.pop %v2392
    %vm2396 = vweird.f32 %v1950
    %v2397 = vand.u32 %v2393, 3
    %vm2398 = vcmp.lt.s32.totalorder %v2397, 2
    %vm2399 = vcmp.eq.s32.totalorder %v2397, 0
    %v2400 = vxor.u32 %v2395, 2147483648
    %v2401 = vsel %vm2399, %v2394, %v2400
    %vm2402 = vcmp.eq.s32.totalorder %v2397, 2
    %v2403 = vxor.u32 %v2394, 2147483648
    %v2404 = vsel %vm2402, %v2403, %v2395
    %v2405 = vsel %vm2398, %v2401, %v2404
    %v2406 = vsel %vm2396, nan, %v2405
    %v2407 = vand.u32 2147483647, %v1955
    %vm2408 = vcmp.le.f32.partialorder %v2407, 0.7853982
    %vm2409 = vcmp.lt.s32.totalorder %v1955, 0
    %v2410 = vand.u32 %v1955, 2139095040
    %v2411 = vshrl.u32 %v2410, 23
    %v2412 = vsub.s32 %v2411, 127
    %v2413 = vand.u32 2147483647, %v1955
    %v2414 = vand.u32 %v2413, 8388607
    %v2415 = vor.u32 %v2414, 8388608
    %v2416 = vsub.s32 0, %v2415
    %v2417 = vadd.s32 %v2412, 1
    %vm2418 = vcmp.gt.s32.totalorder %v2417, 0
    %v2419 = vsel %vm2418, %v2417, 0
    %v2420 = vshrl.u32 %v2419, 5
    %v2421 = vand.u32 %v2419, 31
    %v2422 = vsub.s32 32, %v2421
    %v2423 = vshrl.u32 683565275, %v2422
    %v2424 = vshll.u32 683565275, %v2421
    %v2425 = vshrl.u32 2475754826, %v2422
    %v2426 = vor.u32 %v2424, %v2425
    %v2427 = vshll.u32 2475754826, %v2421
    %v2428 = vshrl.u32 2131351028, %v2422
    %v2429 = vor.u32 %v2427, %v2428
    %v2430 = vshll.u32 2131351028, %v2421
    %v2431 = vshrl.u32 2102212464, %v2422
    %v2432 = vor.u32 %v2430, %v2431
    %v2433 = vshll.u32 2102212464, %v2421
    %v2434 = vshrl.u32 920167782, %v2422
    %v2435 = vor.u32 %v2433, %v2434
    %v2436 = vshll.u32 920167782, %v2421
    %v2437 = vshrl.u32 1326507024, %v2422
    %v2438 = vor.u32 %v2436, %v2437
    %vm2439 = vcmp.lt.s32.totalorder %v2420, 1
    %vm2440 = vcmp.lt.s32.totalorder %v2420, 2
    %vm2441 = vcmp.lt.s32.totalorder %v2420, 3
    %vm2442 = vcmp.lt.s32.totalorder %v2420, 4
    %v2443 = vsel %vm2439, %v2423, %v2426
    %v2444 = vsel %vm2442, %v2432, 2102212464
    %v2445 = vsel %vm2441, %v2429, %v2444
    %v2446 = vsel %vm2440, %v2443, %v2445
    %v2447 = vsel %vm2439, %v2426, %v2429
    %v2448 = vsel %vm2442, %v2435, 920167782
    %v2449 = vsel %vm2441, %v2432, %v2448
    %v2450 = vsel %vm2440, %v2447, %v2449
    %v2451 = vsel %vm2439, %v2429, %v2432
    %v2452 = vsel %vm2442, %v2438, 1326507024
    %v2453 = vsel %vm2441, %v2435, %v2452
    %v2454 = vsel %vm2440, %v2451, %v2453
    %v2455 = vshll.u32 %v2415, 8
    %v2456 = vmul.u32.u64.compose %v2455, %v2454
    %v2457 = vextract.low.u32 %v2456
    %v2458 = vextract.high.u32 %v2456
    %v2459 = vmul.u32.u64.compose %v2455, %v2450
    %v2460 = vextract.low.u32 %v2459
    %v2461 = vextract.high.u32 %v2459
    %v2462 = vmul.u32 %v2455, %v2446
    %v2463 = vadd.s32 %v2458, %v2460
    %vm2464 = vc.u32 %v2458, %v2460
    %v2465 = vadd.s32 %v2461, 1
    %v2466 = vsel %vm2464, %v2465, %v2461
    %v2467 = vadd.s32 %v2462, %v2466
    %v2468 = vadd.s32 %v2467, 536870912
    %v2469 = vshrl.u32 %v2468, 30
    %v2470 = vshll.u32 %v2469, 30
    %v2471 = vsub.s32 %v2467, %v2470
    %vm2472 = vcmp.lt.s32.totalorder %v2471, 0
    %v2473 = vsub.s32 0, %v2471
    %v2474 = vsel %vm2472, %v2473, %v2471
    %v2475 = vclz %v2474
    %v2476 = vsub.s32 %v2475, 2
    %vm2477 = vcmp.gt.s32.totalorder 0, %v2476
    %v2478 = vsel %vm2477, 0, %v2476
    %v2479 = vsub.s32 32, %v2478
    %v2480 = vshll.u32 %v2471, %v2478
    %v2481 = vshrl.u32 %v2463, %v2479
    %v2482 = vor.u32 %v2480, %v2481
    %v2483 = vsub.s32 4294967266, %v2478
    %v2484 = vadd.s32 %v2483, 127
    %v2485 = vshll.u32 %v2484, 23
    %v2486 = vor.u32 4788187, %v2485
    %v2487 = vand.u32 2147483647, %v2486
    %v2489 = vcvt.s32.f32 %v2482
    %v2490 = vmul.f32 %v2489, %v2487
    %v2491 = vxor.u32 %v2490, 2147483648
    %v2492 = vsel %vm2409, %v2491, %v2490
    %v2493 = vsub.s32 4, %v2469
    %v2494 = vsel %vm2409, %v2493, %v2469
    %v2495 = vsel %vm2408, %v1955, %v2492
    %v2496 = vsel %vm2408, 0, %v2494
    %v2497 = vcosq.f32.pop %v2495
    %v2498 = vsinq.f32.pop %v2495
    %vm2499 = vweird.f32 %v1955
    %v2500 = vand.u32 %v2496, 3
    %vm2501 = vcmp.lt.s32.totalorder %v2500, 2
    %vm2502 = vcmp.eq.s32.totalorder %v2500, 0
    %v2503 = vxor.u32 %v2498, 2147483648
    %v2504 = vsel %vm2502, %v2497, %v2503
    %vm2505 = vcmp.eq.s32.totalorder %v2500, 2
    %v2506 = vxor.u32 %v2497, 2147483648
    %v2507 = vsel %vm2505, %v2506, %v2498
    %v2508 = vsel %vm2501, %v2504, %v2507
    %v2509 = vsel %vm2499, nan, %v2508
    %v2510 = vand.u32 2147483647, %v1960
    %vm2511 = vcmp.le.f32.partialorder %v2510, 0.7853982
    %vm2512 = vcmp.lt.s32.totalorder %v1960, 0
    %v2513 = vand.u32 %v1960, 2139095040
    %v2514 = vshrl.u32 %v2513, 23
    %v2515 = vsub.s32 %v2514, 127
    %v2516 = vand.u32 2147483647, %v1960
    %v2517 = vand.u32 %v2516, 8388607
    %v2518 = vor.u32 %v2517, 8388608
    %v2519 = vsub.s32 0, %v2518
    %v2520 = vadd.s32 %v2515, 1
    %vm2521 = vcmp.gt.s32.totalorder %v2520, 0
    %v2522 = vsel %vm2521, %v2520, 0
    %v2523 = vshrl.u32 %v2522, 5
    %v2524 = vand.u32 %v2522, 31
    %v2525 = vsub.s32 32, %v2524
    %v2526 = vshrl.u32 683565275, %v2525
    %v2527 = vshll.u32 683565275, %v2524
    %v2528 = vshrl.u32 2475754826, %v2525
    %v2529 = vor.u32 %v2527, %v2528
    %v2530 = vshll.u32 2475754826, %v2524
    %v2531 = vshrl.u32 2131351028, %v2525
    %v2532 = vor.u32 %v2530, %v2531
    %v2533 = vshll.u32 2131351028, %v2524
    %v2534 = vshrl.u32 2102212464, %v2525
    %v2535 = vor.u32 %v2533, %v2534
    %v2536 = vshll.u32 2102212464, %v2524
    %v2537 = vshrl.u32 920167782, %v2525
    %v2538 = vor.u32 %v2536, %v2537
    %v2539 = vshll.u32 920167782, %v2524
    %v2540 = vshrl.u32 1326507024, %v2525
    %v2541 = vor.u32 %v2539, %v2540
    %vm2542 = vcmp.lt.s32.totalorder %v2523, 1
    %vm2543 = vcmp.lt.s32.totalorder %v2523, 2
    %vm2544 = vcmp.lt.s32.totalorder %v2523, 3
    %vm2545 = vcmp.lt.s32.totalorder %v2523, 4
    %v2546 = vsel %vm2542, %v2526, %v2529
    %v2547 = vsel %vm2545, %v2535, 2102212464
    %v2548 = vsel %vm2544, %v2532, %v2547
    %v2549 = vsel %vm2543, %v2546, %v2548
    %v2550 = vsel %vm2542, %v2529, %v2532
    %v2551 = vsel %vm2545, %v2538, 920167782
    %v2552 = vsel %vm2544, %v2535, %v2551
    %v2553 = vsel %vm2543, %v2550, %v2552
    %v2554 = vsel %vm2542, %v2532, %v2535
    %v2555 = vsel %vm2545, %v2541, 1326507024
    %v2556 = vsel %vm2544, %v2538, %v2555
    %v2557 = vsel %vm2543, %v2554, %v2556
    %v2558 = vshll.u32 %v2518, 8
    %v2559 = vmul.u32.u64.compose %v2558, %v2557
    %v2560 = vextract.low.u32 %v2559
    %v2561 = vextract.high.u32 %v2559
    %v2562 = vmul.u32.u64.compose %v2558, %v2553
    %v2563 = vextract.low.u32 %v2562
    %v2564 = vextract.high.u32 %v2562
    %v2565 = vmul.u32 %v2558, %v2549
    %v2566 = vadd.s32 %v2561, %v2563
    %vm2567 = vc.u32 %v2561, %v2563
    %v2568 = vadd.s32 %v2564, 1
    %v2569 = vsel %vm2567, %v2568, %v2564
    %v2570 = vadd.s32 %v2565, %v2569
    %v2571 = vadd.s32 %v2570, 536870912
    %v2572 = vshrl.u32 %v2571, 30
    %v2573 = vshll.u32 %v2572, 30
    %v2574 = vsub.s32 %v2570, %v2573
    %vm2575 = vcmp.lt.s32.totalorder %v2574, 0
    %v2576 = vsub.s32 0, %v2574
    %v2577 = vsel %vm2575, %v2576, %v2574
    %v2578 = vclz %v2577
    %v2579 = vsub.s32 %v2578, 2
    %vm2580 = vcmp.gt.s32.totalorder 0, %v2579
    %v2581 = vsel %vm2580, 0, %v2579
    %v2582 = vsub.s32 32, %v2581
    %v2583 = vshll.u32 %v2574, %v2581
    %v2584 = vshrl.u32 %v2566, %v2582
    %v2585 = vor.u32 %v2583, %v2584
    %v2586 = vsub.s32 4294967266, %v2581
    %v2587 = vadd.s32 %v2586, 127
    %v2588 = vshll.u32 %v2587, 23
    %v2589 = vor.u32 4788187, %v2588
    %v2590 = vand.u32 2147483647, %v2589
    %v2592 = vcvt.s32.f32 %v2585
    %v2593 = vmul.f32 %v2592, %v2590
    %v2594 = vxor.u32 %v2593, 2147483648
    %v2595 = vsel %vm2512, %v2594, %v2593
    %v2596 = vsub.s32 4, %v2572
    %v2597 = vsel %vm2512, %v2596, %v2572
    %v2598 = vsel %vm2511, %v1960, %v2595
    %v2599 = vsel %vm2511, 0, %v2597
    %v2600 = vcosq.f32.pop %v2598
    %v2601 = vsinq.f32.pop %v2598
    %vm2602 = vweird.f32 %v1960
    %v2603 = vand.u32 %v2599, 3
    %vm2604 = vcmp.lt.s32.totalorder %v2603, 2
    %vm2605 = vcmp.eq.s32.totalorder %v2603, 0
    %v2606 = vxor.u32 %v2601, 2147483648
    %v2607 = vsel %vm2605, %v2600, %v2606
    %vm2608 = vcmp.eq.s32.totalorder %v2603, 2
    %v2609 = vxor.u32 %v2600, 2147483648
    %v2610 = vsel %vm2608, %v2609, %v2601
    %v2611 = vsel %vm2604, %v2607, %v2610
    %v2612 = vsel %vm2602, nan, %v2611
    %v2613 = vand.u32 2147483647, %v1965
    %vm2614 = vcmp.le.f32.partialorder %v2613, 0.7853982
    %vm2615 = vcmp.lt.s32.totalorder %v1965, 0
    %v2616 = vand.u32 %v1965, 2139095040
    %v2617 = vshrl.u32 %v2616, 23
    %v2618 = vsub.s32 %v2617, 127
    %v2619 = vand.u32 2147483647, %v1965
    %v2620 = vand.u32 %v2619, 8388607
    %v2621 = vor.u32 %v2620, 8388608
    %v2622 = vsub.s32 0, %v2621
    %v2623 = vadd.s32 %v2618, 1
    %vm2624 = vcmp.gt.s32.totalorder %v2623, 0
    %v2625 = vsel %vm2624, %v2623, 0
    %v2626 = vshrl.u32 %v2625, 5
    %v2627 = vand.u32 %v2625, 31
    %v2628 = vsub.s32 32, %v2627
    %v2629 = vshrl.u32 683565275, %v2628
    %v2630 = vshll.u32 683565275, %v2627
    %v2631 = vshrl.u32 2475754826, %v2628
    %v2632 = vor.u32 %v2630, %v2631
    %v2633 = vshll.u32 2475754826, %v2627
    %v2634 = vshrl.u32 2131351028, %v2628
    %v2635 = vor.u32 %v2633, %v2634
    %v2636 = vshll.u32 2131351028, %v2627
    %v2637 = vshrl.u32 2102212464, %v2628
    %v2638 = vor.u32 %v2636, %v2637
    %v2639 = vshll.u32 2102212464, %v2627
    %v2640 = vshrl.u32 920167782, %v2628
    %v2641 = vor.u32 %v2639, %v2640
    %v2642 = vshll.u32 920167782, %v2627
    %v2643 = vshrl.u32 1326507024, %v2628
    %v2644 = vor.u32 %v2642, %v2643
    %vm2645 = vcmp.lt.s32.totalorder %v2626, 1
    %vm2646 = vcmp.lt.s32.totalorder %v2626, 2
    %vm2647 = vcmp.lt.s32.totalorder %v2626, 3
    %vm2648 = vcmp.lt.s32.totalorder %v2626, 4
    %v2649 = vsel %vm2645, %v2629, %v2632
    %v2650 = vsel %vm2648, %v2638, 2102212464
    %v2651 = vsel %vm2647, %v2635, %v2650
    %v2652 = vsel %vm2646, %v2649, %v2651
    %v2653 = vsel %vm2645, %v2632, %v2635
    %v2654 = vsel %vm2648, %v2641, 920167782
    %v2655 = vsel %vm2647, %v2638, %v2654
    %v2656 = vsel %vm2646, %v2653, %v2655
    %v2657 = vsel %vm2645, %v2635, %v2638
    %v2658 = vsel %vm2648, %v2644, 1326507024
    %v2659 = vsel %vm2647, %v2641, %v2658
    %v2660 = vsel %vm2646, %v2657, %v2659
    %v2661 = vshll.u32 %v2621, 8
    %v2662 = vmul.u32.u64.compose %v2661, %v2660
    %v2663 = vextract.low.u32 %v2662
    %v2664 = vextract.high.u32 %v2662
    %v2665 = vmul.u32.u64.compose %v2661, %v2656
    %v2666 = vextract.low.u32 %v2665
    %v2667 = vextract.high.u32 %v2665
    %v2668 = vmul.u32 %v2661, %v2652
    %v2669 = vadd.s32 %v2664, %v2666
    %vm2670 = vc.u32 %v2664, %v2666
    %v2671 = vadd.s32 %v2667, 1
    %v2672 = vsel %vm2670, %v2671, %v2667
    %v2673 = vadd.s32 %v2668, %v2672
    %v2674 = vadd.s32 %v2673, 536870912
    %v2675 = vshrl.u32 %v2674, 30
    %v2676 = vshll.u32 %v2675, 30
    %v2677 = vsub.s32 %v2673, %v2676
    %vm2678 = vcmp.lt.s32.totalorder %v2677, 0
    %v2679 = vsub.s32 0, %v2677
    %v2680 = vsel %vm2678, %v2679, %v2677
    %v2681 = vclz %v2680
    %v2682 = vsub.s32 %v2681, 2
    %vm2683 = vcmp.gt.s32.totalorder 0, %v2682
    %v2684 = vsel %vm2683, 0, %v2682
    %v2685 = vsub.s32 32, %v2684
    %v2686 = vshll.u32 %v2677, %v2684
    %v2687 = vshrl.u32 %v2669, %v2685
    %v2688 = vor.u32 %v2686, %v2687
    %v2689 = vsub.s32 4294967266, %v2684
    %v2690 = vadd.s32 %v2689, 127
    %v2691 = vshll.u32 %v2690, 23
    %v2692 = vor.u32 4788187, %v2691
    %v2693 = vand.u32 2147483647, %v2692
    %v2695 = vcvt.s32.f32 %v2688
    %v2696 = vmul.f32 %v2695, %v2693
    %v2697 = vxor.u32 %v2696, 2147483648
    %v2698 = vsel %vm2615, %v2697, %v2696
    %v2699 = vsub.s32 4, %v2675
    %v2700 = vsel %vm2615, %v2699, %v2675
    %v2701 = vsel %vm2614, %v1965, %v2698
    %v2702 = vsel %vm2614, 0, %v2700
    %v2703 = vcosq.f32.pop %v2701
    %v2704 = vsinq.f32.pop %v2701
    %vm2705 = vweird.f32 %v1965
    %v2706 = vand.u32 %v2702, 3
    %vm2707 = vcmp.lt.s32.totalorder %v2706, 2
    %vm2708 = vcmp.eq.s32.totalorder %v2706, 0
    %v2709 = vxor.u32 %v2704, 2147483648
    %v2710 = vsel %vm2708, %v2703, %v2709
    %vm2711 = vcmp.eq.s32.totalorder %v2706, 2
    %v2712 = vxor.u32 %v2703, 2147483648
    %v2713 = vsel %vm2711, %v2712, %v2704
    %v2714 = vsel %vm2707, %v2710, %v2713
    %v2715 = vsel %vm2705, nan, %v2714
    %v2716 = vand.u32 2147483647, %v1970
    %vm2717 = vcmp.le.f32.partialorder %v2716, 0.7853982
    %vm2718 = vcmp.lt.s32.totalorder %v1970, 0
    %v2719 = vand.u32 %v1970, 2139095040
    %v2720 = vshrl.u32 %v2719, 23
    %v2721 = vsub.s32 %v2720, 127
    %v2722 = vand.u32 2147483647, %v1970
    %v2723 = vand.u32 %v2722, 8388607
    %v2724 = vor.u32 %v2723, 8388608
    %v2725 = vsub.s32 0, %v2724
    %v2726 = vadd.s32 %v2721, 1
    %vm2727 = vcmp.gt.s32.totalorder %v2726, 0
    %v2728 = vsel %vm2727, %v2726, 0
    %v2729 = vshrl.u32 %v2728, 5
    %v2730 = vand.u32 %v2728, 31
    %v2731 = vsub.s32 32, %v2730
    %v2732 = vshrl.u32 683565275, %v2731
    %v2733 = vshll.u32 683565275, %v2730
    %v2734 = vshrl.u32 2475754826, %v2731
    %v2735 = vor.u32 %v2733, %v2734
    %v2736 = vshll.u32 2475754826, %v2730
    %v2737 = vshrl.u32 2131351028, %v2731
    %v2738 = vor.u32 %v2736, %v2737
    %v2739 = vshll.u32 2131351028, %v2730
    %v2740 = vshrl.u32 2102212464, %v2731
    %v2741 = vor.u32 %v2739, %v2740
    %v2742 = vshll.u32 2102212464, %v2730
    %v2743 = vshrl.u32 920167782, %v2731
    %v2744 = vor.u32 %v2742, %v2743
    %v2745 = vshll.u32 920167782, %v2730
    %v2746 = vshrl.u32 1326507024, %v2731
    %v2747 = vor.u32 %v2745, %v2746
    %vm2748 = vcmp.lt.s32.totalorder %v2729, 1
    %vm2749 = vcmp.lt.s32.totalorder %v2729, 2
    %vm2750 = vcmp.lt.s32.totalorder %v2729, 3
    %vm2751 = vcmp.lt.s32.totalorder %v2729, 4
    %v2752 = vsel %vm2748, %v2732, %v2735
    %v2753 = vsel %vm2751, %v2741, 2102212464
    %v2754 = vsel %vm2750, %v2738, %v2753
    %v2755 = vsel %vm2749, %v2752, %v2754
    %v2756 = vsel %vm2748, %v2735, %v2738
    %v2757 = vsel %vm2751, %v2744, 920167782
    %v2758 = vsel %vm2750, %v2741, %v2757
    %v2759 = vsel %vm2749, %v2756, %v2758
    %v2760 = vsel %vm2748, %v2738, %v2741
    %v2761 = vsel %vm2751, %v2747, 1326507024
    %v2762 = vsel %vm2750, %v2744, %v2761
    %v2763 = vsel %vm2749, %v2760, %v2762
    %v2764 = vshll.u32 %v2724, 8
    %v2765 = vmul.u32.u64.compose %v2764, %v2763
    %v2766 = vextract.low.u32 %v2765
    %v2767 = vextract.high.u32 %v2765
    %v2768 = vmul.u32.u64.compose %v2764, %v2759
    %v2769 = vextract.low.u32 %v2768
    %v2770 = vextract.high.u32 %v2768
    %v2771 = vmul.u32 %v2764, %v2755
    %v2772 = vadd.s32 %v2767, %v2769
    %vm2773 = vc.u32 %v2767, %v2769
    %v2774 = vadd.s32 %v2770, 1
    %v2775 = vsel %vm2773, %v2774, %v2770
    %v2776 = vadd.s32 %v2771, %v2775
    %v2777 = vadd.s32 %v2776, 536870912
    %v2778 = vshrl.u32 %v2777, 30
    %v2779 = vshll.u32 %v2778, 30
    %v2780 = vsub.s32 %v2776, %v2779
    %vm2781 = vcmp.lt.s32.totalorder %v2780, 0
    %v2782 = vsub.s32 0, %v2780
    %v2783 = vsel %vm2781, %v2782, %v2780
    %v2784 = vclz %v2783
    %v2785 = vsub.s32 %v2784, 2
    %vm2786 = vcmp.gt.s32.totalorder 0, %v2785
    %v2787 = vsel %vm2786, 0, %v2785
    %v2788 = vsub.s32 32, %v2787
    %v2789 = vshll.u32 %v2780, %v2787
    %v2790 = vshrl.u32 %v2772, %v2788
    %v2791 = vor.u32 %v2789, %v2790
    %v2792 = vsub.s32 4294967266, %v2787
    %v2793 = vadd.s32 %v2792, 127
    %v2794 = vshll.u32 %v2793, 23
    %v2795 = vor.u32 4788187, %v2794
    %v2796 = vand.u32 2147483647, %v2795
    %v2798 = vcvt.s32.f32 %v2791
    %v2799 = vmul.f32 %v2798, %v2796
    %v2800 = vxor.u32 %v2799, 2147483648
    %v2801 = vsel %vm2718, %v2800, %v2799
    %v2802 = vsub.s32 4, %v2778
    %v2803 = vsel %vm2718, %v2802, %v2778
    %v2804 = vsel %vm2717, %v1970, %v2801
    %v2805 = vsel %vm2717, 0, %v2803
    %v2806 = vcosq.f32.pop %v2804
    %v2807 = vsinq.f32.pop %v2804
    %vm2808 = vweird.f32 %v1970
    %v2809 = vand.u32 %v2805, 3
    %vm2810 = vcmp.lt.s32.totalorder %v2809, 2
    %vm2811 = vcmp.eq.s32.totalorder %v2809, 0
    %v2812 = vxor.u32 %v2807, 2147483648
    %v2813 = vsel %vm2811, %v2806, %v2812
    %vm2814 = vcmp.eq.s32.totalorder %v2809, 2
    %v2815 = vxor.u32 %v2806, 2147483648
    %v2816 = vsel %vm2814, %v2815, %v2807
    %v2817 = vsel %vm2810, %v2813, %v2816
    %v2818 = vsel %vm2808, nan, %v2817
    %v2819 = vand.u32 2147483647, %v1975
    %vm2820 = vcmp.le.f32.partialorder %v2819, 0.7853982
    %vm2821 = vcmp.lt.s32.totalorder %v1975, 0
    %v2822 = vand.u32 %v1975, 2139095040
    %v2823 = vshrl.u32 %v2822, 23
    %v2824 = vsub.s32 %v2823, 127
    %v2825 = vand.u32 2147483647, %v1975
    %v2826 = vand.u32 %v2825, 8388607
    %v2827 = vor.u32 %v2826, 8388608
    %v2828 = vsub.s32 0, %v2827
    %v2829 = vadd.s32 %v2824, 1
    %vm2830 = vcmp.gt.s32.totalorder %v2829, 0
    %v2831 = vsel %vm2830, %v2829, 0
    %v2832 = vshrl.u32 %v2831, 5
    %v2833 = vand.u32 %v2831, 31
    %v2834 = vsub.s32 32, %v2833
    %v2835 = vshrl.u32 683565275, %v2834
    %v2836 = vshll.u32 683565275, %v2833
    %v2837 = vshrl.u32 2475754826, %v2834
    %v2838 = vor.u32 %v2836, %v2837
    %v2839 = vshll.u32 2475754826, %v2833
    %v2840 = vshrl.u32 2131351028, %v2834
    %v2841 = vor.u32 %v2839, %v2840
    %v2842 = vshll.u32 2131351028, %v2833
    %v2843 = vshrl.u32 2102212464, %v2834
    %v2844 = vor.u32 %v2842, %v2843
    %v2845 = vshll.u32 2102212464, %v2833
    %v2846 = vshrl.u32 920167782, %v2834
    %v2847 = vor.u32 %v2845, %v2846
    %v2848 = vshll.u32 920167782, %v2833
    %v2849 = vshrl.u32 1326507024, %v2834
    %v2850 = vor.u32 %v2848, %v2849
    %vm2851 = vcmp.lt.s32.totalorder %v2832, 1
    %vm2852 = vcmp.lt.s32.totalorder %v2832, 2
    %vm2853 = vcmp.lt.s32.totalorder %v2832, 3
    %vm2854 = vcmp.lt.s32.totalorder %v2832, 4
    %v2855 = vsel %vm2851, %v2835, %v2838
    %v2856 = vsel %vm2854, %v2844, 2102212464
    %v2857 = vsel %vm2853, %v2841, %v2856
    %v2858 = vsel %vm2852, %v2855, %v2857
    %v2859 = vsel %vm2851, %v2838, %v2841
    %v2860 = vsel %vm2854, %v2847, 920167782
    %v2861 = vsel %vm2853, %v2844, %v2860
    %v2862 = vsel %vm2852, %v2859, %v2861
    %v2863 = vsel %vm2851, %v2841, %v2844
    %v2864 = vsel %vm2854, %v2850, 1326507024
    %v2865 = vsel %vm2853, %v2847, %v2864
    %v2866 = vsel %vm2852, %v2863, %v2865
    %v2867 = vshll.u32 %v2827, 8
    %v2868 = vmul.u32.u64.compose %v2867, %v2866
    %v2869 = vextract.low.u32 %v2868
    %v2870 = vextract.high.u32 %v2868
    %v2871 = vmul.u32.u64.compose %v2867, %v2862
    %v2872 = vextract.low.u32 %v2871
    %v2873 = vextract.high.u32 %v2871
    %v2874 = vmul.u32 %v2867, %v2858
    %v2875 = vadd.s32 %v2870, %v2872
    %vm2876 = vc.u32 %v2870, %v2872
    %v2877 = vadd.s32 %v2873, 1
    %v2878 = vsel %vm2876, %v2877, %v2873
    %v2879 = vadd.s32 %v2874, %v2878
    %v2880 = vadd.s32 %v2879, 536870912
    %v2881 = vshrl.u32 %v2880, 30
    %v2882 = vshll.u32 %v2881, 30
    %v2883 = vsub.s32 %v2879, %v2882
    %vm2884 = vcmp.lt.s32.totalorder %v2883, 0
    %v2885 = vsub.s32 0, %v2883
    %v2886 = vsel %vm2884, %v2885, %v2883
    %v2887 = vclz %v2886
    %v2888 = vsub.s32 %v2887, 2
    %vm2889 = vcmp.gt.s32.totalorder 0, %v2888
    %v2890 = vsel %vm2889, 0, %v2888
    %v2891 = vsub.s32 32, %v2890
    %v2892 = vshll.u32 %v2883, %v2890
    %v2893 = vshrl.u32 %v2875, %v2891
    %v2894 = vor.u32 %v2892, %v2893
    %v2895 = vsub.s32 4294967266, %v2890
    %v2896 = vadd.s32 %v2895, 127
    %v2897 = vshll.u32 %v2896, 23
    %v2898 = vor.u32 4788187, %v2897
    %v2899 = vand.u32 2147483647, %v2898
    %v2901 = vcvt.s32.f32 %v2894
    %v2902 = vmul.f32 %v2901, %v2899
    %v2903 = vxor.u32 %v2902, 2147483648
    %v2904 = vsel %vm2821, %v2903, %v2902
    %v2905 = vsub.s32 4, %v2881
    %v2906 = vsel %vm2821, %v2905, %v2881
    %v2907 = vsel %vm2820, %v1975, %v2904
    %v2908 = vsel %vm2820, 0, %v2906
    %v2909 = vcosq.f32.pop %v2907
    %v2910 = vsinq.f32.pop %v2907
    %vm2911 = vweird.f32 %v1975
    %v2912 = vand.u32 %v2908, 3
    %vm2913 = vcmp.lt.s32.totalorder %v2912, 2
    %vm2914 = vcmp.eq.s32.totalorder %v2912, 0
    %v2915 = vxor.u32 %v2910, 2147483648
    %v2916 = vsel %vm2914, %v2909, %v2915
    %vm2917 = vcmp.eq.s32.totalorder %v2912, 2
    %v2918 = vxor.u32 %v2909, 2147483648
    %v2919 = vsel %vm2917, %v2918, %v2910
    %v2920 = vsel %vm2913, %v2916, %v2919
    %v2921 = vsel %vm2911, nan, %v2920
    %v2922 = vand.u32 2147483647, %v1980
    %vm2923 = vcmp.le.f32.partialorder %v2922, 0.7853982
    %vm2924 = vcmp.lt.s32.totalorder %v1980, 0
    %v2925 = vand.u32 %v1980, 2139095040
    %v2926 = vshrl.u32 %v2925, 23
    %v2927 = vsub.s32 %v2926, 127
    %v2928 = vand.u32 2147483647, %v1980
    %v2929 = vand.u32 %v2928, 8388607
    %v2930 = vor.u32 %v2929, 8388608
    %v2931 = vsub.s32 0, %v2930
    %v2932 = vadd.s32 %v2927, 1
    %vm2933 = vcmp.gt.s32.totalorder %v2932, 0
    %v2934 = vsel %vm2933, %v2932, 0
    %v2935 = vshrl.u32 %v2934, 5
    %v2936 = vand.u32 %v2934, 31
    %v2937 = vsub.s32 32, %v2936
    %v2938 = vshrl.u32 683565275, %v2937
    %v2939 = vshll.u32 683565275, %v2936
    %v2940 = vshrl.u32 2475754826, %v2937
    %v2941 = vor.u32 %v2939, %v2940
    %v2942 = vshll.u32 2475754826, %v2936
    %v2943 = vshrl.u32 2131351028, %v2937
    %v2944 = vor.u32 %v2942, %v2943
    %v2945 = vshll.u32 2131351028, %v2936
    %v2946 = vshrl.u32 2102212464, %v2937
    %v2947 = vor.u32 %v2945, %v2946
    %v2948 = vshll.u32 2102212464, %v2936
    %v2949 = vshrl.u32 920167782, %v2937
    %v2950 = vor.u32 %v2948, %v2949
    %v2951 = vshll.u32 920167782, %v2936
    %v2952 = vshrl.u32 1326507024, %v2937
    %v2953 = vor.u32 %v2951, %v2952
    %vm2954 = vcmp.lt.s32.totalorder %v2935, 1
    %vm2955 = vcmp.lt.s32.totalorder %v2935, 2
    %vm2956 = vcmp.lt.s32.totalorder %v2935, 3
    %vm2957 = vcmp.lt.s32.totalorder %v2935, 4
    %v2958 = vsel %vm2954, %v2938, %v2941
    %v2959 = vsel %vm2957, %v2947, 2102212464
    %v2960 = vsel %vm2956, %v2944, %v2959
    %v2961 = vsel %vm2955, %v2958, %v2960
    %v2962 = vsel %vm2954, %v2941, %v2944
    %v2963 = vsel %vm2957, %v2950, 920167782
    %v2964 = vsel %vm2956, %v2947, %v2963
    %v2965 = vsel %vm2955, %v2962, %v2964
    %v2966 = vsel %vm2954, %v2944, %v2947
    %v2967 = vsel %vm2957, %v2953, 1326507024
    %v2968 = vsel %vm2956, %v2950, %v2967
    %v2969 = vsel %vm2955, %v2966, %v2968
    %v2970 = vshll.u32 %v2930, 8
    %v2971 = vmul.u32.u64.compose %v2970, %v2969
    %v2972 = vextract.low.u32 %v2971
    %v2973 = vextract.high.u32 %v2971
    %v2974 = vmul.u32.u64.compose %v2970, %v2965
    %v2975 = vextract.low.u32 %v2974
    %v2976 = vextract.high.u32 %v2974
    %v2977 = vmul.u32 %v2970, %v2961
    %v2978 = vadd.s32 %v2973, %v2975
    %vm2979 = vc.u32 %v2973, %v2975
    %v2980 = vadd.s32 %v2976, 1
    %v2981 = vsel %vm2979, %v2980, %v2976
    %v2982 = vadd.s32 %v2977, %v2981
    %v2983 = vadd.s32 %v2982, 536870912
    %v2984 = vshrl.u32 %v2983, 30
    %v2985 = vshll.u32 %v2984, 30
    %v2986 = vsub.s32 %v2982, %v2985
    %vm2987 = vcmp.lt.s32.totalorder %v2986, 0
    %v2988 = vsub.s32 0, %v2986
    %v2989 = vsel %vm2987, %v2988, %v2986
    %v2990 = vclz %v2989
    %v2991 = vsub.s32 %v2990, 2
    %vm2992 = vcmp.gt.s32.totalorder 0, %v2991
    %v2993 = vsel %vm2992, 0, %v2991
    %v2994 = vsub.s32 32, %v2993
    %v2995 = vshll.u32 %v2986, %v2993
    %v2996 = vshrl.u32 %v2978, %v2994
    %v2997 = vor.u32 %v2995, %v2996
    %v2998 = vsub.s32 4294967266, %v2993
    %v2999 = vadd.s32 %v2998, 127
    %v3000 = vshll.u32 %v2999, 23
    %v3001 = vor.u32 4788187, %v3000
    %v3002 = vand.u32 2147483647, %v3001
    %v3004 = vcvt.s32.f32 %v2997
    %v3005 = vmul.f32 %v3004, %v3002
    %v3006 = vxor.u32 %v3005, 2147483648
    %v3007 = vsel %vm2924, %v3006, %v3005
    %v3008 = vsub.s32 4, %v2984
    %v3009 = vsel %vm2924, %v3008, %v2984
    %v3010 = vsel %vm2923, %v1980, %v3007
    %v3011 = vsel %vm2923, 0, %v3009
    %v3012 = vcosq.f32.pop %v3010
    %v3013 = vsinq.f32.pop %v3010
    %vm3014 = vweird.f32 %v1980
    %v3015 = vand.u32 %v3011, 3
    %vm3016 = vcmp.lt.s32.totalorder %v3015, 2
    %vm3017 = vcmp.eq.s32.totalorder %v3015, 0
    %v3018 = vxor.u32 %v3013, 2147483648
    %v3019 = vsel %vm3017, %v3012, %v3018
    %vm3020 = vcmp.eq.s32.totalorder %v3015, 2
    %v3021 = vxor.u32 %v3012, 2147483648
    %v3022 = vsel %vm3020, %v3021, %v3013
    %v3023 = vsel %vm3016, %v3019, %v3022
    %v3024 = vsel %vm3014, nan, %v3023
    %v3025 = vand.u32 2147483647, %v1985
    %vm3026 = vcmp.le.f32.partialorder %v3025, 0.7853982
    %vm3027 = vcmp.lt.s32.totalorder %v1985, 0
    %v3028 = vand.u32 %v1985, 2139095040
    %v3029 = vshrl.u32 %v3028, 23
    %v3030 = vsub.s32 %v3029, 127
    %v3031 = vand.u32 2147483647, %v1985
    %v3032 = vand.u32 %v3031, 8388607
    %v3033 = vor.u32 %v3032, 8388608
    %v3034 = vsub.s32 0, %v3033
    %v3035 = vadd.s32 %v3030, 1
    %vm3036 = vcmp.gt.s32.totalorder %v3035, 0
    %v3037 = vsel %vm3036, %v3035, 0
    %v3038 = vshrl.u32 %v3037, 5
    %v3039 = vand.u32 %v3037, 31
    %v3040 = vsub.s32 32, %v3039
    %v3041 = vshrl.u32 683565275, %v3040
    %v3042 = vshll.u32 683565275, %v3039
    %v3043 = vshrl.u32 2475754826, %v3040
    %v3044 = vor.u32 %v3042, %v3043
    %v3045 = vshll.u32 2475754826, %v3039
    %v3046 = vshrl.u32 2131351028, %v3040
    %v3047 = vor.u32 %v3045, %v3046
    %v3048 = vshll.u32 2131351028, %v3039
    %v3049 = vshrl.u32 2102212464, %v3040
    %v3050 = vor.u32 %v3048, %v3049
    %v3051 = vshll.u32 2102212464, %v3039
    %v3052 = vshrl.u32 920167782, %v3040
    %v3053 = vor.u32 %v3051, %v3052
    %v3054 = vshll.u32 920167782, %v3039
    %v3055 = vshrl.u32 1326507024, %v3040
    %v3056 = vor.u32 %v3054, %v3055
    %vm3057 = vcmp.lt.s32.totalorder %v3038, 1
    %vm3058 = vcmp.lt.s32.totalorder %v3038, 2
    %vm3059 = vcmp.lt.s32.totalorder %v3038, 3
    %vm3060 = vcmp.lt.s32.totalorder %v3038, 4
    %v3061 = vsel %vm3057, %v3041, %v3044
    %v3062 = vsel %vm3060, %v3050, 2102212464
    %v3063 = vsel %vm3059, %v3047, %v3062
    %v3064 = vsel %vm3058, %v3061, %v3063
    %v3065 = vsel %vm3057, %v3044, %v3047
    %v3066 = vsel %vm3060, %v3053, 920167782
    %v3067 = vsel %vm3059, %v3050, %v3066
    %v3068 = vsel %vm3058, %v3065, %v3067
    %v3069 = vsel %vm3057, %v3047, %v3050
    %v3070 = vsel %vm3060, %v3056, 1326507024
    %v3071 = vsel %vm3059, %v3053, %v3070
    %v3072 = vsel %vm3058, %v3069, %v3071
    %v3073 = vshll.u32 %v3033, 8
    %v3074 = vmul.u32.u64.compose %v3073, %v3072
    %v3075 = vextract.low.u32 %v3074
    %v3076 = vextract.high.u32 %v3074
    %v3077 = vmul.u32.u64.compose %v3073, %v3068
    %v3078 = vextract.low.u32 %v3077
    %v3079 = vextract.high.u32 %v3077
    %v3080 = vmul.u32 %v3073, %v3064
    %v3081 = vadd.s32 %v3076, %v3078
    %vm3082 = vc.u32 %v3076, %v3078
    %v3083 = vadd.s32 %v3079, 1
    %v3084 = vsel %vm3082, %v3083, %v3079
    %v3085 = vadd.s32 %v3080, %v3084
    %v3086 = vadd.s32 %v3085, 536870912
    %v3087 = vshrl.u32 %v3086, 30
    %v3088 = vshll.u32 %v3087, 30
    %v3089 = vsub.s32 %v3085, %v3088
    %vm3090 = vcmp.lt.s32.totalorder %v3089, 0
    %v3091 = vsub.s32 0, %v3089
    %v3092 = vsel %vm3090, %v3091, %v3089
    %v3093 = vclz %v3092
    %v3094 = vsub.s32 %v3093, 2
    %vm3095 = vcmp.gt.s32.totalorder 0, %v3094
    %v3096 = vsel %vm3095, 0, %v3094
    %v3097 = vsub.s32 32, %v3096
    %v3098 = vshll.u32 %v3089, %v3096
    %v3099 = vshrl.u32 %v3081, %v3097
    %v3100 = vor.u32 %v3098, %v3099
    %v3101 = vsub.s32 4294967266, %v3096
    %v3102 = vadd.s32 %v3101, 127
    %v3103 = vshll.u32 %v3102, 23
    %v3104 = vor.u32 4788187, %v3103
    %v3105 = vand.u32 2147483647, %v3104
    %v3107 = vcvt.s32.f32 %v3100
    %v3108 = vmul.f32 %v3107, %v3105
    %v3109 = vxor.u32 %v3108, 2147483648
    %v3110 = vsel %vm3027, %v3109, %v3108
    %v3111 = vsub.s32 4, %v3087
    %v3112 = vsel %vm3027, %v3111, %v3087
    %v3113 = vsel %vm3026, %v1985, %v3110
    %v3114 = vsel %vm3026, 0, %v3112
    %v3115 = vcosq.f32.pop %v3113
    %v3116 = vsinq.f32.pop %v3113
    %vm3117 = vweird.f32 %v1985
    %v3118 = vand.u32 %v3114, 3
    %vm3119 = vcmp.lt.s32.totalorder %v3118, 2
    %vm3120 = vcmp.eq.s32.totalorder %v3118, 0
    %v3121 = vxor.u32 %v3116, 2147483648
    %v3122 = vsel %vm3120, %v3115, %v3121
    %vm3123 = vcmp.eq.s32.totalorder %v3118, 2
    %v3124 = vxor.u32 %v3115, 2147483648
    %v3125 = vsel %vm3123, %v3124, %v3116
    %v3126 = vsel %vm3119, %v3122, %v3125
    %v3127 = vsel %vm3117, nan, %v3126
    %v3128 = vand.u32 2147483647, %v1990
    %vm3129 = vcmp.le.f32.partialorder %v3128, 0.7853982
    %vm3130 = vcmp.lt.s32.totalorder %v1990, 0
    %v3131 = vand.u32 %v1990, 2139095040
    %v3132 = vshrl.u32 %v3131, 23
    %v3133 = vsub.s32 %v3132, 127
    %v3134 = vand.u32 2147483647, %v1990
    %v3135 = vand.u32 %v3134, 8388607
    %v3136 = vor.u32 %v3135, 8388608
    %v3137 = vsub.s32 0, %v3136
    %v3138 = vadd.s32 %v3133, 1
    %vm3139 = vcmp.gt.s32.totalorder %v3138, 0
    %v3140 = vsel %vm3139, %v3138, 0
    %v3141 = vshrl.u32 %v3140, 5
    %v3142 = vand.u32 %v3140, 31
    %v3143 = vsub.s32 32, %v3142
    %v3144 = vshrl.u32 683565275, %v3143
    %v3145 = vshll.u32 683565275, %v3142
    %v3146 = vshrl.u32 2475754826, %v3143
    %v3147 = vor.u32 %v3145, %v3146
    %v3148 = vshll.u32 2475754826, %v3142
    %v3149 = vshrl.u32 2131351028, %v3143
    %v3150 = vor.u32 %v3148, %v3149
    %v3151 = vshll.u32 2131351028, %v3142
    %v3152 = vshrl.u32 2102212464, %v3143
    %v3153 = vor.u32 %v3151, %v3152
    %v3154 = vshll.u32 2102212464, %v3142
    %v3155 = vshrl.u32 920167782, %v3143
    %v3156 = vor.u32 %v3154, %v3155
    %v3157 = vshll.u32 920167782, %v3142
    %v3158 = vshrl.u32 1326507024, %v3143
    %v3159 = vor.u32 %v3157, %v3158
    %vm3160 = vcmp.lt.s32.totalorder %v3141, 1
    %vm3161 = vcmp.lt.s32.totalorder %v3141, 2
    %vm3162 = vcmp.lt.s32.totalorder %v3141, 3
    %vm3163 = vcmp.lt.s32.totalorder %v3141, 4
    %v3164 = vsel %vm3160, %v3144, %v3147
    %v3165 = vsel %vm3163, %v3153, 2102212464
    %v3166 = vsel %vm3162, %v3150, %v3165
    %v3167 = vsel %vm3161, %v3164, %v3166
    %v3168 = vsel %vm3160, %v3147, %v3150
    %v3169 = vsel %vm3163, %v3156, 920167782
    %v3170 = vsel %vm3162, %v3153, %v3169
    %v3171 = vsel %vm3161, %v3168, %v3170
    %v3172 = vsel %vm3160, %v3150, %v3153
    %v3173 = vsel %vm3163, %v3159, 1326507024
    %v3174 = vsel %vm3162, %v3156, %v3173
    %v3175 = vsel %vm3161, %v3172, %v3174
    %v3176 = vshll.u32 %v3136, 8
    %v3177 = vmul.u32.u64.compose %v3176, %v3175
    %v3178 = vextract.low.u32 %v3177
    %v3179 = vextract.high.u32 %v3177
    %v3180 = vmul.u32.u64.compose %v3176, %v3171
    %v3181 = vextract.low.u32 %v3180
    %v3182 = vextract.high.u32 %v3180
    %v3183 = vmul.u32 %v3176, %v3167
    %v3184 = vadd.s32 %v3179, %v3181
    %vm3185 = vc.u32 %v3179, %v3181
    %v3186 = vadd.s32 %v3182, 1
    %v3187 = vsel %vm3185, %v3186, %v3182
    %v3188 = vadd.s32 %v3183, %v3187
    %v3189 = vadd.s32 %v3188, 536870912
    %v3190 = vshrl.u32 %v3189, 30
    %v3191 = vshll.u32 %v3190, 30
    %v3192 = vsub.s32 %v3188, %v3191
    %vm3193 = vcmp.lt.s32.totalorder %v3192, 0
    %v3194 = vsub.s32 0, %v3192
    %v3195 = vsel %vm3193, %v3194, %v3192
    %v3196 = vclz %v3195
    %v3197 = vsub.s32 %v3196, 2
    %vm3198 = vcmp.gt.s32.totalorder 0, %v3197
    %v3199 = vsel %vm3198, 0, %v3197
    %v3200 = vsub.s32 32, %v3199
    %v3201 = vshll.u32 %v3192, %v3199
    %v3202 = vshrl.u32 %v3184, %v3200
    %v3203 = vor.u32 %v3201, %v3202
    %v3204 = vsub.s32 4294967266, %v3199
    %v3205 = vadd.s32 %v3204, 127
    %v3206 = vshll.u32 %v3205, 23
    %v3207 = vor.u32 4788187, %v3206
    %v3208 = vand.u32 2147483647, %v3207
    %v3210 = vcvt.s32.f32 %v3203
    %v3211 = vmul.f32 %v3210, %v3208
    %v3212 = vxor.u32 %v3211, 2147483648
    %v3213 = vsel %vm3130, %v3212, %v3211
    %v3214 = vsub.s32 4, %v3190
    %v3215 = vsel %vm3130, %v3214, %v3190
    %v3216 = vsel %vm3129, %v1990, %v3213
    %v3217 = vsel %vm3129, 0, %v3215
    %v3218 = vcosq.f32.pop %v3216
    %v3219 = vsinq.f32.pop %v3216
    %vm3220 = vweird.f32 %v1990
    %v3221 = vand.u32 %v3217, 3
    %vm3222 = vcmp.lt.s32.totalorder %v3221, 2
    %vm3223 = vcmp.eq.s32.totalorder %v3221, 0
    %v3224 = vxor.u32 %v3219, 2147483648
    %v3225 = vsel %vm3223, %v3218, %v3224
    %vm3226 = vcmp.eq.s32.totalorder %v3221, 2
    %v3227 = vxor.u32 %v3218, 2147483648
    %v3228 = vsel %vm3226, %v3227, %v3219
    %v3229 = vsel %vm3222, %v3225, %v3228
    %v3230 = vsel %vm3220, nan, %v3229
    %v3231 = vand.u32 2147483647, %v1995
    %vm3232 = vcmp.le.f32.partialorder %v3231, 0.7853982
    %vm3233 = vcmp.lt.s32.totalorder %v1995, 0
    %v3234 = vand.u32 %v1995, 2139095040
    %v3235 = vshrl.u32 %v3234, 23
    %v3236 = vsub.s32 %v3235, 127
    %v3237 = vand.u32 2147483647, %v1995
    %v3238 = vand.u32 %v3237, 8388607
    %v3239 = vor.u32 %v3238, 8388608
    %v3240 = vsub.s32 0, %v3239
    %v3241 = vadd.s32 %v3236, 1
    %vm3242 = vcmp.gt.s32.totalorder %v3241, 0
    %v3243 = vsel %vm3242, %v3241, 0
    %v3244 = vshrl.u32 %v3243, 5
    %v3245 = vand.u32 %v3243, 31
    %v3246 = vsub.s32 32, %v3245
    %v3247 = vshrl.u32 683565275, %v3246
    %v3248 = vshll.u32 683565275, %v3245
    %v3249 = vshrl.u32 2475754826, %v3246
    %v3250 = vor.u32 %v3248, %v3249
    %v3251 = vshll.u32 2475754826, %v3245
    %v3252 = vshrl.u32 2131351028, %v3246
    %v3253 = vor.u32 %v3251, %v3252
    %v3254 = vshll.u32 2131351028, %v3245
    %v3255 = vshrl.u32 2102212464, %v3246
    %v3256 = vor.u32 %v3254, %v3255
    %v3257 = vshll.u32 2102212464, %v3245
    %v3258 = vshrl.u32 920167782, %v3246
    %v3259 = vor.u32 %v3257, %v3258
    %v3260 = vshll.u32 920167782, %v3245
    %v3261 = vshrl.u32 1326507024, %v3246
    %v3262 = vor.u32 %v3260, %v3261
    %vm3263 = vcmp.lt.s32.totalorder %v3244, 1
    %vm3264 = vcmp.lt.s32.totalorder %v3244, 2
    %vm3265 = vcmp.lt.s32.totalorder %v3244, 3
    %vm3266 = vcmp.lt.s32.totalorder %v3244, 4
    %v3267 = vsel %vm3263, %v3247, %v3250
    %v3268 = vsel %vm3266, %v3256, 2102212464
    %v3269 = vsel %vm3265, %v3253, %v3268
    %v3270 = vsel %vm3264, %v3267, %v3269
    %v3271 = vsel %vm3263, %v3250, %v3253
    %v3272 = vsel %vm3266, %v3259, 920167782
    %v3273 = vsel %vm3265, %v3256, %v3272
    %v3274 = vsel %vm3264, %v3271, %v3273
    %v3275 = vsel %vm3263, %v3253, %v3256
    %v3276 = vsel %vm3266, %v3262, 1326507024
    %v3277 = vsel %vm3265, %v3259, %v3276
    %v3278 = vsel %vm3264, %v3275, %v3277
    %v3279 = vshll.u32 %v3239, 8
    %v3280 = vmul.u32.u64.compose %v3279, %v3278
    %v3281 = vextract.low.u32 %v3280
    %v3282 = vextract.high.u32 %v3280
    %v3283 = vmul.u32.u64.compose %v3279, %v3274
    %v3284 = vextract.low.u32 %v3283
    %v3285 = vextract.high.u32 %v3283
    %v3286 = vmul.u32 %v3279, %v3270
    %v3287 = vadd.s32 %v3282, %v3284
    %vm3288 = vc.u32 %v3282, %v3284
    %v3289 = vadd.s32 %v3285, 1
    %v3290 = vsel %vm3288, %v3289, %v3285
    %v3291 = vadd.s32 %v3286, %v3290
    %v3292 = vadd.s32 %v3291, 536870912
    %v3293 = vshrl.u32 %v3292, 30
    %v3294 = vshll.u32 %v3293, 30
    %v3295 = vsub.s32 %v3291, %v3294
    %vm3296 = vcmp.lt.s32.totalorder %v3295, 0
    %v3297 = vsub.s32 0, %v3295
    %v3298 = vsel %vm3296, %v3297, %v3295
    %v3299 = vclz %v3298
    %v3300 = vsub.s32 %v3299, 2
    %vm3301 = vcmp.gt.s32.totalorder 0, %v3300
    %v3302 = vsel %vm3301, 0, %v3300
    %v3303 = vsub.s32 32, %v3302
    %v3304 = vshll.u32 %v3295, %v3302
    %v3305 = vshrl.u32 %v3287, %v3303
    %v3306 = vor.u32 %v3304, %v3305
    %v3307 = vsub.s32 4294967266, %v3302
    %v3308 = vadd.s32 %v3307, 127
    %v3309 = vshll.u32 %v3308, 23
    %v3310 = vor.u32 4788187, %v3309
    %v3311 = vand.u32 2147483647, %v3310
    %v3313 = vcvt.s32.f32 %v3306
    %v3314 = vmul.f32 %v3313, %v3311
    %v3315 = vxor.u32 %v3314, 2147483648
    %v3316 = vsel %vm3233, %v3315, %v3314
    %v3317 = vsub.s32 4, %v3293
    %v3318 = vsel %vm3233, %v3317, %v3293
    %v3319 = vsel %vm3232, %v1995, %v3316
    %v3320 = vsel %vm3232, 0, %v3318
    %v3321 = vcosq.f32.pop %v3319
    %v3322 = vsinq.f32.pop %v3319
    %vm3323 = vweird.f32 %v1995
    %v3324 = vand.u32 %v3320, 3
    %vm3325 = vcmp.lt.s32.totalorder %v3324, 2
    %vm3326 = vcmp.eq.s32.totalorder %v3324, 0
    %v3327 = vxor.u32 %v3322, 2147483648
    %v3328 = vsel %vm3326, %v3321, %v3327
    %vm3329 = vcmp.eq.s32.totalorder %v3324, 2
    %v3330 = vxor.u32 %v3321, 2147483648
    %v3331 = vsel %vm3329, %v3330, %v3322
    %v3332 = vsel %vm3325, %v3328, %v3331
    %v3333 = vsel %vm3323, nan, %v3332
    %v3334 = vand.u32 2147483647, %v2000
    %vm3335 = vcmp.le.f32.partialorder %v3334, 0.7853982
    %vm3336 = vcmp.lt.s32.totalorder %v2000, 0
    %v3337 = vand.u32 %v2000, 2139095040
    %v3338 = vshrl.u32 %v3337, 23
    %v3339 = vsub.s32 %v3338, 127
    %v3340 = vand.u32 2147483647, %v2000
    %v3341 = vand.u32 %v3340, 8388607
    %v3342 = vor.u32 %v3341, 8388608
    %v3343 = vsub.s32 0, %v3342
    %v3344 = vadd.s32 %v3339, 1
    %vm3345 = vcmp.gt.s32.totalorder %v3344, 0
    %v3346 = vsel %vm3345, %v3344, 0
    %v3347 = vshrl.u32 %v3346, 5
    %v3348 = vand.u32 %v3346, 31
    %v3349 = vsub.s32 32, %v3348
    %v3350 = vshrl.u32 683565275, %v3349
    %v3351 = vshll.u32 683565275, %v3348
    %v3352 = vshrl.u32 2475754826, %v3349
    %v3353 = vor.u32 %v3351, %v3352
    %v3354 = vshll.u32 2475754826, %v3348
    %v3355 = vshrl.u32 2131351028, %v3349
    %v3356 = vor.u32 %v3354, %v3355
    %v3357 = vshll.u32 2131351028, %v3348
    %v3358 = vshrl.u32 2102212464, %v3349
    %v3359 = vor.u32 %v3357, %v3358
    %v3360 = vshll.u32 2102212464, %v3348
    %v3361 = vshrl.u32 920167782, %v3349
    %v3362 = vor.u32 %v3360, %v3361
    %v3363 = vshll.u32 920167782, %v3348
    %v3364 = vshrl.u32 1326507024, %v3349
    %v3365 = vor.u32 %v3363, %v3364
    %vm3366 = vcmp.lt.s32.totalorder %v3347, 1
    %vm3367 = vcmp.lt.s32.totalorder %v3347, 2
    %vm3368 = vcmp.lt.s32.totalorder %v3347, 3
    %vm3369 = vcmp.lt.s32.totalorder %v3347, 4
    %v3370 = vsel %vm3366, %v3350, %v3353
    %v3371 = vsel %vm3369, %v3359, 2102212464
    %v3372 = vsel %vm3368, %v3356, %v3371
    %v3373 = vsel %vm3367, %v3370, %v3372
    %v3374 = vsel %vm3366, %v3353, %v3356
    %v3375 = vsel %vm3369, %v3362, 920167782
    %v3376 = vsel %vm3368, %v3359, %v3375
    %v3377 = vsel %vm3367, %v3374, %v3376
    %v3378 = vsel %vm3366, %v3356, %v3359
    %v3379 = vsel %vm3369, %v3365, 1326507024
    %v3380 = vsel %vm3368, %v3362, %v3379
    %v3381 = vsel %vm3367, %v3378, %v3380
    %v3382 = vshll.u32 %v3342, 8
    %v3383 = vmul.u32.u64.compose %v3382, %v3381
    %v3384 = vextract.low.u32 %v3383
    %v3385 = vextract.high.u32 %v3383
    %v3386 = vmul.u32.u64.compose %v3382, %v3377
    %v3387 = vextract.low.u32 %v3386
    %v3388 = vextract.high.u32 %v3386
    %v3389 = vmul.u32 %v3382, %v3373
    %v3390 = vadd.s32 %v3385, %v3387
    %vm3391 = vc.u32 %v3385, %v3387
    %v3392 = vadd.s32 %v3388, 1
    %v3393 = vsel %vm3391, %v3392, %v3388
    %v3394 = vadd.s32 %v3389, %v3393
    %v3395 = vadd.s32 %v3394, 536870912
    %v3396 = vshrl.u32 %v3395, 30
    %v3397 = vshll.u32 %v3396, 30
    %v3398 = vsub.s32 %v3394, %v3397
    %vm3399 = vcmp.lt.s32.totalorder %v3398, 0
    %v3400 = vsub.s32 0, %v3398
    %v3401 = vsel %vm3399, %v3400, %v3398
    %v3402 = vclz %v3401
    %v3403 = vsub.s32 %v3402, 2
    %vm3404 = vcmp.gt.s32.totalorder 0, %v3403
    %v3405 = vsel %vm3404, 0, %v3403
    %v3406 = vsub.s32 32, %v3405
    %v3407 = vshll.u32 %v3398, %v3405
    %v3408 = vshrl.u32 %v3390, %v3406
    %v3409 = vor.u32 %v3407, %v3408
    %v3410 = vsub.s32 4294967266, %v3405
    %v3411 = vadd.s32 %v3410, 127
    %v3412 = vshll.u32 %v3411, 23
    %v3413 = vor.u32 4788187, %v3412
    %v3414 = vand.u32 2147483647, %v3413
    %v3416 = vcvt.s32.f32 %v3409
    %v3417 = vmul.f32 %v3416, %v3414
    %v3418 = vxor.u32 %v3417, 2147483648
    %v3419 = vsel %vm3336, %v3418, %v3417
    %v3420 = vsub.s32 4, %v3396
    %v3421 = vsel %vm3336, %v3420, %v3396
    %v3422 = vsel %vm3335, %v2000, %v3419
    %v3423 = vsel %vm3335, 0, %v3421
    %v3424 = vcosq.f32.pop %v3422
    %v3425 = vsinq.f32.pop %v3422
    %vm3426 = vweird.f32 %v2000
    %v3427 = vand.u32 %v3423, 3
    %vm3428 = vcmp.lt.s32.totalorder %v3427, 2
    %vm3429 = vcmp.eq.s32.totalorder %v3427, 0
    %v3430 = vxor.u32 %v3425, 2147483648
    %v3431 = vsel %vm3429, %v3424, %v3430
    %vm3432 = vcmp.eq.s32.totalorder %v3427, 2
    %v3433 = vxor.u32 %v3424, 2147483648
    %v3434 = vsel %vm3432, %v3433, %v3425
    %v3435 = vsel %vm3428, %v3431, %v3434
    %v3436 = vsel %vm3426, nan, %v3435
    %v3437 = vand.u32 2147483647, %v2005
    %vm3438 = vcmp.le.f32.partialorder %v3437, 0.7853982
    %vm3439 = vcmp.lt.s32.totalorder %v2005, 0
    %v3440 = vand.u32 %v2005, 2139095040
    %v3441 = vshrl.u32 %v3440, 23
    %v3442 = vsub.s32 %v3441, 127
    %v3443 = vand.u32 2147483647, %v2005
    %v3444 = vand.u32 %v3443, 8388607
    %v3445 = vor.u32 %v3444, 8388608
    %v3446 = vsub.s32 0, %v3445
    %v3447 = vadd.s32 %v3442, 1
    %vm3448 = vcmp.gt.s32.totalorder %v3447, 0
    %v3449 = vsel %vm3448, %v3447, 0
    %v3450 = vshrl.u32 %v3449, 5
    %v3451 = vand.u32 %v3449, 31
    %v3452 = vsub.s32 32, %v3451
    %v3453 = vshrl.u32 683565275, %v3452
    %v3454 = vshll.u32 683565275, %v3451
    %v3455 = vshrl.u32 2475754826, %v3452
    %v3456 = vor.u32 %v3454, %v3455
    %v3457 = vshll.u32 2475754826, %v3451
    %v3458 = vshrl.u32 2131351028, %v3452
    %v3459 = vor.u32 %v3457, %v3458
    %v3460 = vshll.u32 2131351028, %v3451
    %v3461 = vshrl.u32 2102212464, %v3452
    %v3462 = vor.u32 %v3460, %v3461
    %v3463 = vshll.u32 2102212464, %v3451
    %v3464 = vshrl.u32 920167782, %v3452
    %v3465 = vor.u32 %v3463, %v3464
    %v3466 = vshll.u32 920167782, %v3451
    %v3467 = vshrl.u32 1326507024, %v3452
    %v3468 = vor.u32 %v3466, %v3467
    %vm3469 = vcmp.lt.s32.totalorder %v3450, 1
    %vm3470 = vcmp.lt.s32.totalorder %v3450, 2
    %vm3471 = vcmp.lt.s32.totalorder %v3450, 3
    %vm3472 = vcmp.lt.s32.totalorder %v3450, 4
    %v3473 = vsel %vm3469, %v3453, %v3456
    %v3474 = vsel %vm3472, %v3462, 2102212464
    %v3475 = vsel %vm3471, %v3459, %v3474
    %v3476 = vsel %vm3470, %v3473, %v3475
    %v3477 = vsel %vm3469, %v3456, %v3459
    %v3478 = vsel %vm3472, %v3465, 920167782
    %v3479 = vsel %vm3471, %v3462, %v3478
    %v3480 = vsel %vm3470, %v3477, %v3479
    %v3481 = vsel %vm3469, %v3459, %v3462
    %v3482 = vsel %vm3472, %v3468, 1326507024
    %v3483 = vsel %vm3471, %v3465, %v3482
    %v3484 = vsel %vm3470, %v3481, %v3483
    %v3485 = vshll.u32 %v3445, 8
    %v3486 = vmul.u32.u64.compose %v3485, %v3484
    %v3487 = vextract.low.u32 %v3486
    %v3488 = vextract.high.u32 %v3486
    %v3489 = vmul.u32.u64.compose %v3485, %v3480
    %v3490 = vextract.low.u32 %v3489
    %v3491 = vextract.high.u32 %v3489
    %v3492 = vmul.u32 %v3485, %v3476
    %v3493 = vadd.s32 %v3488, %v3490
    %vm3494 = vc.u32 %v3488, %v3490
    %v3495 = vadd.s32 %v3491, 1
    %v3496 = vsel %vm3494, %v3495, %v3491
    %v3497 = vadd.s32 %v3492, %v3496
    %v3498 = vadd.s32 %v3497, 536870912
    %v3499 = vshrl.u32 %v3498, 30
    %v3500 = vshll.u32 %v3499, 30
    %v3501 = vsub.s32 %v3497, %v3500
    %vm3502 = vcmp.lt.s32.totalorder %v3501, 0
    %v3503 = vsub.s32 0, %v3501
    %v3504 = vsel %vm3502, %v3503, %v3501
    %v3505 = vclz %v3504
    %v3506 = vsub.s32 %v3505, 2
    %vm3507 = vcmp.gt.s32.totalorder 0, %v3506
    %v3508 = vsel %vm3507, 0, %v3506
    %v3509 = vsub.s32 32, %v3508
    %v3510 = vshll.u32 %v3501, %v3508
    %v3511 = vshrl.u32 %v3493, %v3509
    %v3512 = vor.u32 %v3510, %v3511
    %v3513 = vsub.s32 4294967266, %v3508
    %v3514 = vadd.s32 %v3513, 127
    %v3515 = vshll.u32 %v3514, 23
    %v3516 = vor.u32 4788187, %v3515
    %v3517 = vand.u32 2147483647, %v3516
    %v3519 = vcvt.s32.f32 %v3512
    %v3520 = vmul.f32 %v3519, %v3517
    %v3521 = vxor.u32 %v3520, 2147483648
    %v3522 = vsel %vm3439, %v3521, %v3520
    %v3523 = vsub.s32 4, %v3499
    %v3524 = vsel %vm3439, %v3523, %v3499
    %v3525 = vsel %vm3438, %v2005, %v3522
    %v3526 = vsel %vm3438, 0, %v3524
    %v3527 = vcosq.f32.pop %v3525
    %v3528 = vsinq.f32.pop %v3525
    %vm3529 = vweird.f32 %v2005
    %v3530 = vand.u32 %v3526, 3
    %vm3531 = vcmp.lt.s32.totalorder %v3530, 2
    %vm3532 = vcmp.eq.s32.totalorder %v3530, 0
    %v3533 = vxor.u32 %v3528, 2147483648
    %v3534 = vsel %vm3532, %v3527, %v3533
    %vm3535 = vcmp.eq.s32.totalorder %v3530, 2
    %v3536 = vxor.u32 %v3527, 2147483648
    %v3537 = vsel %vm3535, %v3536, %v3528
    %v3538 = vsel %vm3531, %v3534, %v3537
    %v3539 = vsel %vm3529, nan, %v3538
    %v3540 = vand.u32 2147483647, %v2010
    %vm3541 = vcmp.le.f32.partialorder %v3540, 0.7853982
    %vm3542 = vcmp.lt.s32.totalorder %v2010, 0
    %v3543 = vand.u32 %v2010, 2139095040
    %v3544 = vshrl.u32 %v3543, 23
    %v3545 = vsub.s32 %v3544, 127
    %v3546 = vand.u32 2147483647, %v2010
    %v3547 = vand.u32 %v3546, 8388607
    %v3548 = vor.u32 %v3547, 8388608
    %v3549 = vsub.s32 0, %v3548
    %v3550 = vadd.s32 %v3545, 1
    %vm3551 = vcmp.gt.s32.totalorder %v3550, 0
    %v3552 = vsel %vm3551, %v3550, 0
    %v3553 = vshrl.u32 %v3552, 5
    %v3554 = vand.u32 %v3552, 31
    %v3555 = vsub.s32 32, %v3554
    %v3556 = vshrl.u32 683565275, %v3555
    %v3557 = vshll.u32 683565275, %v3554
    %v3558 = vshrl.u32 2475754826, %v3555
    %v3559 = vor.u32 %v3557, %v3558
    %v3560 = vshll.u32 2475754826, %v3554
    %v3561 = vshrl.u32 2131351028, %v3555
    %v3562 = vor.u32 %v3560, %v3561
    %v3563 = vshll.u32 2131351028, %v3554
    %v3564 = vshrl.u32 2102212464, %v3555
    %v3565 = vor.u32 %v3563, %v3564
    %v3566 = vshll.u32 2102212464, %v3554
    %v3567 = vshrl.u32 920167782, %v3555
    %v3568 = vor.u32 %v3566, %v3567
    %v3569 = vshll.u32 920167782, %v3554
    %v3570 = vshrl.u32 1326507024, %v3555
    %v3571 = vor.u32 %v3569, %v3570
    %vm3572 = vcmp.lt.s32.totalorder %v3553, 1
    %vm3573 = vcmp.lt.s32.totalorder %v3553, 2
    %vm3574 = vcmp.lt.s32.totalorder %v3553, 3
    %vm3575 = vcmp.lt.s32.totalorder %v3553, 4
    %v3576 = vsel %vm3572, %v3556, %v3559
    %v3577 = vsel %vm3575, %v3565, 2102212464
    %v3578 = vsel %vm3574, %v3562, %v3577
    %v3579 = vsel %vm3573, %v3576, %v3578
    %v3580 = vsel %vm3572, %v3559, %v3562
    %v3581 = vsel %vm3575, %v3568, 920167782
    %v3582 = vsel %vm3574, %v3565, %v3581
    %v3583 = vsel %vm3573, %v3580, %v3582
    %v3584 = vsel %vm3572, %v3562, %v3565
    %v3585 = vsel %vm3575, %v3571, 1326507024
    %v3586 = vsel %vm3574, %v3568, %v3585
    %v3587 = vsel %vm3573, %v3584, %v3586
    %v3588 = vshll.u32 %v3548, 8
    %v3589 = vmul.u32.u64.compose %v3588, %v3587
    %v3590 = vextract.low.u32 %v3589
    %v3591 = vextract.high.u32 %v3589
    %v3592 = vmul.u32.u64.compose %v3588, %v3583
    %v3593 = vextract.low.u32 %v3592
    %v3594 = vextract.high.u32 %v3592
    %v3595 = vmul.u32 %v3588, %v3579
    %v3596 = vadd.s32 %v3591, %v3593
    %vm3597 = vc.u32 %v3591, %v3593
    %v3598 = vadd.s32 %v3594, 1
    %v3599 = vsel %vm3597, %v3598, %v3594
    %v3600 = vadd.s32 %v3595, %v3599
    %v3601 = vadd.s32 %v3600, 536870912
    %v3602 = vshrl.u32 %v3601, 30
    %v3603 = vshll.u32 %v3602, 30
    %v3604 = vsub.s32 %v3600, %v3603
    %vm3605 = vcmp.lt.s32.totalorder %v3604, 0
    %v3606 = vsub.s32 0, %v3604
    %v3607 = vsel %vm3605, %v3606, %v3604
    %v3608 = vclz %v3607
    %v3609 = vsub.s32 %v3608, 2
    %vm3610 = vcmp.gt.s32.totalorder 0, %v3609
    %v3611 = vsel %vm3610, 0, %v3609
    %v3612 = vsub.s32 32, %v3611
    %v3613 = vshll.u32 %v3604, %v3611
    %v3614 = vshrl.u32 %v3596, %v3612
    %v3615 = vor.u32 %v3613, %v3614
    %v3616 = vsub.s32 4294967266, %v3611
    %v3617 = vadd.s32 %v3616, 127
    %v3618 = vshll.u32 %v3617, 23
    %v3619 = vor.u32 4788187, %v3618
    %v3620 = vand.u32 2147483647, %v3619
    %v3622 = vcvt.s32.f32 %v3615
    %v3623 = vmul.f32 %v3622, %v3620
    %v3624 = vxor.u32 %v3623, 2147483648
    %v3625 = vsel %vm3542, %v3624, %v3623
    %v3626 = vsub.s32 4, %v3602
    %v3627 = vsel %vm3542, %v3626, %v3602
    %v3628 = vsel %vm3541, %v2010, %v3625
    %v3629 = vsel %vm3541, 0, %v3627
    %v3630 = vcosq.f32.pop %v3628
    %v3631 = vsinq.f32.pop %v3628
    %vm3632 = vweird.f32 %v2010
    %v3633 = vand.u32 %v3629, 3
    %vm3634 = vcmp.lt.s32.totalorder %v3633, 2
    %vm3635 = vcmp.eq.s32.totalorder %v3633, 0
    %v3636 = vxor.u32 %v3631, 2147483648
    %v3637 = vsel %vm3635, %v3630, %v3636
    %vm3638 = vcmp.eq.s32.totalorder %v3633, 2
    %v3639 = vxor.u32 %v3630, 2147483648
    %v3640 = vsel %vm3638, %v3639, %v3631
    %v3641 = vsel %vm3634, %v3637, %v3640
    %v3642 = vsel %vm3632, nan, %v3641
    %v3643 = vand.u32 2147483647, %v2015
    %vm3644 = vcmp.le.f32.partialorder %v3643, 0.7853982
    %vm3645 = vcmp.lt.s32.totalorder %v2015, 0
    %v3646 = vand.u32 %v2015, 2139095040
    %v3647 = vshrl.u32 %v3646, 23
    %v3648 = vsub.s32 %v3647, 127
    %v3649 = vand.u32 2147483647, %v2015
    %v3650 = vand.u32 %v3649, 8388607
    %v3651 = vor.u32 %v3650, 8388608
    %v3652 = vsub.s32 0, %v3651
    %v3653 = vadd.s32 %v3648, 1
    %vm3654 = vcmp.gt.s32.totalorder %v3653, 0
    %v3655 = vsel %vm3654, %v3653, 0
    %v3656 = vshrl.u32 %v3655, 5
    %v3657 = vand.u32 %v3655, 31
    %v3658 = vsub.s32 32, %v3657
    %v3659 = vshrl.u32 683565275, %v3658
    %v3660 = vshll.u32 683565275, %v3657
    %v3661 = vshrl.u32 2475754826, %v3658
    %v3662 = vor.u32 %v3660, %v3661
    %v3663 = vshll.u32 2475754826, %v3657
    %v3664 = vshrl.u32 2131351028, %v3658
    %v3665 = vor.u32 %v3663, %v3664
    %v3666 = vshll.u32 2131351028, %v3657
    %v3667 = vshrl.u32 2102212464, %v3658
    %v3668 = vor.u32 %v3666, %v3667
    %v3669 = vshll.u32 2102212464, %v3657
    %v3670 = vshrl.u32 920167782, %v3658
    %v3671 = vor.u32 %v3669, %v3670
    %v3672 = vshll.u32 920167782, %v3657
    %v3673 = vshrl.u32 1326507024, %v3658
    %v3674 = vor.u32 %v3672, %v3673
    %vm3675 = vcmp.lt.s32.totalorder %v3656, 1
    %vm3676 = vcmp.lt.s32.totalorder %v3656, 2
    %vm3677 = vcmp.lt.s32.totalorder %v3656, 3
    %vm3678 = vcmp.lt.s32.totalorder %v3656, 4
    %v3679 = vsel %vm3675, %v3659, %v3662
    %v3680 = vsel %vm3678, %v3668, 2102212464
    %v3681 = vsel %vm3677, %v3665, %v3680
    %v3682 = vsel %vm3676, %v3679, %v3681
    %v3683 = vsel %vm3675, %v3662, %v3665
    %v3684 = vsel %vm3678, %v3671, 920167782
    %v3685 = vsel %vm3677, %v3668, %v3684
    %v3686 = vsel %vm3676, %v3683, %v3685
    %v3687 = vsel %vm3675, %v3665, %v3668
    %v3688 = vsel %vm3678, %v3674, 1326507024
    %v3689 = vsel %vm3677, %v3671, %v3688
    %v3690 = vsel %vm3676, %v3687, %v3689
    %v3691 = vshll.u32 %v3651, 8
    %v3692 = vmul.u32.u64.compose %v3691, %v3690
    %v3693 = vextract.low.u32 %v3692
    %v3694 = vextract.high.u32 %v3692
    %v3695 = vmul.u32.u64.compose %v3691, %v3686
    %v3696 = vextract.low.u32 %v3695
    %v3697 = vextract.high.u32 %v3695
    %v3698 = vmul.u32 %v3691, %v3682
    %v3699 = vadd.s32 %v3694, %v3696
    %vm3700 = vc.u32 %v3694, %v3696
    %v3701 = vadd.s32 %v3697, 1
    %v3702 = vsel %vm3700, %v3701, %v3697
    %v3703 = vadd.s32 %v3698, %v3702
    %v3704 = vadd.s32 %v3703, 536870912
    %v3705 = vshrl.u32 %v3704, 30
    %v3706 = vshll.u32 %v3705, 30
    %v3707 = vsub.s32 %v3703, %v3706
    %vm3708 = vcmp.lt.s32.totalorder %v3707, 0
    %v3709 = vsub.s32 0, %v3707
    %v3710 = vsel %vm3708, %v3709, %v3707
    %v3711 = vclz %v3710
    %v3712 = vsub.s32 %v3711, 2
    %vm3713 = vcmp.gt.s32.totalorder 0, %v3712
    %v3714 = vsel %vm3713, 0, %v3712
    %v3715 = vsub.s32 32, %v3714
    %v3716 = vshll.u32 %v3707, %v3714
    %v3717 = vshrl.u32 %v3699, %v3715
    %v3718 = vor.u32 %v3716, %v3717
    %v3719 = vsub.s32 4294967266, %v3714
    %v3720 = vadd.s32 %v3719, 127
    %v3721 = vshll.u32 %v3720, 23
    %v3722 = vor.u32 4788187, %v3721
    %v3723 = vand.u32 2147483647, %v3722
    %v3725 = vcvt.s32.f32 %v3718
    %v3726 = vmul.f32 %v3725, %v3723
    %v3727 = vxor.u32 %v3726, 2147483648
    %v3728 = vsel %vm3645, %v3727, %v3726
    %v3729 = vsub.s32 4, %v3705
    %v3730 = vsel %vm3645, %v3729, %v3705
    %v3731 = vsel %vm3644, %v2015, %v3728
    %v3732 = vsel %vm3644, 0, %v3730
    %v3733 = vcosq.f32.pop %v3731
    %v3734 = vsinq.f32.pop %v3731
    %vm3735 = vweird.f32 %v2015
    %v3736 = vand.u32 %v3732, 3
    %vm3737 = vcmp.lt.s32.totalorder %v3736, 2
    %vm3738 = vcmp.eq.s32.totalorder %v3736, 0
    %v3739 = vxor.u32 %v3734, 2147483648
    %v3740 = vsel %vm3738, %v3733, %v3739
    %vm3741 = vcmp.eq.s32.totalorder %v3736, 2
    %v3742 = vxor.u32 %v3733, 2147483648
    %v3743 = vsel %vm3741, %v3742, %v3734
    %v3744 = vsel %vm3737, %v3740, %v3743
    %v3745 = vsel %vm3735, nan, %v3744
    %v3746 = vand.u32 2147483647, %v2020
    %vm3747 = vcmp.le.f32.partialorder %v3746, 0.7853982
    %vm3748 = vcmp.lt.s32.totalorder %v2020, 0
    %v3749 = vand.u32 %v2020, 2139095040
    %v3750 = vshrl.u32 %v3749, 23
    %v3751 = vsub.s32 %v3750, 127
    %v3752 = vand.u32 2147483647, %v2020
    %v3753 = vand.u32 %v3752, 8388607
    %v3754 = vor.u32 %v3753, 8388608
    %v3755 = vsub.s32 0, %v3754
    %v3756 = vadd.s32 %v3751, 1
    %vm3757 = vcmp.gt.s32.totalorder %v3756, 0
    %v3758 = vsel %vm3757, %v3756, 0
    %v3759 = vshrl.u32 %v3758, 5
    %v3760 = vand.u32 %v3758, 31
    %v3761 = vsub.s32 32, %v3760
    %v3762 = vshrl.u32 683565275, %v3761
    %v3763 = vshll.u32 683565275, %v3760
    %v3764 = vshrl.u32 2475754826, %v3761
    %v3765 = vor.u32 %v3763, %v3764
    %v3766 = vshll.u32 2475754826, %v3760
    %v3767 = vshrl.u32 2131351028, %v3761
    %v3768 = vor.u32 %v3766, %v3767
    %v3769 = vshll.u32 2131351028, %v3760
    %v3770 = vshrl.u32 2102212464, %v3761
    %v3771 = vor.u32 %v3769, %v3770
    %v3772 = vshll.u32 2102212464, %v3760
    %v3773 = vshrl.u32 920167782, %v3761
    %v3774 = vor.u32 %v3772, %v3773
    %v3775 = vshll.u32 920167782, %v3760
    %v3776 = vshrl.u32 1326507024, %v3761
    %v3777 = vor.u32 %v3775, %v3776
    %vm3778 = vcmp.lt.s32.totalorder %v3759, 1
    %vm3779 = vcmp.lt.s32.totalorder %v3759, 2
    %vm3780 = vcmp.lt.s32.totalorder %v3759, 3
    %vm3781 = vcmp.lt.s32.totalorder %v3759, 4
    %v3782 = vsel %vm3778, %v3762, %v3765
    %v3783 = vsel %vm3781, %v3771, 2102212464
    %v3784 = vsel %vm3780, %v3768, %v3783
    %v3785 = vsel %vm3779, %v3782, %v3784
    %v3786 = vsel %vm3778, %v3765, %v3768
    %v3787 = vsel %vm3781, %v3774, 920167782
    %v3788 = vsel %vm3780, %v3771, %v3787
    %v3789 = vsel %vm3779, %v3786, %v3788
    %v3790 = vsel %vm3778, %v3768, %v3771
    %v3791 = vsel %vm3781, %v3777, 1326507024
    %v3792 = vsel %vm3780, %v3774, %v3791
    %v3793 = vsel %vm3779, %v3790, %v3792
    %v3794 = vshll.u32 %v3754, 8
    %v3795 = vmul.u32.u64.compose %v3794, %v3793
    %v3796 = vextract.low.u32 %v3795
    %v3797 = vextract.high.u32 %v3795
    %v3798 = vmul.u32.u64.compose %v3794, %v3789
    %v3799 = vextract.low.u32 %v3798
    %v3800 = vextract.high.u32 %v3798
    %v3801 = vmul.u32 %v3794, %v3785
    %v3802 = vadd.s32 %v3797, %v3799
    %vm3803 = vc.u32 %v3797, %v3799
    %v3804 = vadd.s32 %v3800, 1
    %v3805 = vsel %vm3803, %v3804, %v3800
    %v3806 = vadd.s32 %v3801, %v3805
    %v3807 = vadd.s32 %v3806, 536870912
    %v3808 = vshrl.u32 %v3807, 30
    %v3809 = vshll.u32 %v3808, 30
    %v3810 = vsub.s32 %v3806, %v3809
    %vm3811 = vcmp.lt.s32.totalorder %v3810, 0
    %v3812 = vsub.s32 0, %v3810
    %v3813 = vsel %vm3811, %v3812, %v3810
    %v3814 = vclz %v3813
    %v3815 = vsub.s32 %v3814, 2
    %vm3816 = vcmp.gt.s32.totalorder 0, %v3815
    %v3817 = vsel %vm3816, 0, %v3815
    %v3818 = vsub.s32 32, %v3817
    %v3819 = vshll.u32 %v3810, %v3817
    %v3820 = vshrl.u32 %v3802, %v3818
    %v3821 = vor.u32 %v3819, %v3820
    %v3822 = vsub.s32 4294967266, %v3817
    %v3823 = vadd.s32 %v3822, 127
    %v3824 = vshll.u32 %v3823, 23
    %v3825 = vor.u32 4788187, %v3824
    %v3826 = vand.u32 2147483647, %v3825
    %v3828 = vcvt.s32.f32 %v3821
    %v3829 = vmul.f32 %v3828, %v3826
    %v3830 = vxor.u32 %v3829, 2147483648
    %v3831 = vsel %vm3748, %v3830, %v3829
    %v3832 = vsub.s32 4, %v3808
    %v3833 = vsel %vm3748, %v3832, %v3808
    %v3834 = vsel %vm3747, %v2020, %v3831
    %v3835 = vsel %vm3747, 0, %v3833
    %v3836 = vcosq.f32.pop %v3834
    %v3837 = vsinq.f32.pop %v3834
    %vm3838 = vweird.f32 %v2020
    %v3839 = vand.u32 %v3835, 3
    %vm3840 = vcmp.lt.s32.totalorder %v3839, 2
    %vm3841 = vcmp.eq.s32.totalorder %v3839, 0
    %v3842 = vxor.u32 %v3837, 2147483648
    %v3843 = vsel %vm3841, %v3836, %v3842
    %vm3844 = vcmp.eq.s32.totalorder %v3839, 2
    %v3845 = vxor.u32 %v3836, 2147483648
    %v3846 = vsel %vm3844, %v3845, %v3837
    %v3847 = vsel %vm3840, %v3843, %v3846
    %v3848 = vsel %vm3838, nan, %v3847
    %v3849 = vand.u32 2147483647, %v2025
    %vm3850 = vcmp.le.f32.partialorder %v3849, 0.7853982
    %vm3851 = vcmp.lt.s32.totalorder %v2025, 0
    %v3852 = vand.u32 %v2025, 2139095040
    %v3853 = vshrl.u32 %v3852, 23
    %v3854 = vsub.s32 %v3853, 127
    %v3855 = vand.u32 2147483647, %v2025
    %v3856 = vand.u32 %v3855, 8388607
    %v3857 = vor.u32 %v3856, 8388608
    %v3858 = vsub.s32 0, %v3857
    %v3859 = vadd.s32 %v3854, 1
    %vm3860 = vcmp.gt.s32.totalorder %v3859, 0
    %v3861 = vsel %vm3860, %v3859, 0
    %v3862 = vshrl.u32 %v3861, 5
    %v3863 = vand.u32 %v3861, 31
    %v3864 = vsub.s32 32, %v3863
    %v3865 = vshrl.u32 683565275, %v3864
    %v3866 = vshll.u32 683565275, %v3863
    %v3867 = vshrl.u32 2475754826, %v3864
    %v3868 = vor.u32 %v3866, %v3867
    %v3869 = vshll.u32 2475754826, %v3863
    %v3870 = vshrl.u32 2131351028, %v3864
    %v3871 = vor.u32 %v3869, %v3870
    %v3872 = vshll.u32 2131351028, %v3863
    %v3873 = vshrl.u32 2102212464, %v3864
    %v3874 = vor.u32 %v3872, %v3873
    %v3875 = vshll.u32 2102212464, %v3863
    %v3876 = vshrl.u32 920167782, %v3864
    %v3877 = vor.u32 %v3875, %v3876
    %v3878 = vshll.u32 920167782, %v3863
    %v3879 = vshrl.u32 1326507024, %v3864
    %v3880 = vor.u32 %v3878, %v3879
    %vm3881 = vcmp.lt.s32.totalorder %v3862, 1
    %vm3882 = vcmp.lt.s32.totalorder %v3862, 2
    %vm3883 = vcmp.lt.s32.totalorder %v3862, 3
    %vm3884 = vcmp.lt.s32.totalorder %v3862, 4
    %v3885 = vsel %vm3881, %v3865, %v3868
    %v3886 = vsel %vm3884, %v3874, 2102212464
    %v3887 = vsel %vm3883, %v3871, %v3886
    %v3888 = vsel %vm3882, %v3885, %v3887
    %v3889 = vsel %vm3881, %v3868, %v3871
    %v3890 = vsel %vm3884, %v3877, 920167782
    %v3891 = vsel %vm3883, %v3874, %v3890
    %v3892 = vsel %vm3882, %v3889, %v3891
    %v3893 = vsel %vm3881, %v3871, %v3874
    %v3894 = vsel %vm3884, %v3880, 1326507024
    %v3895 = vsel %vm3883, %v3877, %v3894
    %v3896 = vsel %vm3882, %v3893, %v3895
    %v3897 = vshll.u32 %v3857, 8
    %v3898 = vmul.u32.u64.compose %v3897, %v3896
    %v3899 = vextract.low.u32 %v3898
    %v3900 = vextract.high.u32 %v3898
    %v3901 = vmul.u32.u64.compose %v3897, %v3892
    %v3902 = vextract.low.u32 %v3901
    %v3903 = vextract.high.u32 %v3901
    %v3904 = vmul.u32 %v3897, %v3888
    %v3905 = vadd.s32 %v3900, %v3902
    %vm3906 = vc.u32 %v3900, %v3902
    %v3907 = vadd.s32 %v3903, 1
    %v3908 = vsel %vm3906, %v3907, %v3903
    %v3909 = vadd.s32 %v3904, %v3908
    %v3910 = vadd.s32 %v3909, 536870912
    %v3911 = vshrl.u32 %v3910, 30
    %v3912 = vshll.u32 %v3911, 30
    %v3913 = vsub.s32 %v3909, %v3912
    %vm3914 = vcmp.lt.s32.totalorder %v3913, 0
    %v3915 = vsub.s32 0, %v3913
    %v3916 = vsel %vm3914, %v3915, %v3913
    %v3917 = vclz %v3916
    %v3918 = vsub.s32 %v3917, 2
    %vm3919 = vcmp.gt.s32.totalorder 0, %v3918
    %v3920 = vsel %vm3919, 0, %v3918
    %v3921 = vsub.s32 32, %v3920
    %v3922 = vshll.u32 %v3913, %v3920
    %v3923 = vshrl.u32 %v3905, %v3921
    %v3924 = vor.u32 %v3922, %v3923
    %v3925 = vsub.s32 4294967266, %v3920
    %v3926 = vadd.s32 %v3925, 127
    %v3927 = vshll.u32 %v3926, 23
    %v3928 = vor.u32 4788187, %v3927
    %v3929 = vand.u32 2147483647, %v3928
    %v3931 = vcvt.s32.f32 %v3924
    %v3932 = vmul.f32 %v3931, %v3929
    %v3933 = vxor.u32 %v3932, 2147483648
    %v3934 = vsel %vm3851, %v3933, %v3932
    %v3935 = vsub.s32 4, %v3911
    %v3936 = vsel %vm3851, %v3935, %v3911
    %v3937 = vsel %vm3850, %v2025, %v3934
    %v3938 = vsel %vm3850, 0, %v3936
    %v3939 = vcosq.f32.pop %v3937
    %v3940 = vsinq.f32.pop %v3937
    %vm3941 = vweird.f32 %v2025
    %v3942 = vand.u32 %v3938, 3
    %vm3943 = vcmp.lt.s32.totalorder %v3942, 2
    %vm3944 = vcmp.eq.s32.totalorder %v3942, 0
    %v3945 = vxor.u32 %v3940, 2147483648
    %v3946 = vsel %vm3944, %v3939, %v3945
    %vm3947 = vcmp.eq.s32.totalorder %v3942, 2
    %v3948 = vxor.u32 %v3939, 2147483648
    %v3949 = vsel %vm3947, %v3948, %v3940
    %v3950 = vsel %vm3943, %v3946, %v3949
    %v3951 = vsel %vm3941, nan, %v3950
    %v3952 = vand.u32 2147483647, %v2030
    %vm3953 = vcmp.le.f32.partialorder %v3952, 0.7853982
    %vm3954 = vcmp.lt.s32.totalorder %v2030, 0
    %v3955 = vand.u32 %v2030, 2139095040
    %v3956 = vshrl.u32 %v3955, 23
    %v3957 = vsub.s32 %v3956, 127
    %v3958 = vand.u32 2147483647, %v2030
    %v3959 = vand.u32 %v3958, 8388607
    %v3960 = vor.u32 %v3959, 8388608
    %v3961 = vsub.s32 0, %v3960
    %v3962 = vadd.s32 %v3957, 1
    %vm3963 = vcmp.gt.s32.totalorder %v3962, 0
    %v3964 = vsel %vm3963, %v3962, 0
    %v3965 = vshrl.u32 %v3964, 5
    %v3966 = vand.u32 %v3964, 31
    %v3967 = vsub.s32 32, %v3966
    %v3968 = vshrl.u32 683565275, %v3967
    %v3969 = vshll.u32 683565275, %v3966
    %v3970 = vshrl.u32 2475754826, %v3967
    %v3971 = vor.u32 %v3969, %v3970
    %v3972 = vshll.u32 2475754826, %v3966
    %v3973 = vshrl.u32 2131351028, %v3967
    %v3974 = vor.u32 %v3972, %v3973
    %v3975 = vshll.u32 2131351028, %v3966
    %v3976 = vshrl.u32 2102212464, %v3967
    %v3977 = vor.u32 %v3975, %v3976
    %v3978 = vshll.u32 2102212464, %v3966
    %v3979 = vshrl.u32 920167782, %v3967
    %v3980 = vor.u32 %v3978, %v3979
    %v3981 = vshll.u32 920167782, %v3966
    %v3982 = vshrl.u32 1326507024, %v3967
    %v3983 = vor.u32 %v3981, %v3982
    %vm3984 = vcmp.lt.s32.totalorder %v3965, 1
    %vm3985 = vcmp.lt.s32.totalorder %v3965, 2
    %vm3986 = vcmp.lt.s32.totalorder %v3965, 3
    %vm3987 = vcmp.lt.s32.totalorder %v3965, 4
    %v3988 = vsel %vm3984, %v3968, %v3971
    %v3989 = vsel %vm3987, %v3977, 2102212464
    %v3990 = vsel %vm3986, %v3974, %v3989
    %v3991 = vsel %vm3985, %v3988, %v3990
    %v3992 = vsel %vm3984, %v3971, %v3974
    %v3993 = vsel %vm3987, %v3980, 920167782
    %v3994 = vsel %vm3986, %v3977, %v3993
    %v3995 = vsel %vm3985, %v3992, %v3994
    %v3996 = vsel %vm3984, %v3974, %v3977
    %v3997 = vsel %vm3987, %v3983, 1326507024
    %v3998 = vsel %vm3986, %v3980, %v3997
    %v3999 = vsel %vm3985, %v3996, %v3998
    %v4000 = vshll.u32 %v3960, 8
    %v4001 = vmul.u32.u64.compose %v4000, %v3999
    %v4002 = vextract.low.u32 %v4001
    %v4003 = vextract.high.u32 %v4001
    %v4004 = vmul.u32.u64.compose %v4000, %v3995
    %v4005 = vextract.low.u32 %v4004
    %v4006 = vextract.high.u32 %v4004
    %v4007 = vmul.u32 %v4000, %v3991
    %v4008 = vadd.s32 %v4003, %v4005
    %vm4009 = vc.u32 %v4003, %v4005
    %v4010 = vadd.s32 %v4006, 1
    %v4011 = vsel %vm4009, %v4010, %v4006
    %v4012 = vadd.s32 %v4007, %v4011
    %v4013 = vadd.s32 %v4012, 536870912
    %v4014 = vshrl.u32 %v4013, 30
    %v4015 = vshll.u32 %v4014, 30
    %v4016 = vsub.s32 %v4012, %v4015
    %vm4017 = vcmp.lt.s32.totalorder %v4016, 0
    %v4018 = vsub.s32 0, %v4016
    %v4019 = vsel %vm4017, %v4018, %v4016
    %v4020 = vclz %v4019
    %v4021 = vsub.s32 %v4020, 2
    %vm4022 = vcmp.gt.s32.totalorder 0, %v4021
    %v4023 = vsel %vm4022, 0, %v4021
    %v4024 = vsub.s32 32, %v4023
    %v4025 = vshll.u32 %v4016, %v4023
    %v4026 = vshrl.u32 %v4008, %v4024
    %v4027 = vor.u32 %v4025, %v4026
    %v4028 = vsub.s32 4294967266, %v4023
    %v4029 = vadd.s32 %v4028, 127
    %v4030 = vshll.u32 %v4029, 23
    %v4031 = vor.u32 4788187, %v4030
    %v4032 = vand.u32 2147483647, %v4031
    %v4034 = vcvt.s32.f32 %v4027
    %v4035 = vmul.f32 %v4034, %v4032
    %v4036 = vxor.u32 %v4035, 2147483648
    %v4037 = vsel %vm3954, %v4036, %v4035
    %v4038 = vsub.s32 4, %v4014
    %v4039 = vsel %vm3954, %v4038, %v4014
    %v4040 = vsel %vm3953, %v2030, %v4037
    %v4041 = vsel %vm3953, 0, %v4039
    %v4042 = vcosq.f32.pop %v4040
    %v4043 = vsinq.f32.pop %v4040
    %vm4044 = vweird.f32 %v2030
    %v4045 = vand.u32 %v4041, 3
    %vm4046 = vcmp.lt.s32.totalorder %v4045, 2
    %vm4047 = vcmp.eq.s32.totalorder %v4045, 0
    %v4048 = vxor.u32 %v4043, 2147483648
    %v4049 = vsel %vm4047, %v4042, %v4048
    %vm4050 = vcmp.eq.s32.totalorder %v4045, 2
    %v4051 = vxor.u32 %v4042, 2147483648
    %v4052 = vsel %vm4050, %v4051, %v4043
    %v4053 = vsel %vm4046, %v4049, %v4052
    %v4054 = vsel %vm4044, nan, %v4053
    %v4055 = vand.u32 2147483647, %v2035
    %vm4056 = vcmp.le.f32.partialorder %v4055, 0.7853982
    %vm4057 = vcmp.lt.s32.totalorder %v2035, 0
    %v4058 = vand.u32 %v2035, 2139095040
    %v4059 = vshrl.u32 %v4058, 23
    %v4060 = vsub.s32 %v4059, 127
    %v4061 = vand.u32 2147483647, %v2035
    %v4062 = vand.u32 %v4061, 8388607
    %v4063 = vor.u32 %v4062, 8388608
    %v4064 = vsub.s32 0, %v4063
    %v4065 = vadd.s32 %v4060, 1
    %vm4066 = vcmp.gt.s32.totalorder %v4065, 0
    %v4067 = vsel %vm4066, %v4065, 0
    %v4068 = vshrl.u32 %v4067, 5
    %v4069 = vand.u32 %v4067, 31
    %v4070 = vsub.s32 32, %v4069
    %v4071 = vshrl.u32 683565275, %v4070
    %v4072 = vshll.u32 683565275, %v4069
    %v4073 = vshrl.u32 2475754826, %v4070
    %v4074 = vor.u32 %v4072, %v4073
    %v4075 = vshll.u32 2475754826, %v4069
    %v4076 = vshrl.u32 2131351028, %v4070
    %v4077 = vor.u32 %v4075, %v4076
    %v4078 = vshll.u32 2131351028, %v4069
    %v4079 = vshrl.u32 2102212464, %v4070
    %v4080 = vor.u32 %v4078, %v4079
    %v4081 = vshll.u32 2102212464, %v4069
    %v4082 = vshrl.u32 920167782, %v4070
    %v4083 = vor.u32 %v4081, %v4082
    %v4084 = vshll.u32 920167782, %v4069
    %v4085 = vshrl.u32 1326507024, %v4070
    %v4086 = vor.u32 %v4084, %v4085
    %vm4087 = vcmp.lt.s32.totalorder %v4068, 1
    %vm4088 = vcmp.lt.s32.totalorder %v4068, 2
    %vm4089 = vcmp.lt.s32.totalorder %v4068, 3
    %vm4090 = vcmp.lt.s32.totalorder %v4068, 4
    %v4091 = vsel %vm4087, %v4071, %v4074
    %v4092 = vsel %vm4090, %v4080, 2102212464
    %v4093 = vsel %vm4089, %v4077, %v4092
    %v4094 = vsel %vm4088, %v4091, %v4093
    %v4095 = vsel %vm4087, %v4074, %v4077
    %v4096 = vsel %vm4090, %v4083, 920167782
    %v4097 = vsel %vm4089, %v4080, %v4096
    %v4098 = vsel %vm4088, %v4095, %v4097
    %v4099 = vsel %vm4087, %v4077, %v4080
    %v4100 = vsel %vm4090, %v4086, 1326507024
    %v4101 = vsel %vm4089, %v4083, %v4100
    %v4102 = vsel %vm4088, %v4099, %v4101
    %v4103 = vshll.u32 %v4063, 8
    %v4104 = vmul.u32.u64.compose %v4103, %v4102
    %v4105 = vextract.low.u32 %v4104
    %v4106 = vextract.high.u32 %v4104
    %v4107 = vmul.u32.u64.compose %v4103, %v4098
    %v4108 = vextract.low.u32 %v4107
    %v4109 = vextract.high.u32 %v4107
    %v4110 = vmul.u32 %v4103, %v4094
    %v4111 = vadd.s32 %v4106, %v4108
    %vm4112 = vc.u32 %v4106, %v4108
    %v4113 = vadd.s32 %v4109, 1
    %v4114 = vsel %vm4112, %v4113, %v4109
    %v4115 = vadd.s32 %v4110, %v4114
    %v4116 = vadd.s32 %v4115, 536870912
    %v4117 = vshrl.u32 %v4116, 30
    %v4118 = vshll.u32 %v4117, 30
    %v4119 = vsub.s32 %v4115, %v4118
    %vm4120 = vcmp.lt.s32.totalorder %v4119, 0
    %v4121 = vsub.s32 0, %v4119
    %v4122 = vsel %vm4120, %v4121, %v4119
    %v4123 = vclz %v4122
    %v4124 = vsub.s32 %v4123, 2
    %vm4125 = vcmp.gt.s32.totalorder 0, %v4124
    %v4126 = vsel %vm4125, 0, %v4124
    %v4127 = vsub.s32 32, %v4126
    %v4128 = vshll.u32 %v4119, %v4126
    %v4129 = vshrl.u32 %v4111, %v4127
    %v4130 = vor.u32 %v4128, %v4129
    %v4131 = vsub.s32 4294967266, %v4126
    %v4132 = vadd.s32 %v4131, 127
    %v4133 = vshll.u32 %v4132, 23
    %v4134 = vor.u32 4788187, %v4133
    %v4135 = vand.u32 2147483647, %v4134
    %v4137 = vcvt.s32.f32 %v4130
    %v4138 = vmul.f32 %v4137, %v4135
    %v4139 = vxor.u32 %v4138, 2147483648
    %v4140 = vsel %vm4057, %v4139, %v4138
    %v4141 = vsub.s32 4, %v4117
    %v4142 = vsel %vm4057, %v4141, %v4117
    %v4143 = vsel %vm4056, %v2035, %v4140
    %v4144 = vsel %vm4056, 0, %v4142
    %v4145 = vcosq.f32.pop %v4143
    %v4146 = vsinq.f32.pop %v4143
    %vm4147 = vweird.f32 %v2035
    %v4148 = vand.u32 %v4144, 3
    %vm4149 = vcmp.lt.s32.totalorder %v4148, 2
    %vm4150 = vcmp.eq.s32.totalorder %v4148, 0
    %v4151 = vxor.u32 %v4146, 2147483648
    %v4152 = vsel %vm4150, %v4145, %v4151
    %vm4153 = vcmp.eq.s32.totalorder %v4148, 2
    %v4154 = vxor.u32 %v4145, 2147483648
    %v4155 = vsel %vm4153, %v4154, %v4146
    %v4156 = vsel %vm4149, %v4152, %v4155
    %v4157 = vsel %vm4147, nan, %v4156
    %v4158 = vand.u32 2147483647, %v2040
    %vm4159 = vcmp.le.f32.partialorder %v4158, 0.7853982
    %vm4160 = vcmp.lt.s32.totalorder %v2040, 0
    %v4161 = vand.u32 %v2040, 2139095040
    %v4162 = vshrl.u32 %v4161, 23
    %v4163 = vsub.s32 %v4162, 127
    %v4164 = vand.u32 2147483647, %v2040
    %v4165 = vand.u32 %v4164, 8388607
    %v4166 = vor.u32 %v4165, 8388608
    %v4167 = vsub.s32 0, %v4166
    %v4168 = vadd.s32 %v4163, 1
    %vm4169 = vcmp.gt.s32.totalorder %v4168, 0
    %v4170 = vsel %vm4169, %v4168, 0
    %v4171 = vshrl.u32 %v4170, 5
    %v4172 = vand.u32 %v4170, 31
    %v4173 = vsub.s32 32, %v4172
    %v4174 = vshrl.u32 683565275, %v4173
    %v4175 = vshll.u32 683565275, %v4172
    %v4176 = vshrl.u32 2475754826, %v4173
    %v4177 = vor.u32 %v4175, %v4176
    %v4178 = vshll.u32 2475754826, %v4172
    %v4179 = vshrl.u32 2131351028, %v4173
    %v4180 = vor.u32 %v4178, %v4179
    %v4181 = vshll.u32 2131351028, %v4172
    %v4182 = vshrl.u32 2102212464, %v4173
    %v4183 = vor.u32 %v4181, %v4182
    %v4184 = vshll.u32 2102212464, %v4172
    %v4185 = vshrl.u32 920167782, %v4173
    %v4186 = vor.u32 %v4184, %v4185
    %v4187 = vshll.u32 920167782, %v4172
    %v4188 = vshrl.u32 1326507024, %v4173
    %v4189 = vor.u32 %v4187, %v4188
    %vm4190 = vcmp.lt.s32.totalorder %v4171, 1
    %vm4191 = vcmp.lt.s32.totalorder %v4171, 2
    %vm4192 = vcmp.lt.s32.totalorder %v4171, 3
    %vm4193 = vcmp.lt.s32.totalorder %v4171, 4
    %v4194 = vsel %vm4190, %v4174, %v4177
    %v4195 = vsel %vm4193, %v4183, 2102212464
    %v4196 = vsel %vm4192, %v4180, %v4195
    %v4197 = vsel %vm4191, %v4194, %v4196
    %v4198 = vsel %vm4190, %v4177, %v4180
    %v4199 = vsel %vm4193, %v4186, 920167782
    %v4200 = vsel %vm4192, %v4183, %v4199
    %v4201 = vsel %vm4191, %v4198, %v4200
    %v4202 = vsel %vm4190, %v4180, %v4183
    %v4203 = vsel %vm4193, %v4189, 1326507024
    %v4204 = vsel %vm4192, %v4186, %v4203
    %v4205 = vsel %vm4191, %v4202, %v4204
    %v4206 = vshll.u32 %v4166, 8
    %v4207 = vmul.u32.u64.compose %v4206, %v4205
    %v4208 = vextract.low.u32 %v4207
    %v4209 = vextract.high.u32 %v4207
    %v4210 = vmul.u32.u64.compose %v4206, %v4201
    %v4211 = vextract.low.u32 %v4210
    %v4212 = vextract.high.u32 %v4210
    %v4213 = vmul.u32 %v4206, %v4197
    %v4214 = vadd.s32 %v4209, %v4211
    %vm4215 = vc.u32 %v4209, %v4211
    %v4216 = vadd.s32 %v4212, 1
    %v4217 = vsel %vm4215, %v4216, %v4212
    %v4218 = vadd.s32 %v4213, %v4217
    %v4219 = vadd.s32 %v4218, 536870912
    %v4220 = vshrl.u32 %v4219, 30
    %v4221 = vshll.u32 %v4220, 30
    %v4222 = vsub.s32 %v4218, %v4221
    %vm4223 = vcmp.lt.s32.totalorder %v4222, 0
    %v4224 = vsub.s32 0, %v4222
    %v4225 = vsel %vm4223, %v4224, %v4222
    %v4226 = vclz %v4225
    %v4227 = vsub.s32 %v4226, 2
    %vm4228 = vcmp.gt.s32.totalorder 0, %v4227
    %v4229 = vsel %vm4228, 0, %v4227
    %v4230 = vsub.s32 32, %v4229
    %v4231 = vshll.u32 %v4222, %v4229
    %v4232 = vshrl.u32 %v4214, %v4230
    %v4233 = vor.u32 %v4231, %v4232
    %v4234 = vsub.s32 4294967266, %v4229
    %v4235 = vadd.s32 %v4234, 127
    %v4236 = vshll.u32 %v4235, 23
    %v4237 = vor.u32 4788187, %v4236
    %v4238 = vand.u32 2147483647, %v4237
    %v4240 = vcvt.s32.f32 %v4233
    %v4241 = vmul.f32 %v4240, %v4238
    %v4242 = vxor.u32 %v4241, 2147483648
    %v4243 = vsel %vm4160, %v4242, %v4241
    %v4244 = vsub.s32 4, %v4220
    %v4245 = vsel %vm4160, %v4244, %v4220
    %v4246 = vsel %vm4159, %v2040, %v4243
    %v4247 = vsel %vm4159, 0, %v4245
    %v4248 = vcosq.f32.pop %v4246
    %v4249 = vsinq.f32.pop %v4246
    %vm4250 = vweird.f32 %v2040
    %v4251 = vand.u32 %v4247, 3
    %vm4252 = vcmp.lt.s32.totalorder %v4251, 2
    %vm4253 = vcmp.eq.s32.totalorder %v4251, 0
    %v4254 = vxor.u32 %v4249, 2147483648
    %v4255 = vsel %vm4253, %v4248, %v4254
    %vm4256 = vcmp.eq.s32.totalorder %v4251, 2
    %v4257 = vxor.u32 %v4248, 2147483648
    %v4258 = vsel %vm4256, %v4257, %v4249
    %v4259 = vsel %vm4252, %v4255, %v4258
    %v4260 = vsel %vm4250, nan, %v4259
    %v4261 = vand.u32 2147483647, %v2045
    %vm4262 = vcmp.le.f32.partialorder %v4261, 0.7853982
    %vm4263 = vcmp.lt.s32.totalorder %v2045, 0
    %v4264 = vand.u32 %v2045, 2139095040
    %v4265 = vshrl.u32 %v4264, 23
    %v4266 = vsub.s32 %v4265, 127
    %v4267 = vand.u32 2147483647, %v2045
    %v4268 = vand.u32 %v4267, 8388607
    %v4269 = vor.u32 %v4268, 8388608
    %v4270 = vsub.s32 0, %v4269
    %v4271 = vadd.s32 %v4266, 1
    %vm4272 = vcmp.gt.s32.totalorder %v4271, 0
    %v4273 = vsel %vm4272, %v4271, 0
    %v4274 = vshrl.u32 %v4273, 5
    %v4275 = vand.u32 %v4273, 31
    %v4276 = vsub.s32 32, %v4275
    %v4277 = vshrl.u32 683565275, %v4276
    %v4278 = vshll.u32 683565275, %v4275
    %v4279 = vshrl.u32 2475754826, %v4276
    %v4280 = vor.u32 %v4278, %v4279
    %v4281 = vshll.u32 2475754826, %v4275
    %v4282 = vshrl.u32 2131351028, %v4276
    %v4283 = vor.u32 %v4281, %v4282
    %v4284 = vshll.u32 2131351028, %v4275
    %v4285 = vshrl.u32 2102212464, %v4276
    %v4286 = vor.u32 %v4284, %v4285
    %v4287 = vshll.u32 2102212464, %v4275
    %v4288 = vshrl.u32 920167782, %v4276
    %v4289 = vor.u32 %v4287, %v4288
    %v4290 = vshll.u32 920167782, %v4275
    %v4291 = vshrl.u32 1326507024, %v4276
    %v4292 = vor.u32 %v4290, %v4291
    %vm4293 = vcmp.lt.s32.totalorder %v4274, 1
    %vm4294 = vcmp.lt.s32.totalorder %v4274, 2
    %vm4295 = vcmp.lt.s32.totalorder %v4274, 3
    %vm4296 = vcmp.lt.s32.totalorder %v4274, 4
    %v4297 = vsel %vm4293, %v4277, %v4280
    %v4298 = vsel %vm4296, %v4286, 2102212464
    %v4299 = vsel %vm4295, %v4283, %v4298
    %v4300 = vsel %vm4294, %v4297, %v4299
    %v4301 = vsel %vm4293, %v4280, %v4283
    %v4302 = vsel %vm4296, %v4289, 920167782
    %v4303 = vsel %vm4295, %v4286, %v4302
    %v4304 = vsel %vm4294, %v4301, %v4303
    %v4305 = vsel %vm4293, %v4283, %v4286
    %v4306 = vsel %vm4296, %v4292, 1326507024
    %v4307 = vsel %vm4295, %v4289, %v4306
    %v4308 = vsel %vm4294, %v4305, %v4307
    %v4309 = vshll.u32 %v4269, 8
    %v4310 = vmul.u32.u64.compose %v4309, %v4308
    %v4311 = vextract.low.u32 %v4310
    %v4312 = vextract.high.u32 %v4310
    %v4313 = vmul.u32.u64.compose %v4309, %v4304
    %v4314 = vextract.low.u32 %v4313
    %v4315 = vextract.high.u32 %v4313
    %v4316 = vmul.u32 %v4309, %v4300
    %v4317 = vadd.s32 %v4312, %v4314
    %vm4318 = vc.u32 %v4312, %v4314
    %v4319 = vadd.s32 %v4315, 1
    %v4320 = vsel %vm4318, %v4319, %v4315
    %v4321 = vadd.s32 %v4316, %v4320
    %v4322 = vadd.s32 %v4321, 536870912
    %v4323 = vshrl.u32 %v4322, 30
    %v4324 = vshll.u32 %v4323, 30
    %v4325 = vsub.s32 %v4321, %v4324
    %vm4326 = vcmp.lt.s32.totalorder %v4325, 0
    %v4327 = vsub.s32 0, %v4325
    %v4328 = vsel %vm4326, %v4327, %v4325
    %v4329 = vclz %v4328
    %v4330 = vsub.s32 %v4329, 2
    %vm4331 = vcmp.gt.s32.totalorder 0, %v4330
    %v4332 = vsel %vm4331, 0, %v4330
    %v4333 = vsub.s32 32, %v4332
    %v4334 = vshll.u32 %v4325, %v4332
    %v4335 = vshrl.u32 %v4317, %v4333
    %v4336 = vor.u32 %v4334, %v4335
    %v4337 = vsub.s32 4294967266, %v4332
    %v4338 = vadd.s32 %v4337, 127
    %v4339 = vshll.u32 %v4338, 23
    %v4340 = vor.u32 4788187, %v4339
    %v4341 = vand.u32 2147483647, %v4340
    %v4343 = vcvt.s32.f32 %v4336
    %v4344 = vmul.f32 %v4343, %v4341
    %v4345 = vxor.u32 %v4344, 2147483648
    %v4346 = vsel %vm4263, %v4345, %v4344
    %v4347 = vsub.s32 4, %v4323
    %v4348 = vsel %vm4263, %v4347, %v4323
    %v4349 = vsel %vm4262, %v2045, %v4346
    %v4350 = vsel %vm4262, 0, %v4348
    %v4351 = vcosq.f32.pop %v4349
    %v4352 = vsinq.f32.pop %v4349
    %vm4353 = vweird.f32 %v2045
    %v4354 = vand.u32 %v4350, 3
    %vm4355 = vcmp.lt.s32.totalorder %v4354, 2
    %vm4356 = vcmp.eq.s32.totalorder %v4354, 0
    %v4357 = vxor.u32 %v4352, 2147483648
    %v4358 = vsel %vm4356, %v4351, %v4357
    %vm4359 = vcmp.eq.s32.totalorder %v4354, 2
    %v4360 = vxor.u32 %v4351, 2147483648
    %v4361 = vsel %vm4359, %v4360, %v4352
    %v4362 = vsel %vm4355, %v4358, %v4361
    %v4363 = vsel %vm4353, nan, %v4362
    %v4364 = vand.u32 2147483647, %v2050
    %vm4365 = vcmp.le.f32.partialorder %v4364, 0.7853982
    %vm4366 = vcmp.lt.s32.totalorder %v2050, 0
    %v4367 = vand.u32 %v2050, 2139095040
    %v4368 = vshrl.u32 %v4367, 23
    %v4369 = vsub.s32 %v4368, 127
    %v4370 = vand.u32 2147483647, %v2050
    %v4371 = vand.u32 %v4370, 8388607
    %v4372 = vor.u32 %v4371, 8388608
    %v4373 = vsub.s32 0, %v4372
    %v4374 = vadd.s32 %v4369, 1
    %vm4375 = vcmp.gt.s32.totalorder %v4374, 0
    %v4376 = vsel %vm4375, %v4374, 0
    %v4377 = vshrl.u32 %v4376, 5
    %v4378 = vand.u32 %v4376, 31
    %v4379 = vsub.s32 32, %v4378
    %v4380 = vshrl.u32 683565275, %v4379
    %v4381 = vshll.u32 683565275, %v4378
    %v4382 = vshrl.u32 2475754826, %v4379
    %v4383 = vor.u32 %v4381, %v4382
    %v4384 = vshll.u32 2475754826, %v4378
    %v4385 = vshrl.u32 2131351028, %v4379
    %v4386 = vor.u32 %v4384, %v4385
    %v4387 = vshll.u32 2131351028, %v4378
    %v4388 = vshrl.u32 2102212464, %v4379
    %v4389 = vor.u32 %v4387, %v4388
    %v4390 = vshll.u32 2102212464, %v4378
    %v4391 = vshrl.u32 920167782, %v4379
    %v4392 = vor.u32 %v4390, %v4391
    %v4393 = vshll.u32 920167782, %v4378
    %v4394 = vshrl.u32 1326507024, %v4379
    %v4395 = vor.u32 %v4393, %v4394
    %vm4396 = vcmp.lt.s32.totalorder %v4377, 1
    %vm4397 = vcmp.lt.s32.totalorder %v4377, 2
    %vm4398 = vcmp.lt.s32.totalorder %v4377, 3
    %vm4399 = vcmp.lt.s32.totalorder %v4377, 4
    %v4400 = vsel %vm4396, %v4380, %v4383
    %v4401 = vsel %vm4399, %v4389, 2102212464
    %v4402 = vsel %vm4398, %v4386, %v4401
    %v4403 = vsel %vm4397, %v4400, %v4402
    %v4404 = vsel %vm4396, %v4383, %v4386
    %v4405 = vsel %vm4399, %v4392, 920167782
    %v4406 = vsel %vm4398, %v4389, %v4405
    %v4407 = vsel %vm4397, %v4404, %v4406
    %v4408 = vsel %vm4396, %v4386, %v4389
    %v4409 = vsel %vm4399, %v4395, 1326507024
    %v4410 = vsel %vm4398, %v4392, %v4409
    %v4411 = vsel %vm4397, %v4408, %v4410
    %v4412 = vshll.u32 %v4372, 8
    %v4413 = vmul.u32.u64.compose %v4412, %v4411
    %v4414 = vextract.low.u32 %v4413
    %v4415 = vextract.high.u32 %v4413
    %v4416 = vmul.u32.u64.compose %v4412, %v4407
    %v4417 = vextract.low.u32 %v4416
    %v4418 = vextract.high.u32 %v4416
    %v4419 = vmul.u32 %v4412, %v4403
    %v4420 = vadd.s32 %v4415, %v4417
    %vm4421 = vc.u32 %v4415, %v4417
    %v4422 = vadd.s32 %v4418, 1
    %v4423 = vsel %vm4421, %v4422, %v4418
    %v4424 = vadd.s32 %v4419, %v4423
    %v4425 = vadd.s32 %v4424, 536870912
    %v4426 = vshrl.u32 %v4425, 30
    %v4427 = vshll.u32 %v4426, 30
    %v4428 = vsub.s32 %v4424, %v4427
    %vm4429 = vcmp.lt.s32.totalorder %v4428, 0
    %v4430 = vsub.s32 0, %v4428
    %v4431 = vsel %vm4429, %v4430, %v4428
    %v4432 = vclz %v4431
    %v4433 = vsub.s32 %v4432, 2
    %vm4434 = vcmp.gt.s32.totalorder 0, %v4433
    %v4435 = vsel %vm4434, 0, %v4433
    %v4436 = vsub.s32 32, %v4435
    %v4437 = vshll.u32 %v4428, %v4435
    %v4438 = vshrl.u32 %v4420, %v4436
    %v4439 = vor.u32 %v4437, %v4438
    %v4440 = vsub.s32 4294967266, %v4435
    %v4441 = vadd.s32 %v4440, 127
    %v4442 = vshll.u32 %v4441, 23
    %v4443 = vor.u32 4788187, %v4442
    %v4444 = vand.u32 2147483647, %v4443
    %v4446 = vcvt.s32.f32 %v4439
    %v4447 = vmul.f32 %v4446, %v4444
    %v4448 = vxor.u32 %v4447, 2147483648
    %v4449 = vsel %vm4366, %v4448, %v4447
    %v4450 = vsub.s32 4, %v4426
    %v4451 = vsel %vm4366, %v4450, %v4426
    %v4452 = vsel %vm4365, %v2050, %v4449
    %v4453 = vsel %vm4365, 0, %v4451
    %v4454 = vcosq.f32.pop %v4452
    %v4455 = vsinq.f32.pop %v4452
    %vm4456 = vweird.f32 %v2050
    %v4457 = vand.u32 %v4453, 3
    %vm4458 = vcmp.lt.s32.totalorder %v4457, 2
    %vm4459 = vcmp.eq.s32.totalorder %v4457, 0
    %v4460 = vxor.u32 %v4455, 2147483648
    %v4461 = vsel %vm4459, %v4454, %v4460
    %vm4462 = vcmp.eq.s32.totalorder %v4457, 2
    %v4463 = vxor.u32 %v4454, 2147483648
    %v4464 = vsel %vm4462, %v4463, %v4455
    %v4465 = vsel %vm4458, %v4461, %v4464
    %v4466 = vsel %vm4456, nan, %v4465
    %v4467 = vand.u32 2147483647, %v2055
    %vm4468 = vcmp.le.f32.partialorder %v4467, 0.7853982
    %vm4469 = vcmp.lt.s32.totalorder %v2055, 0
    %v4470 = vand.u32 %v2055, 2139095040
    %v4471 = vshrl.u32 %v4470, 23
    %v4472 = vsub.s32 %v4471, 127
    %v4473 = vand.u32 2147483647, %v2055
    %v4474 = vand.u32 %v4473, 8388607
    %v4475 = vor.u32 %v4474, 8388608
    %v4476 = vsub.s32 0, %v4475
    %v4477 = vadd.s32 %v4472, 1
    %vm4478 = vcmp.gt.s32.totalorder %v4477, 0
    %v4479 = vsel %vm4478, %v4477, 0
    %v4480 = vshrl.u32 %v4479, 5
    %v4481 = vand.u32 %v4479, 31
    %v4482 = vsub.s32 32, %v4481
    %v4483 = vshrl.u32 683565275, %v4482
    %v4484 = vshll.u32 683565275, %v4481
    %v4485 = vshrl.u32 2475754826, %v4482
    %v4486 = vor.u32 %v4484, %v4485
    %v4487 = vshll.u32 2475754826, %v4481
    %v4488 = vshrl.u32 2131351028, %v4482
    %v4489 = vor.u32 %v4487, %v4488
    %v4490 = vshll.u32 2131351028, %v4481
    %v4491 = vshrl.u32 2102212464, %v4482
    %v4492 = vor.u32 %v4490, %v4491
    %v4493 = vshll.u32 2102212464, %v4481
    %v4494 = vshrl.u32 920167782, %v4482
    %v4495 = vor.u32 %v4493, %v4494
    %v4496 = vshll.u32 920167782, %v4481
    %v4497 = vshrl.u32 1326507024, %v4482
    %v4498 = vor.u32 %v4496, %v4497
    %vm4499 = vcmp.lt.s32.totalorder %v4480, 1
    %vm4500 = vcmp.lt.s32.totalorder %v4480, 2
    %vm4501 = vcmp.lt.s32.totalorder %v4480, 3
    %vm4502 = vcmp.lt.s32.totalorder %v4480, 4
    %v4503 = vsel %vm4499, %v4483, %v4486
    %v4504 = vsel %vm4502, %v4492, 2102212464
    %v4505 = vsel %vm4501, %v4489, %v4504
    %v4506 = vsel %vm4500, %v4503, %v4505
    %v4507 = vsel %vm4499, %v4486, %v4489
    %v4508 = vsel %vm4502, %v4495, 920167782
    %v4509 = vsel %vm4501, %v4492, %v4508
    %v4510 = vsel %vm4500, %v4507, %v4509
    %v4511 = vsel %vm4499, %v4489, %v4492
    %v4512 = vsel %vm4502, %v4498, 1326507024
    %v4513 = vsel %vm4501, %v4495, %v4512
    %v4514 = vsel %vm4500, %v4511, %v4513
    %v4515 = vshll.u32 %v4475, 8
    %v4516 = vmul.u32.u64.compose %v4515, %v4514
    %v4517 = vextract.low.u32 %v4516
    %v4518 = vextract.high.u32 %v4516
    %v4519 = vmul.u32.u64.compose %v4515, %v4510
    %v4520 = vextract.low.u32 %v4519
    %v4521 = vextract.high.u32 %v4519
    %v4522 = vmul.u32 %v4515, %v4506
    %v4523 = vadd.s32 %v4518, %v4520
    %vm4524 = vc.u32 %v4518, %v4520
    %v4525 = vadd.s32 %v4521, 1
    %v4526 = vsel %vm4524, %v4525, %v4521
    %v4527 = vadd.s32 %v4522, %v4526
    %v4528 = vadd.s32 %v4527, 536870912
    %v4529 = vshrl.u32 %v4528, 30
    %v4530 = vshll.u32 %v4529, 30
    %v4531 = vsub.s32 %v4527, %v4530
    %vm4532 = vcmp.lt.s32.totalorder %v4531, 0
    %v4533 = vsub.s32 0, %v4531
    %v4534 = vsel %vm4532, %v4533, %v4531
    %v4535 = vclz %v4534
    %v4536 = vsub.s32 %v4535, 2
    %vm4537 = vcmp.gt.s32.totalorder 0, %v4536
    %v4538 = vsel %vm4537, 0, %v4536
    %v4539 = vsub.s32 32, %v4538
    %v4540 = vshll.u32 %v4531, %v4538
    %v4541 = vshrl.u32 %v4523, %v4539
    %v4542 = vor.u32 %v4540, %v4541
    %v4543 = vsub.s32 4294967266, %v4538
    %v4544 = vadd.s32 %v4543, 127
    %v4545 = vshll.u32 %v4544, 23
    %v4546 = vor.u32 4788187, %v4545
    %v4547 = vand.u32 2147483647, %v4546
    %v4549 = vcvt.s32.f32 %v4542
    %v4550 = vmul.f32 %v4549, %v4547
    %v4551 = vxor.u32 %v4550, 2147483648
    %v4552 = vsel %vm4469, %v4551, %v4550
    %v4553 = vsub.s32 4, %v4529
    %v4554 = vsel %vm4469, %v4553, %v4529
    %v4555 = vsel %vm4468, %v2055, %v4552
    %v4556 = vsel %vm4468, 0, %v4554
    %v4557 = vcosq.f32.pop %v4555
    %v4558 = vsinq.f32.pop %v4555
    %vm4559 = vweird.f32 %v2055
    %v4560 = vand.u32 %v4556, 3
    %vm4561 = vcmp.lt.s32.totalorder %v4560, 2
    %vm4562 = vcmp.eq.s32.totalorder %v4560, 0
    %v4563 = vxor.u32 %v4558, 2147483648
    %v4564 = vsel %vm4562, %v4557, %v4563
    %vm4565 = vcmp.eq.s32.totalorder %v4560, 2
    %v4566 = vxor.u32 %v4557, 2147483648
    %v4567 = vsel %vm4565, %v4566, %v4558
    %v4568 = vsel %vm4561, %v4564, %v4567
    %v4569 = vsel %vm4559, nan, %v4568
    %v4570 = vand.u32 2147483647, %v2060
    %vm4571 = vcmp.le.f32.partialorder %v4570, 0.7853982
    %vm4572 = vcmp.lt.s32.totalorder %v2060, 0
    %v4573 = vand.u32 %v2060, 2139095040
    %v4574 = vshrl.u32 %v4573, 23
    %v4575 = vsub.s32 %v4574, 127
    %v4576 = vand.u32 2147483647, %v2060
    %v4577 = vand.u32 %v4576, 8388607
    %v4578 = vor.u32 %v4577, 8388608
    %v4579 = vsub.s32 0, %v4578
    %v4580 = vadd.s32 %v4575, 1
    %vm4581 = vcmp.gt.s32.totalorder %v4580, 0
    %v4582 = vsel %vm4581, %v4580, 0
    %v4583 = vshrl.u32 %v4582, 5
    %v4584 = vand.u32 %v4582, 31
    %v4585 = vsub.s32 32, %v4584
    %v4586 = vshrl.u32 683565275, %v4585
    %v4587 = vshll.u32 683565275, %v4584
    %v4588 = vshrl.u32 2475754826, %v4585
    %v4589 = vor.u32 %v4587, %v4588
    %v4590 = vshll.u32 2475754826, %v4584
    %v4591 = vshrl.u32 2131351028, %v4585
    %v4592 = vor.u32 %v4590, %v4591
    %v4593 = vshll.u32 2131351028, %v4584
    %v4594 = vshrl.u32 2102212464, %v4585
    %v4595 = vor.u32 %v4593, %v4594
    %v4596 = vshll.u32 2102212464, %v4584
    %v4597 = vshrl.u32 920167782, %v4585
    %v4598 = vor.u32 %v4596, %v4597
    %v4599 = vshll.u32 920167782, %v4584
    %v4600 = vshrl.u32 1326507024, %v4585
    %v4601 = vor.u32 %v4599, %v4600
    %vm4602 = vcmp.lt.s32.totalorder %v4583, 1
    %vm4603 = vcmp.lt.s32.totalorder %v4583, 2
    %vm4604 = vcmp.lt.s32.totalorder %v4583, 3
    %vm4605 = vcmp.lt.s32.totalorder %v4583, 4
    %v4606 = vsel %vm4602, %v4586, %v4589
    %v4607 = vsel %vm4605, %v4595, 2102212464
    %v4608 = vsel %vm4604, %v4592, %v4607
    %v4609 = vsel %vm4603, %v4606, %v4608
    %v4610 = vsel %vm4602, %v4589, %v4592
    %v4611 = vsel %vm4605, %v4598, 920167782
    %v4612 = vsel %vm4604, %v4595, %v4611
    %v4613 = vsel %vm4603, %v4610, %v4612
    %v4614 = vsel %vm4602, %v4592, %v4595
    %v4615 = vsel %vm4605, %v4601, 1326507024
    %v4616 = vsel %vm4604, %v4598, %v4615
    %v4617 = vsel %vm4603, %v4614, %v4616
    %v4618 = vshll.u32 %v4578, 8
    %v4619 = vmul.u32.u64.compose %v4618, %v4617
    %v4620 = vextract.low.u32 %v4619
    %v4621 = vextract.high.u32 %v4619
    %v4622 = vmul.u32.u64.compose %v4618, %v4613
    %v4623 = vextract.low.u32 %v4622
    %v4624 = vextract.high.u32 %v4622
    %v4625 = vmul.u32 %v4618, %v4609
    %v4626 = vadd.s32 %v4621, %v4623
    %vm4627 = vc.u32 %v4621, %v4623
    %v4628 = vadd.s32 %v4624, 1
    %v4629 = vsel %vm4627, %v4628, %v4624
    %v4630 = vadd.s32 %v4625, %v4629
    %v4631 = vadd.s32 %v4630, 536870912
    %v4632 = vshrl.u32 %v4631, 30
    %v4633 = vshll.u32 %v4632, 30
    %v4634 = vsub.s32 %v4630, %v4633
    %vm4635 = vcmp.lt.s32.totalorder %v4634, 0
    %v4636 = vsub.s32 0, %v4634
    %v4637 = vsel %vm4635, %v4636, %v4634
    %v4638 = vclz %v4637
    %v4639 = vsub.s32 %v4638, 2
    %vm4640 = vcmp.gt.s32.totalorder 0, %v4639
    %v4641 = vsel %vm4640, 0, %v4639
    %v4642 = vsub.s32 32, %v4641
    %v4643 = vshll.u32 %v4634, %v4641
    %v4644 = vshrl.u32 %v4626, %v4642
    %v4645 = vor.u32 %v4643, %v4644
    %v4646 = vsub.s32 4294967266, %v4641
    %v4647 = vadd.s32 %v4646, 127
    %v4648 = vshll.u32 %v4647, 23
    %v4649 = vor.u32 4788187, %v4648
    %v4650 = vand.u32 2147483647, %v4649
    %v4652 = vcvt.s32.f32 %v4645
    %v4653 = vmul.f32 %v4652, %v4650
    %v4654 = vxor.u32 %v4653, 2147483648
    %v4655 = vsel %vm4572, %v4654, %v4653
    %v4656 = vsub.s32 4, %v4632
    %v4657 = vsel %vm4572, %v4656, %v4632
    %v4658 = vsel %vm4571, %v2060, %v4655
    %v4659 = vsel %vm4571, 0, %v4657
    %v4660 = vcosq.f32.pop %v4658
    %v4661 = vsinq.f32.pop %v4658
    %vm4662 = vweird.f32 %v2060
    %v4663 = vand.u32 %v4659, 3
    %vm4664 = vcmp.lt.s32.totalorder %v4663, 2
    %vm4665 = vcmp.eq.s32.totalorder %v4663, 0
    %v4666 = vxor.u32 %v4661, 2147483648
    %v4667 = vsel %vm4665, %v4660, %v4666
    %vm4668 = vcmp.eq.s32.totalorder %v4663, 2
    %v4669 = vxor.u32 %v4660, 2147483648
    %v4670 = vsel %vm4668, %v4669, %v4661
    %v4671 = vsel %vm4664, %v4667, %v4670
    %v4672 = vsel %vm4662, nan, %v4671
    %v4673 = vand.u32 2147483647, %v2065
    %vm4674 = vcmp.le.f32.partialorder %v4673, 0.7853982
    %vm4675 = vcmp.lt.s32.totalorder %v2065, 0
    %v4676 = vand.u32 %v2065, 2139095040
    %v4677 = vshrl.u32 %v4676, 23
    %v4678 = vsub.s32 %v4677, 127
    %v4679 = vand.u32 2147483647, %v2065
    %v4680 = vand.u32 %v4679, 8388607
    %v4681 = vor.u32 %v4680, 8388608
    %v4682 = vsub.s32 0, %v4681
    %v4683 = vadd.s32 %v4678, 1
    %vm4684 = vcmp.gt.s32.totalorder %v4683, 0
    %v4685 = vsel %vm4684, %v4683, 0
    %v4686 = vshrl.u32 %v4685, 5
    %v4687 = vand.u32 %v4685, 31
    %v4688 = vsub.s32 32, %v4687
    %v4689 = vshrl.u32 683565275, %v4688
    %v4690 = vshll.u32 683565275, %v4687
    %v4691 = vshrl.u32 2475754826, %v4688
    %v4692 = vor.u32 %v4690, %v4691
    %v4693 = vshll.u32 2475754826, %v4687
    %v4694 = vshrl.u32 2131351028, %v4688
    %v4695 = vor.u32 %v4693, %v4694
    %v4696 = vshll.u32 2131351028, %v4687
    %v4697 = vshrl.u32 2102212464, %v4688
    %v4698 = vor.u32 %v4696, %v4697
    %v4699 = vshll.u32 2102212464, %v4687
    %v4700 = vshrl.u32 920167782, %v4688
    %v4701 = vor.u32 %v4699, %v4700
    %v4702 = vshll.u32 920167782, %v4687
    %v4703 = vshrl.u32 1326507024, %v4688
    %v4704 = vor.u32 %v4702, %v4703
    %vm4705 = vcmp.lt.s32.totalorder %v4686, 1
    %vm4706 = vcmp.lt.s32.totalorder %v4686, 2
    %vm4707 = vcmp.lt.s32.totalorder %v4686, 3
    %vm4708 = vcmp.lt.s32.totalorder %v4686, 4
    %v4709 = vsel %vm4705, %v4689, %v4692
    %v4710 = vsel %vm4708, %v4698, 2102212464
    %v4711 = vsel %vm4707, %v4695, %v4710
    %v4712 = vsel %vm4706, %v4709, %v4711
    %v4713 = vsel %vm4705, %v4692, %v4695
    %v4714 = vsel %vm4708, %v4701, 920167782
    %v4715 = vsel %vm4707, %v4698, %v4714
    %v4716 = vsel %vm4706, %v4713, %v4715
    %v4717 = vsel %vm4705, %v4695, %v4698
    %v4718 = vsel %vm4708, %v4704, 1326507024
    %v4719 = vsel %vm4707, %v4701, %v4718
    %v4720 = vsel %vm4706, %v4717, %v4719
    %v4721 = vshll.u32 %v4681, 8
    %v4722 = vmul.u32.u64.compose %v4721, %v4720
    %v4723 = vextract.low.u32 %v4722
    %v4724 = vextract.high.u32 %v4722
    %v4725 = vmul.u32.u64.compose %v4721, %v4716
    %v4726 = vextract.low.u32 %v4725
    %v4727 = vextract.high.u32 %v4725
    %v4728 = vmul.u32 %v4721, %v4712
    %v4729 = vadd.s32 %v4724, %v4726
    %vm4730 = vc.u32 %v4724, %v4726
    %v4731 = vadd.s32 %v4727, 1
    %v4732 = vsel %vm4730, %v4731, %v4727
    %v4733 = vadd.s32 %v4728, %v4732
    %v4734 = vadd.s32 %v4733, 536870912
    %v4735 = vshrl.u32 %v4734, 30
    %v4736 = vshll.u32 %v4735, 30
    %v4737 = vsub.s32 %v4733, %v4736
    %vm4738 = vcmp.lt.s32.totalorder %v4737, 0
    %v4739 = vsub.s32 0, %v4737
    %v4740 = vsel %vm4738, %v4739, %v4737
    %v4741 = vclz %v4740
    %v4742 = vsub.s32 %v4741, 2
    %vm4743 = vcmp.gt.s32.totalorder 0, %v4742
    %v4744 = vsel %vm4743, 0, %v4742
    %v4745 = vsub.s32 32, %v4744
    %v4746 = vshll.u32 %v4737, %v4744
    %v4747 = vshrl.u32 %v4729, %v4745
    %v4748 = vor.u32 %v4746, %v4747
    %v4749 = vsub.s32 4294967266, %v4744
    %v4750 = vadd.s32 %v4749, 127
    %v4751 = vshll.u32 %v4750, 23
    %v4752 = vor.u32 4788187, %v4751
    %v4753 = vand.u32 2147483647, %v4752
    %v4755 = vcvt.s32.f32 %v4748
    %v4756 = vmul.f32 %v4755, %v4753
    %v4757 = vxor.u32 %v4756, 2147483648
    %v4758 = vsel %vm4675, %v4757, %v4756
    %v4759 = vsub.s32 4, %v4735
    %v4760 = vsel %vm4675, %v4759, %v4735
    %v4761 = vsel %vm4674, %v2065, %v4758
    %v4762 = vsel %vm4674, 0, %v4760
    %v4763 = vcosq.f32.pop %v4761
    %v4764 = vsinq.f32.pop %v4761
    %vm4765 = vweird.f32 %v2065
    %v4766 = vand.u32 %v4762, 3
    %vm4767 = vcmp.lt.s32.totalorder %v4766, 2
    %vm4768 = vcmp.eq.s32.totalorder %v4766, 0
    %v4769 = vxor.u32 %v4764, 2147483648
    %v4770 = vsel %vm4768, %v4763, %v4769
    %vm4771 = vcmp.eq.s32.totalorder %v4766, 2
    %v4772 = vxor.u32 %v4763, 2147483648
    %v4773 = vsel %vm4771, %v4772, %v4764
    %v4774 = vsel %vm4767, %v4770, %v4773
    %v4775 = vsel %vm4765, nan, %v4774
    %v4776 = vand.u32 2147483647, %v2070
    %vm4777 = vcmp.le.f32.partialorder %v4776, 0.7853982
    %vm4778 = vcmp.lt.s32.totalorder %v2070, 0
    %v4779 = vand.u32 %v2070, 2139095040
    %v4780 = vshrl.u32 %v4779, 23
    %v4781 = vsub.s32 %v4780, 127
    %v4782 = vand.u32 2147483647, %v2070
    %v4783 = vand.u32 %v4782, 8388607
    %v4784 = vor.u32 %v4783, 8388608
    %v4785 = vsub.s32 0, %v4784
    %v4786 = vadd.s32 %v4781, 1
    %vm4787 = vcmp.gt.s32.totalorder %v4786, 0
    %v4788 = vsel %vm4787, %v4786, 0
    %v4789 = vshrl.u32 %v4788, 5
    %v4790 = vand.u32 %v4788, 31
    %v4791 = vsub.s32 32, %v4790
    %v4792 = vshrl.u32 683565275, %v4791
    %v4793 = vshll.u32 683565275, %v4790
    %v4794 = vshrl.u32 2475754826, %v4791
    %v4795 = vor.u32 %v4793, %v4794
    %v4796 = vshll.u32 2475754826, %v4790
    %v4797 = vshrl.u32 2131351028, %v4791
    %v4798 = vor.u32 %v4796, %v4797
    %v4799 = vshll.u32 2131351028, %v4790
    %v4800 = vshrl.u32 2102212464, %v4791
    %v4801 = vor.u32 %v4799, %v4800
    %v4802 = vshll.u32 2102212464, %v4790
    %v4803 = vshrl.u32 920167782, %v4791
    %v4804 = vor.u32 %v4802, %v4803
    %v4805 = vshll.u32 920167782, %v4790
    %v4806 = vshrl.u32 1326507024, %v4791
    %v4807 = vor.u32 %v4805, %v4806
    %vm4808 = vcmp.lt.s32.totalorder %v4789, 1
    %vm4809 = vcmp.lt.s32.totalorder %v4789, 2
    %vm4810 = vcmp.lt.s32.totalorder %v4789, 3
    %vm4811 = vcmp.lt.s32.totalorder %v4789, 4
    %v4812 = vsel %vm4808, %v4792, %v4795
    %v4813 = vsel %vm4811, %v4801, 2102212464
    %v4814 = vsel %vm4810, %v4798, %v4813
    %v4815 = vsel %vm4809, %v4812, %v4814
    %v4816 = vsel %vm4808, %v4795, %v4798
    %v4817 = vsel %vm4811, %v4804, 920167782
    %v4818 = vsel %vm4810, %v4801, %v4817
    %v4819 = vsel %vm4809, %v4816, %v4818
    %v4820 = vsel %vm4808, %v4798, %v4801
    %v4821 = vsel %vm4811, %v4807, 1326507024
    %v4822 = vsel %vm4810, %v4804, %v4821
    %v4823 = vsel %vm4809, %v4820, %v4822
    %v4824 = vshll.u32 %v4784, 8
    %v4825 = vmul.u32.u64.compose %v4824, %v4823
    %v4826 = vextract.low.u32 %v4825
    %v4827 = vextract.high.u32 %v4825
    %v4828 = vmul.u32.u64.compose %v4824, %v4819
    %v4829 = vextract.low.u32 %v4828
    %v4830 = vextract.high.u32 %v4828
    %v4831 = vmul.u32 %v4824, %v4815
    %v4832 = vadd.s32 %v4827, %v4829
    %vm4833 = vc.u32 %v4827, %v4829
    %v4834 = vadd.s32 %v4830, 1
    %v4835 = vsel %vm4833, %v4834, %v4830
    %v4836 = vadd.s32 %v4831, %v4835
    %v4837 = vadd.s32 %v4836, 536870912
    %v4838 = vshrl.u32 %v4837, 30
    %v4839 = vshll.u32 %v4838, 30
    %v4840 = vsub.s32 %v4836, %v4839
    %vm4841 = vcmp.lt.s32.totalorder %v4840, 0
    %v4842 = vsub.s32 0, %v4840
    %v4843 = vsel %vm4841, %v4842, %v4840
    %v4844 = vclz %v4843
    %v4845 = vsub.s32 %v4844, 2
    %vm4846 = vcmp.gt.s32.totalorder 0, %v4845
    %v4847 = vsel %vm4846, 0, %v4845
    %v4848 = vsub.s32 32, %v4847
    %v4849 = vshll.u32 %v4840, %v4847
    %v4850 = vshrl.u32 %v4832, %v4848
    %v4851 = vor.u32 %v4849, %v4850
    %v4852 = vsub.s32 4294967266, %v4847
    %v4853 = vadd.s32 %v4852, 127
    %v4854 = vshll.u32 %v4853, 23
    %v4855 = vor.u32 4788187, %v4854
    %v4856 = vand.u32 2147483647, %v4855
    %v4858 = vcvt.s32.f32 %v4851
    %v4859 = vmul.f32 %v4858, %v4856
    %v4860 = vxor.u32 %v4859, 2147483648
    %v4861 = vsel %vm4778, %v4860, %v4859
    %v4862 = vsub.s32 4, %v4838
    %v4863 = vsel %vm4778, %v4862, %v4838
    %v4864 = vsel %vm4777, %v2070, %v4861
    %v4865 = vsel %vm4777, 0, %v4863
    %v4866 = vcosq.f32.pop %v4864
    %v4867 = vsinq.f32.pop %v4864
    %vm4868 = vweird.f32 %v2070
    %v4869 = vand.u32 %v4865, 3
    %vm4870 = vcmp.lt.s32.totalorder %v4869, 2
    %vm4871 = vcmp.eq.s32.totalorder %v4869, 0
    %v4872 = vxor.u32 %v4867, 2147483648
    %v4873 = vsel %vm4871, %v4866, %v4872
    %vm4874 = vcmp.eq.s32.totalorder %v4869, 2
    %v4875 = vxor.u32 %v4866, 2147483648
    %v4876 = vsel %vm4874, %v4875, %v4867
    %v4877 = vsel %vm4870, %v4873, %v4876
    %v4878 = vsel %vm4868, nan, %v4877
    %v4879 = vand.u32 2147483647, %v2075
    %vm4880 = vcmp.le.f32.partialorder %v4879, 0.7853982
    %vm4881 = vcmp.lt.s32.totalorder %v2075, 0
    %v4882 = vand.u32 %v2075, 2139095040
    %v4883 = vshrl.u32 %v4882, 23
    %v4884 = vsub.s32 %v4883, 127
    %v4885 = vand.u32 2147483647, %v2075
    %v4886 = vand.u32 %v4885, 8388607
    %v4887 = vor.u32 %v4886, 8388608
    %v4888 = vsub.s32 0, %v4887
    %v4889 = vadd.s32 %v4884, 1
    %vm4890 = vcmp.gt.s32.totalorder %v4889, 0
    %v4891 = vsel %vm4890, %v4889, 0
    %v4892 = vshrl.u32 %v4891, 5
    %v4893 = vand.u32 %v4891, 31
    %v4894 = vsub.s32 32, %v4893
    %v4895 = vshrl.u32 683565275, %v4894
    %v4896 = vshll.u32 683565275, %v4893
    %v4897 = vshrl.u32 2475754826, %v4894
    %v4898 = vor.u32 %v4896, %v4897
    %v4899 = vshll.u32 2475754826, %v4893
    %v4900 = vshrl.u32 2131351028, %v4894
    %v4901 = vor.u32 %v4899, %v4900
    %v4902 = vshll.u32 2131351028, %v4893
    %v4903 = vshrl.u32 2102212464, %v4894
    %v4904 = vor.u32 %v4902, %v4903
    %v4905 = vshll.u32 2102212464, %v4893
    %v4906 = vshrl.u32 920167782, %v4894
    %v4907 = vor.u32 %v4905, %v4906
    %v4908 = vshll.u32 920167782, %v4893
    %v4909 = vshrl.u32 1326507024, %v4894
    %v4910 = vor.u32 %v4908, %v4909
    %vm4911 = vcmp.lt.s32.totalorder %v4892, 1
    %vm4912 = vcmp.lt.s32.totalorder %v4892, 2
    %vm4913 = vcmp.lt.s32.totalorder %v4892, 3
    %vm4914 = vcmp.lt.s32.totalorder %v4892, 4
    %v4915 = vsel %vm4911, %v4895, %v4898
    %v4916 = vsel %vm4914, %v4904, 2102212464
    %v4917 = vsel %vm4913, %v4901, %v4916
    %v4918 = vsel %vm4912, %v4915, %v4917
    %v4919 = vsel %vm4911, %v4898, %v4901
    %v4920 = vsel %vm4914, %v4907, 920167782
    %v4921 = vsel %vm4913, %v4904, %v4920
    %v4922 = vsel %vm4912, %v4919, %v4921
    %v4923 = vsel %vm4911, %v4901, %v4904
    %v4924 = vsel %vm4914, %v4910, 1326507024
    %v4925 = vsel %vm4913, %v4907, %v4924
    %v4926 = vsel %vm4912, %v4923, %v4925
    %v4927 = vshll.u32 %v4887, 8
    %v4928 = vmul.u32.u64.compose %v4927, %v4926
    %v4929 = vextract.low.u32 %v4928
    %v4930 = vextract.high.u32 %v4928
    %v4931 = vmul.u32.u64.compose %v4927, %v4922
    %v4932 = vextract.low.u32 %v4931
    %v4933 = vextract.high.u32 %v4931
    %v4934 = vmul.u32 %v4927, %v4918
    %v4935 = vadd.s32 %v4930, %v4932
    %vm4936 = vc.u32 %v4930, %v4932
    %v4937 = vadd.s32 %v4933, 1
    %v4938 = vsel %vm4936, %v4937, %v4933
    %v4939 = vadd.s32 %v4934, %v4938
    %v4940 = vadd.s32 %v4939, 536870912
    %v4941 = vshrl.u32 %v4940, 30
    %v4942 = vshll.u32 %v4941, 30
    %v4943 = vsub.s32 %v4939, %v4942
    %vm4944 = vcmp.lt.s32.totalorder %v4943, 0
    %v4945 = vsub.s32 0, %v4943
    %v4946 = vsel %vm4944, %v4945, %v4943
    %v4947 = vclz %v4946
    %v4948 = vsub.s32 %v4947, 2
    %vm4949 = vcmp.gt.s32.totalorder 0, %v4948
    %v4950 = vsel %vm4949, 0, %v4948
    %v4951 = vsub.s32 32, %v4950
    %v4952 = vshll.u32 %v4943, %v4950
    %v4953 = vshrl.u32 %v4935, %v4951
    %v4954 = vor.u32 %v4952, %v4953
    %v4955 = vsub.s32 4294967266, %v4950
    %v4956 = vadd.s32 %v4955, 127
    %v4957 = vshll.u32 %v4956, 23
    %v4958 = vor.u32 4788187, %v4957
    %v4959 = vand.u32 2147483647, %v4958
    %v4961 = vcvt.s32.f32 %v4954
    %v4962 = vmul.f32 %v4961, %v4959
    %v4963 = vxor.u32 %v4962, 2147483648
    %v4964 = vsel %vm4881, %v4963, %v4962
    %v4965 = vsub.s32 4, %v4941
    %v4966 = vsel %vm4881, %v4965, %v4941
    %v4967 = vsel %vm4880, %v2075, %v4964
    %v4968 = vsel %vm4880, 0, %v4966
    %v4969 = vcosq.f32.pop %v4967
    %v4970 = vsinq.f32.pop %v4967
    %vm4971 = vweird.f32 %v2075
    %v4972 = vand.u32 %v4968, 3
    %vm4973 = vcmp.lt.s32.totalorder %v4972, 2
    %vm4974 = vcmp.eq.s32.totalorder %v4972, 0
    %v4975 = vxor.u32 %v4970, 2147483648
    %v4976 = vsel %vm4974, %v4969, %v4975
    %vm4977 = vcmp.eq.s32.totalorder %v4972, 2
    %v4978 = vxor.u32 %v4969, 2147483648
    %v4979 = vsel %vm4977, %v4978, %v4970
    %v4980 = vsel %vm4973, %v4976, %v4979
    %v4981 = vsel %vm4971, nan, %v4980
    %v4982 = vand.u32 2147483647, %v2080
    %vm4983 = vcmp.le.f32.partialorder %v4982, 0.7853982
    %vm4984 = vcmp.lt.s32.totalorder %v2080, 0
    %v4985 = vand.u32 %v2080, 2139095040
    %v4986 = vshrl.u32 %v4985, 23
    %v4987 = vsub.s32 %v4986, 127
    %v4988 = vand.u32 2147483647, %v2080
    %v4989 = vand.u32 %v4988, 8388607
    %v4990 = vor.u32 %v4989, 8388608
    %v4991 = vsub.s32 0, %v4990
    %v4992 = vadd.s32 %v4987, 1
    %vm4993 = vcmp.gt.s32.totalorder %v4992, 0
    %v4994 = vsel %vm4993, %v4992, 0
    %v4995 = vshrl.u32 %v4994, 5
    %v4996 = vand.u32 %v4994, 31
    %v4997 = vsub.s32 32, %v4996
    %v4998 = vshrl.u32 683565275, %v4997
    %v4999 = vshll.u32 683565275, %v4996
    %v5000 = vshrl.u32 2475754826, %v4997
    %v5001 = vor.u32 %v4999, %v5000
    %v5002 = vshll.u32 2475754826, %v4996
    %v5003 = vshrl.u32 2131351028, %v4997
    %v5004 = vor.u32 %v5002, %v5003
    %v5005 = vshll.u32 2131351028, %v4996
    %v5006 = vshrl.u32 2102212464, %v4997
    %v5007 = vor.u32 %v5005, %v5006
    %v5008 = vshll.u32 2102212464, %v4996
    %v5009 = vshrl.u32 920167782, %v4997
    %v5010 = vor.u32 %v5008, %v5009
    %v5011 = vshll.u32 920167782, %v4996
    %v5012 = vshrl.u32 1326507024, %v4997
    %v5013 = vor.u32 %v5011, %v5012
    %vm5014 = vcmp.lt.s32.totalorder %v4995, 1
    %vm5015 = vcmp.lt.s32.totalorder %v4995, 2
    %vm5016 = vcmp.lt.s32.totalorder %v4995, 3
    %vm5017 = vcmp.lt.s32.totalorder %v4995, 4
    %v5018 = vsel %vm5014, %v4998, %v5001
    %v5019 = vsel %vm5017, %v5007, 2102212464
    %v5020 = vsel %vm5016, %v5004, %v5019
    %v5021 = vsel %vm5015, %v5018, %v5020
    %v5022 = vsel %vm5014, %v5001, %v5004
    %v5023 = vsel %vm5017, %v5010, 920167782
    %v5024 = vsel %vm5016, %v5007, %v5023
    %v5025 = vsel %vm5015, %v5022, %v5024
    %v5026 = vsel %vm5014, %v5004, %v5007
    %v5027 = vsel %vm5017, %v5013, 1326507024
    %v5028 = vsel %vm5016, %v5010, %v5027
    %v5029 = vsel %vm5015, %v5026, %v5028
    %v5030 = vshll.u32 %v4990, 8
    %v5031 = vmul.u32.u64.compose %v5030, %v5029
    %v5032 = vextract.low.u32 %v5031
    %v5033 = vextract.high.u32 %v5031
    %v5034 = vmul.u32.u64.compose %v5030, %v5025
    %v5035 = vextract.low.u32 %v5034
    %v5036 = vextract.high.u32 %v5034
    %v5037 = vmul.u32 %v5030, %v5021
    %v5038 = vadd.s32 %v5033, %v5035
    %vm5039 = vc.u32 %v5033, %v5035
    %v5040 = vadd.s32 %v5036, 1
    %v5041 = vsel %vm5039, %v5040, %v5036
    %v5042 = vadd.s32 %v5037, %v5041
    %v5043 = vadd.s32 %v5042, 536870912
    %v5044 = vshrl.u32 %v5043, 30
    %v5045 = vshll.u32 %v5044, 30
    %v5046 = vsub.s32 %v5042, %v5045
    %vm5047 = vcmp.lt.s32.totalorder %v5046, 0
    %v5048 = vsub.s32 0, %v5046
    %v5049 = vsel %vm5047, %v5048, %v5046
    %v5050 = vclz %v5049
    %v5051 = vsub.s32 %v5050, 2
    %vm5052 = vcmp.gt.s32.totalorder 0, %v5051
    %v5053 = vsel %vm5052, 0, %v5051
    %v5054 = vsub.s32 32, %v5053
    %v5055 = vshll.u32 %v5046, %v5053
    %v5056 = vshrl.u32 %v5038, %v5054
    %v5057 = vor.u32 %v5055, %v5056
    %v5058 = vsub.s32 4294967266, %v5053
    %v5059 = vadd.s32 %v5058, 127
    %v5060 = vshll.u32 %v5059, 23
    %v5061 = vor.u32 4788187, %v5060
    %v5062 = vand.u32 2147483647, %v5061
    %v5064 = vcvt.s32.f32 %v5057
    %v5065 = vmul.f32 %v5064, %v5062
    %v5066 = vxor.u32 %v5065, 2147483648
    %v5067 = vsel %vm4984, %v5066, %v5065
    %v5068 = vsub.s32 4, %v5044
    %v5069 = vsel %vm4984, %v5068, %v5044
    %v5070 = vsel %vm4983, %v2080, %v5067
    %v5071 = vsel %vm4983, 0, %v5069
    %v5072 = vcosq.f32.pop %v5070
    %v5073 = vsinq.f32.pop %v5070
    %vm5074 = vweird.f32 %v2080
    %v5075 = vand.u32 %v5071, 3
    %vm5076 = vcmp.lt.s32.totalorder %v5075, 2
    %vm5077 = vcmp.eq.s32.totalorder %v5075, 0
    %v5078 = vxor.u32 %v5073, 2147483648
    %v5079 = vsel %vm5077, %v5072, %v5078
    %vm5080 = vcmp.eq.s32.totalorder %v5075, 2
    %v5081 = vxor.u32 %v5072, 2147483648
    %v5082 = vsel %vm5080, %v5081, %v5073
    %v5083 = vsel %vm5076, %v5079, %v5082
    %v5084 = vsel %vm5074, nan, %v5083
    %v5085 = vand.u32 2147483647, %v2085
    %vm5086 = vcmp.le.f32.partialorder %v5085, 0.7853982
    %vm5087 = vcmp.lt.s32.totalorder %v2085, 0
    %v5088 = vand.u32 %v2085, 2139095040
    %v5089 = vshrl.u32 %v5088, 23
    %v5090 = vsub.s32 %v5089, 127
    %v5091 = vand.u32 2147483647, %v2085
    %v5092 = vand.u32 %v5091, 8388607
    %v5093 = vor.u32 %v5092, 8388608
    %v5094 = vsub.s32 0, %v5093
    %v5095 = vadd.s32 %v5090, 1
    %vm5096 = vcmp.gt.s32.totalorder %v5095, 0
    %v5097 = vsel %vm5096, %v5095, 0
    %v5098 = vshrl.u32 %v5097, 5
    %v5099 = vand.u32 %v5097, 31
    %v5100 = vsub.s32 32, %v5099
    %v5101 = vshrl.u32 683565275, %v5100
    %v5102 = vshll.u32 683565275, %v5099
    %v5103 = vshrl.u32 2475754826, %v5100
    %v5104 = vor.u32 %v5102, %v5103
    %v5105 = vshll.u32 2475754826, %v5099
    %v5106 = vshrl.u32 2131351028, %v5100
    %v5107 = vor.u32 %v5105, %v5106
    %v5108 = vshll.u32 2131351028, %v5099
    %v5109 = vshrl.u32 2102212464, %v5100
    %v5110 = vor.u32 %v5108, %v5109
    %v5111 = vshll.u32 2102212464, %v5099
    %v5112 = vshrl.u32 920167782, %v5100
    %v5113 = vor.u32 %v5111, %v5112
    %v5114 = vshll.u32 920167782, %v5099
    %v5115 = vshrl.u32 1326507024, %v5100
    %v5116 = vor.u32 %v5114, %v5115
    %vm5117 = vcmp.lt.s32.totalorder %v5098, 1
    %vm5118 = vcmp.lt.s32.totalorder %v5098, 2
    %vm5119 = vcmp.lt.s32.totalorder %v5098, 3
    %vm5120 = vcmp.lt.s32.totalorder %v5098, 4
    %v5121 = vsel %vm5117, %v5101, %v5104
    %v5122 = vsel %vm5120, %v5110, 2102212464
    %v5123 = vsel %vm5119, %v5107, %v5122
    %v5124 = vsel %vm5118, %v5121, %v5123
    %v5125 = vsel %vm5117, %v5104, %v5107
    %v5126 = vsel %vm5120, %v5113, 920167782
    %v5127 = vsel %vm5119, %v5110, %v5126
    %v5128 = vsel %vm5118, %v5125, %v5127
    %v5129 = vsel %vm5117, %v5107, %v5110
    %v5130 = vsel %vm5120, %v5116, 1326507024
    %v5131 = vsel %vm5119, %v5113, %v5130
    %v5132 = vsel %vm5118, %v5129, %v5131
    %v5133 = vshll.u32 %v5093, 8
    %v5134 = vmul.u32.u64.compose %v5133, %v5132
    %v5135 = vextract.low.u32 %v5134
    %v5136 = vextract.high.u32 %v5134
    %v5137 = vmul.u32.u64.compose %v5133, %v5128
    %v5138 = vextract.low.u32 %v5137
    %v5139 = vextract.high.u32 %v5137
    %v5140 = vmul.u32 %v5133, %v5124
    %v5141 = vadd.s32 %v5136, %v5138
    %vm5142 = vc.u32 %v5136, %v5138
    %v5143 = vadd.s32 %v5139, 1
    %v5144 = vsel %vm5142, %v5143, %v5139
    %v5145 = vadd.s32 %v5140, %v5144
    %v5146 = vadd.s32 %v5145, 536870912
    %v5147 = vshrl.u32 %v5146, 30
    %v5148 = vshll.u32 %v5147, 30
    %v5149 = vsub.s32 %v5145, %v5148
    %vm5150 = vcmp.lt.s32.totalorder %v5149, 0
    %v5151 = vsub.s32 0, %v5149
    %v5152 = vsel %vm5150, %v5151, %v5149
    %v5153 = vclz %v5152
    %v5154 = vsub.s32 %v5153, 2
    %vm5155 = vcmp.gt.s32.totalorder 0, %v5154
    %v5156 = vsel %vm5155, 0, %v5154
    %v5157 = vsub.s32 32, %v5156
    %v5158 = vshll.u32 %v5149, %v5156
    %v5159 = vshrl.u32 %v5141, %v5157
    %v5160 = vor.u32 %v5158, %v5159
    %v5161 = vsub.s32 4294967266, %v5156
    %v5162 = vadd.s32 %v5161, 127
    %v5163 = vshll.u32 %v5162, 23
    %v5164 = vor.u32 4788187, %v5163
    %v5165 = vand.u32 2147483647, %v5164
    %v5167 = vcvt.s32.f32 %v5160
    %v5168 = vmul.f32 %v5167, %v5165
    %v5169 = vxor.u32 %v5168, 2147483648
    %v5170 = vsel %vm5087, %v5169, %v5168
    %v5171 = vsub.s32 4, %v5147
    %v5172 = vsel %vm5087, %v5171, %v5147
    %v5173 = vsel %vm5086, %v2085, %v5170
    %v5174 = vsel %vm5086, 0, %v5172
    %v5175 = vcosq.f32.pop %v5173
    %v5176 = vsinq.f32.pop %v5173
    %vm5177 = vweird.f32 %v2085
    %v5178 = vand.u32 %v5174, 3
    %vm5179 = vcmp.lt.s32.totalorder %v5178, 2
    %vm5180 = vcmp.eq.s32.totalorder %v5178, 0
    %v5181 = vxor.u32 %v5176, 2147483648
    %v5182 = vsel %vm5180, %v5175, %v5181
    %vm5183 = vcmp.eq.s32.totalorder %v5178, 2
    %v5184 = vxor.u32 %v5175, 2147483648
    %v5185 = vsel %vm5183, %v5184, %v5176
    %v5186 = vsel %vm5179, %v5182, %v5185
    %v5187 = vsel %vm5177, nan, %v5186
    %v5188 = vand.u32 2147483647, %v2090
    %vm5189 = vcmp.le.f32.partialorder %v5188, 0.7853982
    %vm5190 = vcmp.lt.s32.totalorder %v2090, 0
    %v5191 = vand.u32 %v2090, 2139095040
    %v5192 = vshrl.u32 %v5191, 23
    %v5193 = vsub.s32 %v5192, 127
    %v5194 = vand.u32 2147483647, %v2090
    %v5195 = vand.u32 %v5194, 8388607
    %v5196 = vor.u32 %v5195, 8388608
    %v5197 = vsub.s32 0, %v5196
    %v5198 = vadd.s32 %v5193, 1
    %vm5199 = vcmp.gt.s32.totalorder %v5198, 0
    %v5200 = vsel %vm5199, %v5198, 0
    %v5201 = vshrl.u32 %v5200, 5
    %v5202 = vand.u32 %v5200, 31
    %v5203 = vsub.s32 32, %v5202
    %v5204 = vshrl.u32 683565275, %v5203
    %v5205 = vshll.u32 683565275, %v5202
    %v5206 = vshrl.u32 2475754826, %v5203
    %v5207 = vor.u32 %v5205, %v5206
    %v5208 = vshll.u32 2475754826, %v5202
    %v5209 = vshrl.u32 2131351028, %v5203
    %v5210 = vor.u32 %v5208, %v5209
    %v5211 = vshll.u32 2131351028, %v5202
    %v5212 = vshrl.u32 2102212464, %v5203
    %v5213 = vor.u32 %v5211, %v5212
    %v5214 = vshll.u32 2102212464, %v5202
    %v5215 = vshrl.u32 920167782, %v5203
    %v5216 = vor.u32 %v5214, %v5215
    %v5217 = vshll.u32 920167782, %v5202
    %v5218 = vshrl.u32 1326507024, %v5203
    %v5219 = vor.u32 %v5217, %v5218
    %vm5220 = vcmp.lt.s32.totalorder %v5201, 1
    %vm5221 = vcmp.lt.s32.totalorder %v5201, 2
    %vm5222 = vcmp.lt.s32.totalorder %v5201, 3
    %vm5223 = vcmp.lt.s32.totalorder %v5201, 4
    %v5224 = vsel %vm5220, %v5204, %v5207
    %v5225 = vsel %vm5223, %v5213, 2102212464
    %v5226 = vsel %vm5222, %v5210, %v5225
    %v5227 = vsel %vm5221, %v5224, %v5226
    %v5228 = vsel %vm5220, %v5207, %v5210
    %v5229 = vsel %vm5223, %v5216, 920167782
    %v5230 = vsel %vm5222, %v5213, %v5229
    %v5231 = vsel %vm5221, %v5228, %v5230
    %v5232 = vsel %vm5220, %v5210, %v5213
    %v5233 = vsel %vm5223, %v5219, 1326507024
    %v5234 = vsel %vm5222, %v5216, %v5233
    %v5235 = vsel %vm5221, %v5232, %v5234
    %v5236 = vshll.u32 %v5196, 8
    %v5237 = vmul.u32.u64.compose %v5236, %v5235
    %v5238 = vextract.low.u32 %v5237
    %v5239 = vextract.high.u32 %v5237
    %v5240 = vmul.u32.u64.compose %v5236, %v5231
    %v5241 = vextract.low.u32 %v5240
    %v5242 = vextract.high.u32 %v5240
    %v5243 = vmul.u32 %v5236, %v5227
    %v5244 = vadd.s32 %v5239, %v5241
    %vm5245 = vc.u32 %v5239, %v5241
    %v5246 = vadd.s32 %v5242, 1
    %v5247 = vsel %vm5245, %v5246, %v5242
    %v5248 = vadd.s32 %v5243, %v5247
    %v5249 = vadd.s32 %v5248, 536870912
    %v5250 = vshrl.u32 %v5249, 30
    %v5251 = vshll.u32 %v5250, 30
    %v5252 = vsub.s32 %v5248, %v5251
    %vm5253 = vcmp.lt.s32.totalorder %v5252, 0
    %v5254 = vsub.s32 0, %v5252
    %v5255 = vsel %vm5253, %v5254, %v5252
    %v5256 = vclz %v5255
    %v5257 = vsub.s32 %v5256, 2
    %vm5258 = vcmp.gt.s32.totalorder 0, %v5257
    %v5259 = vsel %vm5258, 0, %v5257
    %v5260 = vsub.s32 32, %v5259
    %v5261 = vshll.u32 %v5252, %v5259
    %v5262 = vshrl.u32 %v5244, %v5260
    %v5263 = vor.u32 %v5261, %v5262
    %v5264 = vsub.s32 4294967266, %v5259
    %v5265 = vadd.s32 %v5264, 127
    %v5266 = vshll.u32 %v5265, 23
    %v5267 = vor.u32 4788187, %v5266
    %v5268 = vand.u32 2147483647, %v5267
    %v5270 = vcvt.s32.f32 %v5263
    %v5271 = vmul.f32 %v5270, %v5268
    %v5272 = vxor.u32 %v5271, 2147483648
    %v5273 = vsel %vm5190, %v5272, %v5271
    %v5274 = vsub.s32 4, %v5250
    %v5275 = vsel %vm5190, %v5274, %v5250
    %v5276 = vsel %vm5189, %v2090, %v5273
    %v5277 = vsel %vm5189, 0, %v5275
    %v5278 = vcosq.f32.pop %v5276
    %v5279 = vsinq.f32.pop %v5276
    %vm5280 = vweird.f32 %v2090
    %v5281 = vand.u32 %v5277, 3
    %vm5282 = vcmp.lt.s32.totalorder %v5281, 2
    %vm5283 = vcmp.eq.s32.totalorder %v5281, 0
    %v5284 = vxor.u32 %v5279, 2147483648
    %v5285 = vsel %vm5283, %v5278, %v5284
    %vm5286 = vcmp.eq.s32.totalorder %v5281, 2
    %v5287 = vxor.u32 %v5278, 2147483648
    %v5288 = vsel %vm5286, %v5287, %v5279
    %v5289 = vsel %vm5282, %v5285, %v5288
    %v5290 = vsel %vm5280, nan, %v5289
    %v5291 = vand.u32 2147483647, %v2095
    %vm5292 = vcmp.le.f32.partialorder %v5291, 0.7853982
    %vm5293 = vcmp.lt.s32.totalorder %v2095, 0
    %v5294 = vand.u32 %v2095, 2139095040
    %v5295 = vshrl.u32 %v5294, 23
    %v5296 = vsub.s32 %v5295, 127
    %v5297 = vand.u32 2147483647, %v2095
    %v5298 = vand.u32 %v5297, 8388607
    %v5299 = vor.u32 %v5298, 8388608
    %v5300 = vsub.s32 0, %v5299
    %v5301 = vadd.s32 %v5296, 1
    %vm5302 = vcmp.gt.s32.totalorder %v5301, 0
    %v5303 = vsel %vm5302, %v5301, 0
    %v5304 = vshrl.u32 %v5303, 5
    %v5305 = vand.u32 %v5303, 31
    %v5306 = vsub.s32 32, %v5305
    %v5307 = vshrl.u32 683565275, %v5306
    %v5308 = vshll.u32 683565275, %v5305
    %v5309 = vshrl.u32 2475754826, %v5306
    %v5310 = vor.u32 %v5308, %v5309
    %v5311 = vshll.u32 2475754826, %v5305
    %v5312 = vshrl.u32 2131351028, %v5306
    %v5313 = vor.u32 %v5311, %v5312
    %v5314 = vshll.u32 2131351028, %v5305
    %v5315 = vshrl.u32 2102212464, %v5306
    %v5316 = vor.u32 %v5314, %v5315
    %v5317 = vshll.u32 2102212464, %v5305
    %v5318 = vshrl.u32 920167782, %v5306
    %v5319 = vor.u32 %v5317, %v5318
    %v5320 = vshll.u32 920167782, %v5305
    %v5321 = vshrl.u32 1326507024, %v5306
    %v5322 = vor.u32 %v5320, %v5321
    %vm5323 = vcmp.lt.s32.totalorder %v5304, 1
    %vm5324 = vcmp.lt.s32.totalorder %v5304, 2
    %vm5325 = vcmp.lt.s32.totalorder %v5304, 3
    %vm5326 = vcmp.lt.s32.totalorder %v5304, 4
    %v5327 = vsel %vm5323, %v5307, %v5310
    %v5328 = vsel %vm5326, %v5316, 2102212464
    %v5329 = vsel %vm5325, %v5313, %v5328
    %v5330 = vsel %vm5324, %v5327, %v5329
    %v5331 = vsel %vm5323, %v5310, %v5313
    %v5332 = vsel %vm5326, %v5319, 920167782
    %v5333 = vsel %vm5325, %v5316, %v5332
    %v5334 = vsel %vm5324, %v5331, %v5333
    %v5335 = vsel %vm5323, %v5313, %v5316
    %v5336 = vsel %vm5326, %v5322, 1326507024
    %v5337 = vsel %vm5325, %v5319, %v5336
    %v5338 = vsel %vm5324, %v5335, %v5337
    %v5339 = vshll.u32 %v5299, 8
    %v5340 = vmul.u32.u64.compose %v5339, %v5338
    %v5341 = vextract.low.u32 %v5340
    %v5342 = vextract.high.u32 %v5340
    %v5343 = vmul.u32.u64.compose %v5339, %v5334
    %v5344 = vextract.low.u32 %v5343
    %v5345 = vextract.high.u32 %v5343
    %v5346 = vmul.u32 %v5339, %v5330
    %v5347 = vadd.s32 %v5342, %v5344
    %vm5348 = vc.u32 %v5342, %v5344
    %v5349 = vadd.s32 %v5345, 1
    %v5350 = vsel %vm5348, %v5349, %v5345
    %v5351 = vadd.s32 %v5346, %v5350
    %v5352 = vadd.s32 %v5351, 536870912
    %v5353 = vshrl.u32 %v5352, 30
    %v5354 = vshll.u32 %v5353, 30
    %v5355 = vsub.s32 %v5351, %v5354
    %vm5356 = vcmp.lt.s32.totalorder %v5355, 0
    %v5357 = vsub.s32 0, %v5355
    %v5358 = vsel %vm5356, %v5357, %v5355
    %v5359 = vclz %v5358
    %v5360 = vsub.s32 %v5359, 2
    %vm5361 = vcmp.gt.s32.totalorder 0, %v5360
    %v5362 = vsel %vm5361, 0, %v5360
    %v5363 = vsub.s32 32, %v5362
    %v5364 = vshll.u32 %v5355, %v5362
    %v5365 = vshrl.u32 %v5347, %v5363
    %v5366 = vor.u32 %v5364, %v5365
    %v5367 = vsub.s32 4294967266, %v5362
    %v5368 = vadd.s32 %v5367, 127
    %v5369 = vshll.u32 %v5368, 23
    %v5370 = vor.u32 4788187, %v5369
    %v5371 = vand.u32 2147483647, %v5370
    %v5373 = vcvt.s32.f32 %v5366
    %v5374 = vmul.f32 %v5373, %v5371
    %v5375 = vxor.u32 %v5374, 2147483648
    %v5376 = vsel %vm5293, %v5375, %v5374
    %v5377 = vsub.s32 4, %v5353
    %v5378 = vsel %vm5293, %v5377, %v5353
    %v5379 = vsel %vm5292, %v2095, %v5376
    %v5380 = vsel %vm5292, 0, %v5378
    %v5381 = vcosq.f32.pop %v5379
    %v5382 = vsinq.f32.pop %v5379
    %vm5383 = vweird.f32 %v2095
    %v5384 = vand.u32 %v5380, 3
    %vm5385 = vcmp.lt.s32.totalorder %v5384, 2
    %vm5386 = vcmp.eq.s32.totalorder %v5384, 0
    %v5387 = vxor.u32 %v5382, 2147483648
    %v5388 = vsel %vm5386, %v5381, %v5387
    %vm5389 = vcmp.eq.s32.totalorder %v5384, 2
    %v5390 = vxor.u32 %v5381, 2147483648
    %v5391 = vsel %vm5389, %v5390, %v5382
    %v5392 = vsel %vm5385, %v5388, %v5391
    %v5393 = vsel %vm5383, nan, %v5392
    %v5394 = vld [vmem:[%s7] sm:$0xff]
    %v5395 = vld [vmem:[%s7 + $0x8] sm:$0xff]
    %v5396 = vld [vmem:[%s7 + $0x10] sm:$0xff]
    %v5397 = vld [vmem:[%s7 + $0x18] sm:$0xff]
    %v5398 = vld [vmem:[%s7 + $0x20] sm:$0xff]
    %v5399 = vld [vmem:[%s7 + $0x28] sm:$0xff]
    %v5400 = vld [vmem:[%s7 + $0x30] sm:$0xff]
    %v5401 = vld [vmem:[%s7 + $0x38] sm:$0xff]
    %v5402 = vld [vmem:[%s7 + $0x40] sm:$0xff]
    %v5403 = vld [vmem:[%s7 + $0x48] sm:$0xff]
    %v5404 = vld [vmem:[%s7 + $0x50] sm:$0xff]
    %v5405 = vld [vmem:[%s7 + $0x58] sm:$0xff]
    %v5406 = vld [vmem:[%s7 + $0x60] sm:$0xff]
    %v5407 = vld [vmem:[%s7 + $0x68] sm:$0xff]
    %v5408 = vld [vmem:[%s7 + $0x70] sm:$0xff]
    %v5409 = vld [vmem:[%s7 + $0x78] sm:$0xff]
    %v5410 = vld [vmem:[%s8] sm:$0xff]
    %v5411 = vld [vmem:[%s8 + $0x8] sm:$0xff]
    %v5412 = vld [vmem:[%s8 + $0x10] sm:$0xff]
    %v5413 = vld [vmem:[%s8 + $0x18] sm:$0xff]
    %v5414 = vld [vmem:[%s8 + $0x20] sm:$0xff]
    %v5415 = vld [vmem:[%s8 + $0x28] sm:$0xff]
    %v5416 = vld [vmem:[%s8 + $0x30] sm:$0xff]
    %v5417 = vld [vmem:[%s8 + $0x38] sm:$0xff]
    %5419 = vset.pattern.permute.xlu0 0
    %5420 = vperm.xlu0 %5419, %v5410
    %v5421 = vpop.permute.xlu0 %5420
    %5424 = vset.pattern.permute.xlu0 0
    %5425 = vperm.xlu0 %5424, %v5411
    %v5426 = vpop.permute.xlu0 %5425
    %5429 = vset.pattern.permute.xlu0 0
    %5430 = vperm.xlu0 %5429, %v5412
    %v5431 = vpop.permute.xlu0 %5430
    %5434 = vset.pattern.permute.xlu0 0
    %5435 = vperm.xlu0 %5434, %v5413
    %v5436 = vpop.permute.xlu0 %5435
    %5439 = vset.pattern.permute.xlu0 0
    %5440 = vperm.xlu0 %5439, %v5414
    %v5441 = vpop.permute.xlu0 %5440
    %5444 = vset.pattern.permute.xlu0 0
    %5445 = vperm.xlu0 %5444, %v5415
    %v5446 = vpop.permute.xlu0 %5445
    %5449 = vset.pattern.permute.xlu0 0
    %5450 = vperm.xlu0 %5449, %v5416
    %v5451 = vpop.permute.xlu0 %5450
    %5454 = vset.pattern.permute.xlu0 0
    %5455 = vperm.xlu0 %5454, %v5417
    %v5456 = vpop.permute.xlu0 %5455
    %5458 = vmatprep.subr.mxu0 0.0
    %5459 = vmatpush1.msra.mxu0 %v2200
    %5460 = vmatprep.subr.mxu0 0.0
    %5461 = vmatpush1.msra.mxu0 %v2303
    %5462 = vmatprep.subr.mxu0 0.0
    %5463 = vmatpush1.msra.mxu0 %v2406
    %5464 = vmatprep.subr.mxu0 0.0
    %5465 = vmatpush1.msra.mxu0 %v2509
    %5466 = vmatprep.subr.mxu0 0.0
    %5467 = vmatpush1.msra.mxu0 %v2612
    %5468 = vmatprep.subr.mxu0 0.0
    %5469 = vmatpush1.msra.mxu0 %v2715
    %5470 = vmatprep.subr.mxu0 0.0
    %5471 = vmatpush1.msra.mxu0 %v2818
    %5472 = vmatprep.subr.mxu0 0.0
    %5473 = vmatpush1.msra.mxu0 %v2921
    %5474 = vmatprep.subr.mxu0 0.0
    %5475 = vmatpush1.msra.mxu0 %v3024
    %5476 = vmatprep.subr.mxu0 0.0
    %5477 = vmatpush1.msra.mxu0 %v3127
    %5478 = vmatprep.subr.mxu0 0.0
    %5479 = vmatpush1.msra.mxu0 %v3230
    %5480 = vmatprep.subr.mxu0 0.0
    %5481 = vmatpush1.msra.mxu0 %v3333
    %5482 = vmatprep.subr.mxu0 0.0
    %5483 = vmatpush1.msra.mxu0 %v3436
    %5484 = vmatprep.subr.mxu0 0.0
    %5485 = vmatpush1.msra.mxu0 %v3539
    %5486 = vmatprep.subr.mxu0 0.0
    %5487 = vmatpush1.msra.mxu0 %v3642
    %5488 = vmatprep.subr.mxu0 0.0
    %5489 = vmatpush1.msra.mxu0 %v3745
    %5490 = vmatprep.subr.mxu0 0.0
    %5491 = vmatpush1.msra.mxu0 %v3848
    %5492 = vmatprep.subr.mxu0 0.0
    %5493 = vmatpush1.msra.mxu0 %v3951
    %5494 = vmatprep.subr.mxu0 0.0
    %5495 = vmatpush1.msra.mxu0 %v4054
    %5496 = vmatprep.subr.mxu0 0.0
    %5497 = vmatpush1.msra.mxu0 %v4157
    %5498 = vmatprep.subr.mxu0 0.0
    %5499 = vmatpush1.msra.mxu0 %v4260
    %5500 = vmatprep.subr.mxu0 0.0
    %5501 = vmatpush1.msra.mxu0 %v4363
    %5502 = vmatprep.subr.mxu0 0.0
    %5503 = vmatpush1.msra.mxu0 %v4466
    %5504 = vmatprep.subr.mxu0 0.0
    %5505 = vmatpush1.msra.mxu0 %v4569
    %5506 = vmatprep.subr.mxu0 0.0
    %5507 = vmatpush1.msra.mxu0 %v4672
    %5508 = vmatprep.subr.mxu0 0.0
    %5509 = vmatpush1.msra.mxu0 %v4775
    %5510 = vmatprep.subr.mxu0 0.0
    %5511 = vmatpush1.msra.mxu0 %v4878
    %5512 = vmatprep.subr.mxu0 0.0
    %5513 = vmatpush1.msra.mxu0 %v4981
    %5514 = vmatprep.subr.mxu0 0.0
    %5515 = vmatpush1.msra.mxu0 %v5084
    %5516 = vmatprep.subr.mxu0 0.0
    %5517 = vmatpush1.msra.mxu0 %v5187
    %5518 = vmatprep.subr.mxu0 0.0
    %5519 = vmatpush1.msra.mxu0 %v5290
    %5520 = vmatprep.subr.mxu0 0.0
    %5521 = vmatpush1.msra.mxu0 %v5393
    %5522 = vmatprep.mubr.f32.mxu0 %v5395
    %5523 = vmatmul.mubr.f32.gmra.mrb[0].mxu0 %v5394
    %v5524 = vpop.f32.mrb[0].mxu0
    %v5525 = vadd.f32 %v5421, %v5524
    %v5526 = vpop.f32.mrb[0].mxu0
    %5527 = vmatprep.mubr.f32.mxu0 %v5397
    %5528 = vmatmul.mubr.f32.gmra.mrb[0].mxu0 %v5396
    %v5529 = vpop.f32.mrb[0].mxu0
    %v5530 = vadd.f32 %v5426, %v5529
    %v5531 = vpop.f32.mrb[0].mxu0
    %5532 = vmatprep.mubr.f32.mxu0 %v5399
    %5533 = vmatmul.mubr.f32.gmra.mrb[0].mxu0 %v5398
    %v5534 = vpop.f32.mrb[0].mxu0
    %v5535 = vadd.f32 %v5431, %v5534
    %v5536 = vpop.f32.mrb[0].mxu0
    %5537 = vmatprep.mubr.f32.mxu0 %v5401
    %5538 = vmatmul.mubr.f32.gmra.mrb[0].mxu0 %v5400
    %v5539 = vpop.f32.mrb[0].mxu0
    %v5540 = vadd.f32 %v5436, %v5539
    %v5541 = vpop.f32.mrb[0].mxu0
    %5542 = vmatprep.mubr.f32.mxu0 %v5403
    %5543 = vmatmul.mubr.f32.gmra.mrb[0].mxu0 %v5402
    %v5544 = vpop.f32.mrb[0].mxu0
    %v5545 = vadd.f32 %v5441, %v5544
    %v5546 = vpop.f32.mrb[0].mxu0
    %5547 = vmatprep.mubr.f32.mxu0 %v5405
    %5548 = vmatmul.mubr.f32.gmra.mrb[0].mxu0 %v5404
    %v5549 = vpop.f32.mrb[0].mxu0
    %v5550 = vadd.f32 %v5446, %v5549
    %v5551 = vpop.f32.mrb[0].mxu0
    %5552 = vmatprep.mubr.f32.mxu0 %v5407
    %5553 = vmatmul.mubr.f32.gmra.mrb[0].mxu0 %v5406
    %v5554 = vpop.f32.mrb[0].mxu0
    %v5555 = vadd.f32 %v5451, %v5554
    %v5556 = vpop.f32.mrb[0].mxu0
    %5557 = vmatprep.mubr.f32.mxu0 %v5409
    %5558 = vmatmul.mubr.f32.gmra.mrb[0].mxu0 %v5408
    %v5559 = vpop.f32.mrb[0].mxu0
    %v5560 = vadd.f32 %v5456, %v5559
    %v5561 = vpop.f32.mrb[0].mxu0
    %5562 = vdwg.mxu0
    %v5563 = vand.u32 2147483647, %v5525
    %vm5564 = vcmp.le.f32.partialorder %v5563, 0.7853982
    %vm5565 = vcmp.lt.s32.totalorder %v5525, 0
    %v5566 = vand.u32 %v5525, 2139095040
    %v5567 = vshrl.u32 %v5566, 23
    %v5568 = vsub.s32 %v5567, 127
    %v5569 = vand.u32 2147483647, %v5525
    %v5570 = vand.u32 %v5569, 8388607
    %v5571 = vor.u32 %v5570, 8388608
    %v5572 = vsub.s32 0, %v5571
    %v5573 = vadd.s32 %v5568, 1
    %vm5574 = vcmp.gt.s32.totalorder %v5573, 0
    %v5575 = vsel %vm5574, %v5573, 0
    %v5576 = vshrl.u32 %v5575, 5
    %v5577 = vand.u32 %v5575, 31
    %v5578 = vsub.s32 32, %v5577
    %v5579 = vshrl.u32 683565275, %v5578
    %v5580 = vshll.u32 683565275, %v5577
    %v5581 = vshrl.u32 2475754826, %v5578
    %v5582 = vor.u32 %v5580, %v5581
    %v5583 = vshll.u32 2475754826, %v5577
    %v5584 = vshrl.u32 2131351028, %v5578
    %v5585 = vor.u32 %v5583, %v5584
    %v5586 = vshll.u32 2131351028, %v5577
    %v5587 = vshrl.u32 2102212464, %v5578
    %v5588 = vor.u32 %v5586, %v5587
    %v5589 = vshll.u32 2102212464, %v5577
    %v5590 = vshrl.u32 920167782, %v5578
    %v5591 = vor.u32 %v5589, %v5590
    %v5592 = vshll.u32 920167782, %v5577
    %v5593 = vshrl.u32 1326507024, %v5578
    %v5594 = vor.u32 %v5592, %v5593
    %vm5595 = vcmp.lt.s32.totalorder %v5576, 1
    %vm5596 = vcmp.lt.s32.totalorder %v5576, 2
    %vm5597 = vcmp.lt.s32.totalorder %v5576, 3
    %vm5598 = vcmp.lt.s32.totalorder %v5576, 4
    %v5599 = vsel %vm5595, %v5579, %v5582
    %v5600 = vsel %vm5598, %v5588, 2102212464
    %v5601 = vsel %vm5597, %v5585, %v5600
    %v5602 = vsel %vm5596, %v5599, %v5601
    %v5603 = vsel %vm5595, %v5582, %v5585
    %v5604 = vsel %vm5598, %v5591, 920167782
    %v5605 = vsel %vm5597, %v5588, %v5604
    %v5606 = vsel %vm5596, %v5603, %v5605
    %v5607 = vsel %vm5595, %v5585, %v5588
    %v5608 = vsel %vm5598, %v5594, 1326507024
    %v5609 = vsel %vm5597, %v5591, %v5608
    %v5610 = vsel %vm5596, %v5607, %v5609
    %v5611 = vshll.u32 %v5571, 8
    %v5612 = vmul.u32.u64.compose %v5611, %v5610
    %v5613 = vextract.low.u32 %v5612
    %v5614 = vextract.high.u32 %v5612
    %v5615 = vmul.u32.u64.compose %v5611, %v5606
    %v5616 = vextract.low.u32 %v5615
    %v5617 = vextract.high.u32 %v5615
    %v5618 = vmul.u32 %v5611, %v5602
    %v5619 = vadd.s32 %v5614, %v5616
    %vm5620 = vc.u32 %v5614, %v5616
    %v5621 = vadd.s32 %v5617, 1
    %v5622 = vsel %vm5620, %v5621, %v5617
    %v5623 = vadd.s32 %v5618, %v5622
    %v5624 = vadd.s32 %v5623, 536870912
    %v5625 = vshrl.u32 %v5624, 30
    %v5626 = vshll.u32 %v5625, 30
    %v5627 = vsub.s32 %v5623, %v5626
    %vm5628 = vcmp.lt.s32.totalorder %v5627, 0
    %v5629 = vsub.s32 0, %v5627
    %v5630 = vsel %vm5628, %v5629, %v5627
    %v5631 = vclz %v5630
    %v5632 = vsub.s32 %v5631, 2
    %vm5633 = vcmp.gt.s32.totalorder 0, %v5632
    %v5634 = vsel %vm5633, 0, %v5632
    %v5635 = vsub.s32 32, %v5634
    %v5636 = vshll.u32 %v5627, %v5634
    %v5637 = vshrl.u32 %v5619, %v5635
    %v5638 = vor.u32 %v5636, %v5637
    %v5639 = vsub.s32 4294967266, %v5634
    %v5640 = vadd.s32 %v5639, 127
    %v5641 = vshll.u32 %v5640, 23
    %v5642 = vor.u32 4788187, %v5641
    %v5643 = vand.u32 2147483647, %v5642
    %v5645 = vcvt.s32.f32 %v5638
    %v5646 = vmul.f32 %v5645, %v5643
    %v5647 = vxor.u32 %v5646, 2147483648
    %v5648 = vsel %vm5565, %v5647, %v5646
    %v5649 = vsub.s32 4, %v5625
    %v5650 = vsel %vm5565, %v5649, %v5625
    %v5651 = vsel %vm5564, %v5525, %v5648
    %v5652 = vsel %vm5564, 0, %v5650
    %v5653 = vcosq.f32.pop %v5651
    %v5654 = vsinq.f32.pop %v5651
    %vm5655 = vweird.f32 %v5525
    %v5656 = vand.u32 %v5652, 3
    %vm5657 = vcmp.lt.s32.totalorder %v5656, 2
    %vm5658 = vcmp.eq.s32.totalorder %v5656, 0
    %v5659 = vxor.u32 %v5654, 2147483648
    %v5660 = vsel %vm5658, %v5653, %v5659
    %vm5661 = vcmp.eq.s32.totalorder %v5656, 2
    %v5662 = vxor.u32 %v5653, 2147483648
    %v5663 = vsel %vm5661, %v5662, %v5654
    %v5664 = vsel %vm5657, %v5660, %v5663
    %v5665 = vsel %vm5655, nan, %v5664
    %v5666 = vand.u32 2147483647, %v5530
    %vm5667 = vcmp.le.f32.partialorder %v5666, 0.7853982
    %vm5668 = vcmp.lt.s32.totalorder %v5530, 0
    %v5669 = vand.u32 %v5530, 2139095040
    %v5670 = vshrl.u32 %v5669, 23
    %v5671 = vsub.s32 %v5670, 127
    %v5672 = vand.u32 2147483647, %v5530
    %v5673 = vand.u32 %v5672, 8388607
    %v5674 = vor.u32 %v5673, 8388608
    %v5675 = vsub.s32 0, %v5674
    %v5676 = vadd.s32 %v5671, 1
    %vm5677 = vcmp.gt.s32.totalorder %v5676, 0
    %v5678 = vsel %vm5677, %v5676, 0
    %v5679 = vshrl.u32 %v5678, 5
    %v5680 = vand.u32 %v5678, 31
    %v5681 = vsub.s32 32, %v5680
    %v5682 = vshrl.u32 683565275, %v5681
    %v5683 = vshll.u32 683565275, %v5680
    %v5684 = vshrl.u32 2475754826, %v5681
    %v5685 = vor.u32 %v5683, %v5684
    %v5686 = vshll.u32 2475754826, %v5680
    %v5687 = vshrl.u32 2131351028, %v5681
    %v5688 = vor.u32 %v5686, %v5687
    %v5689 = vshll.u32 2131351028, %v5680
    %v5690 = vshrl.u32 2102212464, %v5681
    %v5691 = vor.u32 %v5689, %v5690
    %v5692 = vshll.u32 2102212464, %v5680
    %v5693 = vshrl.u32 920167782, %v5681
    %v5694 = vor.u32 %v5692, %v5693
    %v5695 = vshll.u32 920167782, %v5680
    %v5696 = vshrl.u32 1326507024, %v5681
    %v5697 = vor.u32 %v5695, %v5696
    %vm5698 = vcmp.lt.s32.totalorder %v5679, 1
    %vm5699 = vcmp.lt.s32.totalorder %v5679, 2
    %vm5700 = vcmp.lt.s32.totalorder %v5679, 3
    %vm5701 = vcmp.lt.s32.totalorder %v5679, 4
    %v5702 = vsel %vm5698, %v5682, %v5685
    %v5703 = vsel %vm5701, %v5691, 2102212464
    %v5704 = vsel %vm5700, %v5688, %v5703
    %v5705 = vsel %vm5699, %v5702, %v5704
    %v5706 = vsel %vm5698, %v5685, %v5688
    %v5707 = vsel %vm5701, %v5694, 920167782
    %v5708 = vsel %vm5700, %v5691, %v5707
    %v5709 = vsel %vm5699, %v5706, %v5708
    %v5710 = vsel %vm5698, %v5688, %v5691
    %v5711 = vsel %vm5701, %v5697, 1326507024
    %v5712 = vsel %vm5700, %v5694, %v5711
    %v5713 = vsel %vm5699, %v5710, %v5712
    %v5714 = vshll.u32 %v5674, 8
    %v5715 = vmul.u32.u64.compose %v5714, %v5713
    %v5716 = vextract.low.u32 %v5715
    %v5717 = vextract.high.u32 %v5715
    %v5718 = vmul.u32.u64.compose %v5714, %v5709
    %v5719 = vextract.low.u32 %v5718
    %v5720 = vextract.high.u32 %v5718
    %v5721 = vmul.u32 %v5714, %v5705
    %v5722 = vadd.s32 %v5717, %v5719
    %vm5723 = vc.u32 %v5717, %v5719
    %v5724 = vadd.s32 %v5720, 1
    %v5725 = vsel %vm5723, %v5724, %v5720
    %v5726 = vadd.s32 %v5721, %v5725
    %v5727 = vadd.s32 %v5726, 536870912
    %v5728 = vshrl.u32 %v5727, 30
    %v5729 = vshll.u32 %v5728, 30
    %v5730 = vsub.s32 %v5726, %v5729
    %vm5731 = vcmp.lt.s32.totalorder %v5730, 0
    %v5732 = vsub.s32 0, %v5730
    %v5733 = vsel %vm5731, %v5732, %v5730
    %v5734 = vclz %v5733
    %v5735 = vsub.s32 %v5734, 2
    %vm5736 = vcmp.gt.s32.totalorder 0, %v5735
    %v5737 = vsel %vm5736, 0, %v5735
    %v5738 = vsub.s32 32, %v5737
    %v5739 = vshll.u32 %v5730, %v5737
    %v5740 = vshrl.u32 %v5722, %v5738
    %v5741 = vor.u32 %v5739, %v5740
    %v5742 = vsub.s32 4294967266, %v5737
    %v5743 = vadd.s32 %v5742, 127
    %v5744 = vshll.u32 %v5743, 23
    %v5745 = vor.u32 4788187, %v5744
    %v5746 = vand.u32 2147483647, %v5745
    %v5748 = vcvt.s32.f32 %v5741
    %v5749 = vmul.f32 %v5748, %v5746
    %v5750 = vxor.u32 %v5749, 2147483648
    %v5751 = vsel %vm5668, %v5750, %v5749
    %v5752 = vsub.s32 4, %v5728
    %v5753 = vsel %vm5668, %v5752, %v5728
    %v5754 = vsel %vm5667, %v5530, %v5751
    %v5755 = vsel %vm5667, 0, %v5753
    %v5756 = vcosq.f32.pop %v5754
    %v5757 = vsinq.f32.pop %v5754
    %vm5758 = vweird.f32 %v5530
    %v5759 = vand.u32 %v5755, 3
    %vm5760 = vcmp.lt.s32.totalorder %v5759, 2
    %vm5761 = vcmp.eq.s32.totalorder %v5759, 0
    %v5762 = vxor.u32 %v5757, 2147483648
    %v5763 = vsel %vm5761, %v5756, %v5762
    %vm5764 = vcmp.eq.s32.totalorder %v5759, 2
    %v5765 = vxor.u32 %v5756, 2147483648
    %v5766 = vsel %vm5764, %v5765, %v5757
    %v5767 = vsel %vm5760, %v5763, %v5766
    %v5768 = vsel %vm5758, nan, %v5767
    %v5769 = vand.u32 2147483647, %v5535
    %vm5770 = vcmp.le.f32.partialorder %v5769, 0.7853982
    %vm5771 = vcmp.lt.s32.totalorder %v5535, 0
    %v5772 = vand.u32 %v5535, 2139095040
    %v5773 = vshrl.u32 %v5772, 23
    %v5774 = vsub.s32 %v5773, 127
    %v5775 = vand.u32 2147483647, %v5535
    %v5776 = vand.u32 %v5775, 8388607
    %v5777 = vor.u32 %v5776, 8388608
    %v5778 = vsub.s32 0, %v5777
    %v5779 = vadd.s32 %v5774, 1
    %vm5780 = vcmp.gt.s32.totalorder %v5779, 0
    %v5781 = vsel %vm5780, %v5779, 0
    %v5782 = vshrl.u32 %v5781, 5
    %v5783 = vand.u32 %v5781, 31
    %v5784 = vsub.s32 32, %v5783
    %v5785 = vshrl.u32 683565275, %v5784
    %v5786 = vshll.u32 683565275, %v5783
    %v5787 = vshrl.u32 2475754826, %v5784
    %v5788 = vor.u32 %v5786, %v5787
    %v5789 = vshll.u32 2475754826, %v5783
    %v5790 = vshrl.u32 2131351028, %v5784
    %v5791 = vor.u32 %v5789, %v5790
    %v5792 = vshll.u32 2131351028, %v5783
    %v5793 = vshrl.u32 2102212464, %v5784
    %v5794 = vor.u32 %v5792, %v5793
    %v5795 = vshll.u32 2102212464, %v5783
    %v5796 = vshrl.u32 920167782, %v5784
    %v5797 = vor.u32 %v5795, %v5796
    %v5798 = vshll.u32 920167782, %v5783
    %v5799 = vshrl.u32 1326507024, %v5784
    %v5800 = vor.u32 %v5798, %v5799
    %vm5801 = vcmp.lt.s32.totalorder %v5782, 1
    %vm5802 = vcmp.lt.s32.totalorder %v5782, 2
    %vm5803 = vcmp.lt.s32.totalorder %v5782, 3
    %vm5804 = vcmp.lt.s32.totalorder %v5782, 4
    %v5805 = vsel %vm5801, %v5785, %v5788
    %v5806 = vsel %vm5804, %v5794, 2102212464
    %v5807 = vsel %vm5803, %v5791, %v5806
    %v5808 = vsel %vm5802, %v5805, %v5807
    %v5809 = vsel %vm5801, %v5788, %v5791
    %v5810 = vsel %vm5804, %v5797, 920167782
    %v5811 = vsel %vm5803, %v5794, %v5810
    %v5812 = vsel %vm5802, %v5809, %v5811
    %v5813 = vsel %vm5801, %v5791, %v5794
    %v5814 = vsel %vm5804, %v5800, 1326507024
    %v5815 = vsel %vm5803, %v5797, %v5814
    %v5816 = vsel %vm5802, %v5813, %v5815
    %v5817 = vshll.u32 %v5777, 8
    %v5818 = vmul.u32.u64.compose %v5817, %v5816
    %v5819 = vextract.low.u32 %v5818
    %v5820 = vextract.high.u32 %v5818
    %v5821 = vmul.u32.u64.compose %v5817, %v5812
    %v5822 = vextract.low.u32 %v5821
    %v5823 = vextract.high.u32 %v5821
    %v5824 = vmul.u32 %v5817, %v5808
    %v5825 = vadd.s32 %v5820, %v5822
    %vm5826 = vc.u32 %v5820, %v5822
    %v5827 = vadd.s32 %v5823, 1
    %v5828 = vsel %vm5826, %v5827, %v5823
    %v5829 = vadd.s32 %v5824, %v5828
    %v5830 = vadd.s32 %v5829, 536870912
    %v5831 = vshrl.u32 %v5830, 30
    %v5832 = vshll.u32 %v5831, 30
    %v5833 = vsub.s32 %v5829, %v5832
    %vm5834 = vcmp.lt.s32.totalorder %v5833, 0
    %v5835 = vsub.s32 0, %v5833
    %v5836 = vsel %vm5834, %v5835, %v5833
    %v5837 = vclz %v5836
    %v5838 = vsub.s32 %v5837, 2
    %vm5839 = vcmp.gt.s32.totalorder 0, %v5838
    %v5840 = vsel %vm5839, 0, %v5838
    %v5841 = vsub.s32 32, %v5840
    %v5842 = vshll.u32 %v5833, %v5840
    %v5843 = vshrl.u32 %v5825, %v5841
    %v5844 = vor.u32 %v5842, %v5843
    %v5845 = vsub.s32 4294967266, %v5840
    %v5846 = vadd.s32 %v5845, 127
    %v5847 = vshll.u32 %v5846, 23
    %v5848 = vor.u32 4788187, %v5847
    %v5849 = vand.u32 2147483647, %v5848
    %v5851 = vcvt.s32.f32 %v5844
    %v5852 = vmul.f32 %v5851, %v5849
    %v5853 = vxor.u32 %v5852, 2147483648
    %v5854 = vsel %vm5771, %v5853, %v5852
    %v5855 = vsub.s32 4, %v5831
    %v5856 = vsel %vm5771, %v5855, %v5831
    %v5857 = vsel %vm5770, %v5535, %v5854
    %v5858 = vsel %vm5770, 0, %v5856
    %v5859 = vcosq.f32.pop %v5857
    %v5860 = vsinq.f32.pop %v5857
    %vm5861 = vweird.f32 %v5535
    %v5862 = vand.u32 %v5858, 3
    %vm5863 = vcmp.lt.s32.totalorder %v5862, 2
    %vm5864 = vcmp.eq.s32.totalorder %v5862, 0
    %v5865 = vxor.u32 %v5860, 2147483648
    %v5866 = vsel %vm5864, %v5859, %v5865
    %vm5867 = vcmp.eq.s32.totalorder %v5862, 2
    %v5868 = vxor.u32 %v5859, 2147483648
    %v5869 = vsel %vm5867, %v5868, %v5860
    %v5870 = vsel %vm5863, %v5866, %v5869
    %v5871 = vsel %vm5861, nan, %v5870
    %v5872 = vand.u32 2147483647, %v5540
    %vm5873 = vcmp.le.f32.partialorder %v5872, 0.7853982
    %vm5874 = vcmp.lt.s32.totalorder %v5540, 0
    %v5875 = vand.u32 %v5540, 2139095040
    %v5876 = vshrl.u32 %v5875, 23
    %v5877 = vsub.s32 %v5876, 127
    %v5878 = vand.u32 2147483647, %v5540
    %v5879 = vand.u32 %v5878, 8388607
    %v5880 = vor.u32 %v5879, 8388608
    %v5881 = vsub.s32 0, %v5880
    %v5882 = vadd.s32 %v5877, 1
    %vm5883 = vcmp.gt.s32.totalorder %v5882, 0
    %v5884 = vsel %vm5883, %v5882, 0
    %v5885 = vshrl.u32 %v5884, 5
    %v5886 = vand.u32 %v5884, 31
    %v5887 = vsub.s32 32, %v5886
    %v5888 = vshrl.u32 683565275, %v5887
    %v5889 = vshll.u32 683565275, %v5886
    %v5890 = vshrl.u32 2475754826, %v5887
    %v5891 = vor.u32 %v5889, %v5890
    %v5892 = vshll.u32 2475754826, %v5886
    %v5893 = vshrl.u32 2131351028, %v5887
    %v5894 = vor.u32 %v5892, %v5893
    %v5895 = vshll.u32 2131351028, %v5886
    %v5896 = vshrl.u32 2102212464, %v5887
    %v5897 = vor.u32 %v5895, %v5896
    %v5898 = vshll.u32 2102212464, %v5886
    %v5899 = vshrl.u32 920167782, %v5887
    %v5900 = vor.u32 %v5898, %v5899
    %v5901 = vshll.u32 920167782, %v5886
    %v5902 = vshrl.u32 1326507024, %v5887
    %v5903 = vor.u32 %v5901, %v5902
    %vm5904 = vcmp.lt.s32.totalorder %v5885, 1
    %vm5905 = vcmp.lt.s32.totalorder %v5885, 2
    %vm5906 = vcmp.lt.s32.totalorder %v5885, 3
    %vm5907 = vcmp.lt.s32.totalorder %v5885, 4
    %v5908 = vsel %vm5904, %v5888, %v5891
    %v5909 = vsel %vm5907, %v5897, 2102212464
    %v5910 = vsel %vm5906, %v5894, %v5909
    %v5911 = vsel %vm5905, %v5908, %v5910
    %v5912 = vsel %vm5904, %v5891, %v5894
    %v5913 = vsel %vm5907, %v5900, 920167782
    %v5914 = vsel %vm5906, %v5897, %v5913
    %v5915 = vsel %vm5905, %v5912, %v5914
    %v5916 = vsel %vm5904, %v5894, %v5897
    %v5917 = vsel %vm5907, %v5903, 1326507024
    %v5918 = vsel %vm5906, %v5900, %v5917
    %v5919 = vsel %vm5905, %v5916, %v5918
    %v5920 = vshll.u32 %v5880, 8
    %v5921 = vmul.u32.u64.compose %v5920, %v5919
    %v5922 = vextract.low.u32 %v5921
    %v5923 = vextract.high.u32 %v5921
    %v5924 = vmul.u32.u64.compose %v5920, %v5915
    %v5925 = vextract.low.u32 %v5924
    %v5926 = vextract.high.u32 %v5924
    %v5927 = vmul.u32 %v5920, %v5911
    %v5928 = vadd.s32 %v5923, %v5925
    %vm5929 = vc.u32 %v5923, %v5925
    %v5930 = vadd.s32 %v5926, 1
    %v5931 = vsel %vm5929, %v5930, %v5926
    %v5932 = vadd.s32 %v5927, %v5931
    %v5933 = vadd.s32 %v5932, 536870912
    %v5934 = vshrl.u32 %v5933, 30
    %v5935 = vshll.u32 %v5934, 30
    %v5936 = vsub.s32 %v5932, %v5935
    %vm5937 = vcmp.lt.s32.totalorder %v5936, 0
    %v5938 = vsub.s32 0, %v5936
    %v5939 = vsel %vm5937, %v5938, %v5936
    %v5940 = vclz %v5939
    %v5941 = vsub.s32 %v5940, 2
    %vm5942 = vcmp.gt.s32.totalorder 0, %v5941
    %v5943 = vsel %vm5942, 0, %v5941
    %v5944 = vsub.s32 32, %v5943
    %v5945 = vshll.u32 %v5936, %v5943
    %v5946 = vshrl.u32 %v5928, %v5944
    %v5947 = vor.u32 %v5945, %v5946
    %v5948 = vsub.s32 4294967266, %v5943
    %v5949 = vadd.s32 %v5948, 127
    %v5950 = vshll.u32 %v5949, 23
    %v5951 = vor.u32 4788187, %v5950
    %v5952 = vand.u32 2147483647, %v5951
    %v5954 = vcvt.s32.f32 %v5947
    %v5955 = vmul.f32 %v5954, %v5952
    %v5956 = vxor.u32 %v5955, 2147483648
    %v5957 = vsel %vm5874, %v5956, %v5955
    %v5958 = vsub.s32 4, %v5934
    %v5959 = vsel %vm5874, %v5958, %v5934
    %v5960 = vsel %vm5873, %v5540, %v5957
    %v5961 = vsel %vm5873, 0, %v5959
    %v5962 = vcosq.f32.pop %v5960
    %v5963 = vsinq.f32.pop %v5960
    %vm5964 = vweird.f32 %v5540
    %v5965 = vand.u32 %v5961, 3
    %vm5966 = vcmp.lt.s32.totalorder %v5965, 2
    %vm5967 = vcmp.eq.s32.totalorder %v5965, 0
    %v5968 = vxor.u32 %v5963, 2147483648
    %v5969 = vsel %vm5967, %v5962, %v5968
    %vm5970 = vcmp.eq.s32.totalorder %v5965, 2
    %v5971 = vxor.u32 %v5962, 2147483648
    %v5972 = vsel %vm5970, %v5971, %v5963
    %v5973 = vsel %vm5966, %v5969, %v5972
    %v5974 = vsel %vm5964, nan, %v5973
    %v5975 = vand.u32 2147483647, %v5545
    %vm5976 = vcmp.le.f32.partialorder %v5975, 0.7853982
    %vm5977 = vcmp.lt.s32.totalorder %v5545, 0
    %v5978 = vand.u32 %v5545, 2139095040
    %v5979 = vshrl.u32 %v5978, 23
    %v5980 = vsub.s32 %v5979, 127
    %v5981 = vand.u32 2147483647, %v5545
    %v5982 = vand.u32 %v5981, 8388607
    %v5983 = vor.u32 %v5982, 8388608
    %v5984 = vsub.s32 0, %v5983
    %v5985 = vadd.s32 %v5980, 1
    %vm5986 = vcmp.gt.s32.totalorder %v5985, 0
    %v5987 = vsel %vm5986, %v5985, 0
    %v5988 = vshrl.u32 %v5987, 5
    %v5989 = vand.u32 %v5987, 31
    %v5990 = vsub.s32 32, %v5989
    %v5991 = vshrl.u32 683565275, %v5990
    %v5992 = vshll.u32 683565275, %v5989
    %v5993 = vshrl.u32 2475754826, %v5990
    %v5994 = vor.u32 %v5992, %v5993
    %v5995 = vshll.u32 2475754826, %v5989
    %v5996 = vshrl.u32 2131351028, %v5990
    %v5997 = vor.u32 %v5995, %v5996
    %v5998 = vshll.u32 2131351028, %v5989
    %v5999 = vshrl.u32 2102212464, %v5990
    %v6000 = vor.u32 %v5998, %v5999
    %v6001 = vshll.u32 2102212464, %v5989
    %v6002 = vshrl.u32 920167782, %v5990
    %v6003 = vor.u32 %v6001, %v6002
    %v6004 = vshll.u32 920167782, %v5989
    %v6005 = vshrl.u32 1326507024, %v5990
    %v6006 = vor.u32 %v6004, %v6005
    %vm6007 = vcmp.lt.s32.totalorder %v5988, 1
    %vm6008 = vcmp.lt.s32.totalorder %v5988, 2
    %vm6009 = vcmp.lt.s32.totalorder %v5988, 3
    %vm6010 = vcmp.lt.s32.totalorder %v5988, 4
    %v6011 = vsel %vm6007, %v5991, %v5994
    %v6012 = vsel %vm6010, %v6000, 2102212464
    %v6013 = vsel %vm6009, %v5997, %v6012
    %v6014 = vsel %vm6008, %v6011, %v6013
    %v6015 = vsel %vm6007, %v5994, %v5997
    %v6016 = vsel %vm6010, %v6003, 920167782
    %v6017 = vsel %vm6009, %v6000, %v6016
    %v6018 = vsel %vm6008, %v6015, %v6017
    %v6019 = vsel %vm6007, %v5997, %v6000
    %v6020 = vsel %vm6010, %v6006, 1326507024
    %v6021 = vsel %vm6009, %v6003, %v6020
    %v6022 = vsel %vm6008, %v6019, %v6021
    %v6023 = vshll.u32 %v5983, 8
    %v6024 = vmul.u32.u64.compose %v6023, %v6022
    %v6025 = vextract.low.u32 %v6024
    %v6026 = vextract.high.u32 %v6024
    %v6027 = vmul.u32.u64.compose %v6023, %v6018
    %v6028 = vextract.low.u32 %v6027
    %v6029 = vextract.high.u32 %v6027
    %v6030 = vmul.u32 %v6023, %v6014
    %v6031 = vadd.s32 %v6026, %v6028
    %vm6032 = vc.u32 %v6026, %v6028
    %v6033 = vadd.s32 %v6029, 1
    %v6034 = vsel %vm6032, %v6033, %v6029
    %v6035 = vadd.s32 %v6030, %v6034
    %v6036 = vadd.s32 %v6035, 536870912
    %v6037 = vshrl.u32 %v6036, 30
    %v6038 = vshll.u32 %v6037, 30
    %v6039 = vsub.s32 %v6035, %v6038
    %vm6040 = vcmp.lt.s32.totalorder %v6039, 0
    %v6041 = vsub.s32 0, %v6039
    %v6042 = vsel %vm6040, %v6041, %v6039
    %v6043 = vclz %v6042
    %v6044 = vsub.s32 %v6043, 2
    %vm6045 = vcmp.gt.s32.totalorder 0, %v6044
    %v6046 = vsel %vm6045, 0, %v6044
    %v6047 = vsub.s32 32, %v6046
    %v6048 = vshll.u32 %v6039, %v6046
    %v6049 = vshrl.u32 %v6031, %v6047
    %v6050 = vor.u32 %v6048, %v6049
    %v6051 = vsub.s32 4294967266, %v6046
    %v6052 = vadd.s32 %v6051, 127
    %v6053 = vshll.u32 %v6052, 23
    %v6054 = vor.u32 4788187, %v6053
    %v6055 = vand.u32 2147483647, %v6054
    %v6057 = vcvt.s32.f32 %v6050
    %v6058 = vmul.f32 %v6057, %v6055
    %v6059 = vxor.u32 %v6058, 2147483648
    %v6060 = vsel %vm5977, %v6059, %v6058
    %v6061 = vsub.s32 4, %v6037
    %v6062 = vsel %vm5977, %v6061, %v6037
    %v6063 = vsel %vm5976, %v5545, %v6060
    %v6064 = vsel %vm5976, 0, %v6062
    %v6065 = vcosq.f32.pop %v6063
    %v6066 = vsinq.f32.pop %v6063
    %vm6067 = vweird.f32 %v5545
    %v6068 = vand.u32 %v6064, 3
    %vm6069 = vcmp.lt.s32.totalorder %v6068, 2
    %vm6070 = vcmp.eq.s32.totalorder %v6068, 0
    %v6071 = vxor.u32 %v6066, 2147483648
    %v6072 = vsel %vm6070, %v6065, %v6071
    %vm6073 = vcmp.eq.s32.totalorder %v6068, 2
    %v6074 = vxor.u32 %v6065, 2147483648
    %v6075 = vsel %vm6073, %v6074, %v6066
    %v6076 = vsel %vm6069, %v6072, %v6075
    %v6077 = vsel %vm6067, nan, %v6076
    %v6078 = vand.u32 2147483647, %v5550
    %vm6079 = vcmp.le.f32.partialorder %v6078, 0.7853982
    %vm6080 = vcmp.lt.s32.totalorder %v5550, 0
    %v6081 = vand.u32 %v5550, 2139095040
    %v6082 = vshrl.u32 %v6081, 23
    %v6083 = vsub.s32 %v6082, 127
    %v6084 = vand.u32 2147483647, %v5550
    %v6085 = vand.u32 %v6084, 8388607
    %v6086 = vor.u32 %v6085, 8388608
    %v6087 = vsub.s32 0, %v6086
    %v6088 = vadd.s32 %v6083, 1
    %vm6089 = vcmp.gt.s32.totalorder %v6088, 0
    %v6090 = vsel %vm6089, %v6088, 0
    %v6091 = vshrl.u32 %v6090, 5
    %v6092 = vand.u32 %v6090, 31
    %v6093 = vsub.s32 32, %v6092
    %v6094 = vshrl.u32 683565275, %v6093
    %v6095 = vshll.u32 683565275, %v6092
    %v6096 = vshrl.u32 2475754826, %v6093
    %v6097 = vor.u32 %v6095, %v6096
    %v6098 = vshll.u32 2475754826, %v6092
    %v6099 = vshrl.u32 2131351028, %v6093
    %v6100 = vor.u32 %v6098, %v6099
    %v6101 = vshll.u32 2131351028, %v6092
    %v6102 = vshrl.u32 2102212464, %v6093
    %v6103 = vor.u32 %v6101, %v6102
    %v6104 = vshll.u32 2102212464, %v6092
    %v6105 = vshrl.u32 920167782, %v6093
    %v6106 = vor.u32 %v6104, %v6105
    %v6107 = vshll.u32 920167782, %v6092
    %v6108 = vshrl.u32 1326507024, %v6093
    %v6109 = vor.u32 %v6107, %v6108
    %vm6110 = vcmp.lt.s32.totalorder %v6091, 1
    %vm6111 = vcmp.lt.s32.totalorder %v6091, 2
    %vm6112 = vcmp.lt.s32.totalorder %v6091, 3
    %vm6113 = vcmp.lt.s32.totalorder %v6091, 4
    %v6114 = vsel %vm6110, %v6094, %v6097
    %v6115 = vsel %vm6113, %v6103, 2102212464
    %v6116 = vsel %vm6112, %v6100, %v6115
    %v6117 = vsel %vm6111, %v6114, %v6116
    %v6118 = vsel %vm6110, %v6097, %v6100
    %v6119 = vsel %vm6113, %v6106, 920167782
    %v6120 = vsel %vm6112, %v6103, %v6119
    %v6121 = vsel %vm6111, %v6118, %v6120
    %v6122 = vsel %vm6110, %v6100, %v6103
    %v6123 = vsel %vm6113, %v6109, 1326507024
    %v6124 = vsel %vm6112, %v6106, %v6123
    %v6125 = vsel %vm6111, %v6122, %v6124
    %v6126 = vshll.u32 %v6086, 8
    %v6127 = vmul.u32.u64.compose %v6126, %v6125
    %v6128 = vextract.low.u32 %v6127
    %v6129 = vextract.high.u32 %v6127
    %v6130 = vmul.u32.u64.compose %v6126, %v6121
    %v6131 = vextract.low.u32 %v6130
    %v6132 = vextract.high.u32 %v6130
    %v6133 = vmul.u32 %v6126, %v6117
    %v6134 = vadd.s32 %v6129, %v6131
    %vm6135 = vc.u32 %v6129, %v6131
    %v6136 = vadd.s32 %v6132, 1
    %v6137 = vsel %vm6135, %v6136, %v6132
    %v6138 = vadd.s32 %v6133, %v6137
    %v6139 = vadd.s32 %v6138, 536870912
    %v6140 = vshrl.u32 %v6139, 30
    %v6141 = vshll.u32 %v6140, 30
    %v6142 = vsub.s32 %v6138, %v6141
    %vm6143 = vcmp.lt.s32.totalorder %v6142, 0
    %v6144 = vsub.s32 0, %v6142
    %v6145 = vsel %vm6143, %v6144, %v6142
    %v6146 = vclz %v6145
    %v6147 = vsub.s32 %v6146, 2
    %vm6148 = vcmp.gt.s32.totalorder 0, %v6147
    %v6149 = vsel %vm6148, 0, %v6147
    %v6150 = vsub.s32 32, %v6149
    %v6151 = vshll.u32 %v6142, %v6149
    %v6152 = vshrl.u32 %v6134, %v6150
    %v6153 = vor.u32 %v6151, %v6152
    %v6154 = vsub.s32 4294967266, %v6149
    %v6155 = vadd.s32 %v6154, 127
    %v6156 = vshll.u32 %v6155, 23
    %v6157 = vor.u32 4788187, %v6156
    %v6158 = vand.u32 2147483647, %v6157
    %v6160 = vcvt.s32.f32 %v6153
    %v6161 = vmul.f32 %v6160, %v6158
    %v6162 = vxor.u32 %v6161, 2147483648
    %v6163 = vsel %vm6080, %v6162, %v6161
    %v6164 = vsub.s32 4, %v6140
    %v6165 = vsel %vm6080, %v6164, %v6140
    %v6166 = vsel %vm6079, %v5550, %v6163
    %v6167 = vsel %vm6079, 0, %v6165
    %v6168 = vcosq.f32.pop %v6166
    %v6169 = vsinq.f32.pop %v6166
    %vm6170 = vweird.f32 %v5550
    %v6171 = vand.u32 %v6167, 3
    %vm6172 = vcmp.lt.s32.totalorder %v6171, 2
    %vm6173 = vcmp.eq.s32.totalorder %v6171, 0
    %v6174 = vxor.u32 %v6169, 2147483648
    %v6175 = vsel %vm6173, %v6168, %v6174
    %vm6176 = vcmp.eq.s32.totalorder %v6171, 2
    %v6177 = vxor.u32 %v6168, 2147483648
    %v6178 = vsel %vm6176, %v6177, %v6169
    %v6179 = vsel %vm6172, %v6175, %v6178
    %v6180 = vsel %vm6170, nan, %v6179
    %v6181 = vand.u32 2147483647, %v5555
    %vm6182 = vcmp.le.f32.partialorder %v6181, 0.7853982
    %vm6183 = vcmp.lt.s32.totalorder %v5555, 0
    %v6184 = vand.u32 %v5555, 2139095040
    %v6185 = vshrl.u32 %v6184, 23
    %v6186 = vsub.s32 %v6185, 127
    %v6187 = vand.u32 2147483647, %v5555
    %v6188 = vand.u32 %v6187, 8388607
    %v6189 = vor.u32 %v6188, 8388608
    %v6190 = vsub.s32 0, %v6189
    %v6191 = vadd.s32 %v6186, 1
    %vm6192 = vcmp.gt.s32.totalorder %v6191, 0
    %v6193 = vsel %vm6192, %v6191, 0
    %v6194 = vshrl.u32 %v6193, 5
    %v6195 = vand.u32 %v6193, 31
    %v6196 = vsub.s32 32, %v6195
    %v6197 = vshrl.u32 683565275, %v6196
    %v6198 = vshll.u32 683565275, %v6195
    %v6199 = vshrl.u32 2475754826, %v6196
    %v6200 = vor.u32 %v6198, %v6199
    %v6201 = vshll.u32 2475754826, %v6195
    %v6202 = vshrl.u32 2131351028, %v6196
    %v6203 = vor.u32 %v6201, %v6202
    %v6204 = vshll.u32 2131351028, %v6195
    %v6205 = vshrl.u32 2102212464, %v6196
    %v6206 = vor.u32 %v6204, %v6205
    %v6207 = vshll.u32 2102212464, %v6195
    %v6208 = vshrl.u32 920167782, %v6196
    %v6209 = vor.u32 %v6207, %v6208
    %v6210 = vshll.u32 920167782, %v6195
    %v6211 = vshrl.u32 1326507024, %v6196
    %v6212 = vor.u32 %v6210, %v6211
    %vm6213 = vcmp.lt.s32.totalorder %v6194, 1
    %vm6214 = vcmp.lt.s32.totalorder %v6194, 2
    %vm6215 = vcmp.lt.s32.totalorder %v6194, 3
    %vm6216 = vcmp.lt.s32.totalorder %v6194, 4
    %v6217 = vsel %vm6213, %v6197, %v6200
    %v6218 = vsel %vm6216, %v6206, 2102212464
    %v6219 = vsel %vm6215, %v6203, %v6218
    %v6220 = vsel %vm6214, %v6217, %v6219
    %v6221 = vsel %vm6213, %v6200, %v6203
    %v6222 = vsel %vm6216, %v6209, 920167782
    %v6223 = vsel %vm6215, %v6206, %v6222
    %v6224 = vsel %vm6214, %v6221, %v6223
    %v6225 = vsel %vm6213, %v6203, %v6206
    %v6226 = vsel %vm6216, %v6212, 1326507024
    %v6227 = vsel %vm6215, %v6209, %v6226
    %v6228 = vsel %vm6214, %v6225, %v6227
    %v6229 = vshll.u32 %v6189, 8
    %v6230 = vmul.u32.u64.compose %v6229, %v6228
    %v6231 = vextract.low.u32 %v6230
    %v6232 = vextract.high.u32 %v6230
    %v6233 = vmul.u32.u64.compose %v6229, %v6224
    %v6234 = vextract.low.u32 %v6233
    %v6235 = vextract.high.u32 %v6233
    %v6236 = vmul.u32 %v6229, %v6220
    %v6237 = vadd.s32 %v6232, %v6234
    %vm6238 = vc.u32 %v6232, %v6234
    %v6239 = vadd.s32 %v6235, 1
    %v6240 = vsel %vm6238, %v6239, %v6235
    %v6241 = vadd.s32 %v6236, %v6240
    %v6242 = vadd.s32 %v6241, 536870912
    %v6243 = vshrl.u32 %v6242, 30
    %v6244 = vshll.u32 %v6243, 30
    %v6245 = vsub.s32 %v6241, %v6244
    %vm6246 = vcmp.lt.s32.totalorder %v6245, 0
    %v6247 = vsub.s32 0, %v6245
    %v6248 = vsel %vm6246, %v6247, %v6245
    %v6249 = vclz %v6248
    %v6250 = vsub.s32 %v6249, 2
    %vm6251 = vcmp.gt.s32.totalorder 0, %v6250
    %v6252 = vsel %vm6251, 0, %v6250
    %v6253 = vsub.s32 32, %v6252
    %v6254 = vshll.u32 %v6245, %v6252
    %v6255 = vshrl.u32 %v6237, %v6253
    %v6256 = vor.u32 %v6254, %v6255
    %v6257 = vsub.s32 4294967266, %v6252
    %v6258 = vadd.s32 %v6257, 127
    %v6259 = vshll.u32 %v6258, 23
    %v6260 = vor.u32 4788187, %v6259
    %v6261 = vand.u32 2147483647, %v6260
    %v6263 = vcvt.s32.f32 %v6256
    %v6264 = vmul.f32 %v6263, %v6261
    %v6265 = vxor.u32 %v6264, 2147483648
    %v6266 = vsel %vm6183, %v6265, %v6264
    %v6267 = vsub.s32 4, %v6243
    %v6268 = vsel %vm6183, %v6267, %v6243
    %v6269 = vsel %vm6182, %v5555, %v6266
    %v6270 = vsel %vm6182, 0, %v6268
    %v6271 = vcosq.f32.pop %v6269
    %v6272 = vsinq.f32.pop %v6269
    %vm6273 = vweird.f32 %v5555
    %v6274 = vand.u32 %v6270, 3
    %vm6275 = vcmp.lt.s32.totalorder %v6274, 2
    %vm6276 = vcmp.eq.s32.totalorder %v6274, 0
    %v6277 = vxor.u32 %v6272, 2147483648
    %v6278 = vsel %vm6276, %v6271, %v6277
    %vm6279 = vcmp.eq.s32.totalorder %v6274, 2
    %v6280 = vxor.u32 %v6271, 2147483648
    %v6281 = vsel %vm6279, %v6280, %v6272
    %v6282 = vsel %vm6275, %v6278, %v6281
    %v6283 = vsel %vm6273, nan, %v6282
    %v6284 = vand.u32 2147483647, %v5560
    %vm6285 = vcmp.le.f32.partialorder %v6284, 0.7853982
    %vm6286 = vcmp.lt.s32.totalorder %v5560, 0
    %v6287 = vand.u32 %v5560, 2139095040
    %v6288 = vshrl.u32 %v6287, 23
    %v6289 = vsub.s32 %v6288, 127
    %v6290 = vand.u32 2147483647, %v5560
    %v6291 = vand.u32 %v6290, 8388607
    %v6292 = vor.u32 %v6291, 8388608
    %v6293 = vsub.s32 0, %v6292
    %v6294 = vadd.s32 %v6289, 1
    %vm6295 = vcmp.gt.s32.totalorder %v6294, 0
    %v6296 = vsel %vm6295, %v6294, 0
    %v6297 = vshrl.u32 %v6296, 5
    %v6298 = vand.u32 %v6296, 31
    %v6299 = vsub.s32 32, %v6298
    %v6300 = vshrl.u32 683565275, %v6299
    %v6301 = vshll.u32 683565275, %v6298
    %v6302 = vshrl.u32 2475754826, %v6299
    %v6303 = vor.u32 %v6301, %v6302
    %v6304 = vshll.u32 2475754826, %v6298
    %v6305 = vshrl.u32 2131351028, %v6299
    %v6306 = vor.u32 %v6304, %v6305
    %v6307 = vshll.u32 2131351028, %v6298
    %v6308 = vshrl.u32 2102212464, %v6299
    %v6309 = vor.u32 %v6307, %v6308
    %v6310 = vshll.u32 2102212464, %v6298
    %v6311 = vshrl.u32 920167782, %v6299
    %v6312 = vor.u32 %v6310, %v6311
    %v6313 = vshll.u32 920167782, %v6298
    %v6314 = vshrl.u32 1326507024, %v6299
    %v6315 = vor.u32 %v6313, %v6314
    %vm6316 = vcmp.lt.s32.totalorder %v6297, 1
    %vm6317 = vcmp.lt.s32.totalorder %v6297, 2
    %vm6318 = vcmp.lt.s32.totalorder %v6297, 3
    %vm6319 = vcmp.lt.s32.totalorder %v6297, 4
    %v6320 = vsel %vm6316, %v6300, %v6303
    %v6321 = vsel %vm6319, %v6309, 2102212464
    %v6322 = vsel %vm6318, %v6306, %v6321
    %v6323 = vsel %vm6317, %v6320, %v6322
    %v6324 = vsel %vm6316, %v6303, %v6306
    %v6325 = vsel %vm6319, %v6312, 920167782
    %v6326 = vsel %vm6318, %v6309, %v6325
    %v6327 = vsel %vm6317, %v6324, %v6326
    %v6328 = vsel %vm6316, %v6306, %v6309
    %v6329 = vsel %vm6319, %v6315, 1326507024
    %v6330 = vsel %vm6318, %v6312, %v6329
    %v6331 = vsel %vm6317, %v6328, %v6330
    %v6332 = vshll.u32 %v6292, 8
    %v6333 = vmul.u32.u64.compose %v6332, %v6331
    %v6334 = vextract.low.u32 %v6333
    %v6335 = vextract.high.u32 %v6333
    %v6336 = vmul.u32.u64.compose %v6332, %v6327
    %v6337 = vextract.low.u32 %v6336
    %v6338 = vextract.high.u32 %v6336
    %v6339 = vmul.u32 %v6332, %v6323
    %v6340 = vadd.s32 %v6335, %v6337
    %vm6341 = vc.u32 %v6335, %v6337
    %v6342 = vadd.s32 %v6338, 1
    %v6343 = vsel %vm6341, %v6342, %v6338
    %v6344 = vadd.s32 %v6339, %v6343
    %v6345 = vadd.s32 %v6344, 536870912
    %v6346 = vshrl.u32 %v6345, 30
    %v6347 = vshll.u32 %v6346, 30
    %v6348 = vsub.s32 %v6344, %v6347
    %vm6349 = vcmp.lt.s32.totalorder %v6348, 0
    %v6350 = vsub.s32 0, %v6348
    %v6351 = vsel %vm6349, %v6350, %v6348
    %v6352 = vclz %v6351
    %v6353 = vsub.s32 %v6352, 2
    %vm6354 = vcmp.gt.s32.totalorder 0, %v6353
    %v6355 = vsel %vm6354, 0, %v6353
    %v6356 = vsub.s32 32, %v6355
    %v6357 = vshll.u32 %v6348, %v6355
    %v6358 = vshrl.u32 %v6340, %v6356
    %v6359 = vor.u32 %v6357, %v6358
    %v6360 = vsub.s32 4294967266, %v6355
    %v6361 = vadd.s32 %v6360, 127
    %v6362 = vshll.u32 %v6361, 23
    %v6363 = vor.u32 4788187, %v6362
    %v6364 = vand.u32 2147483647, %v6363
    %v6366 = vcvt.s32.f32 %v6359
    %v6367 = vmul.f32 %v6366, %v6364
    %v6368 = vxor.u32 %v6367, 2147483648
    %v6369 = vsel %vm6286, %v6368, %v6367
    %v6370 = vsub.s32 4, %v6346
    %v6371 = vsel %vm6286, %v6370, %v6346
    %v6372 = vsel %vm6285, %v5560, %v6369
    %v6373 = vsel %vm6285, 0, %v6371
    %v6374 = vcosq.f32.pop %v6372
    %v6375 = vsinq.f32.pop %v6372
    %vm6376 = vweird.f32 %v5560
    %v6377 = vand.u32 %v6373, 3
    %vm6378 = vcmp.lt.s32.totalorder %v6377, 2
    %vm6379 = vcmp.eq.s32.totalorder %v6377, 0
    %v6380 = vxor.u32 %v6375, 2147483648
    %v6381 = vsel %vm6379, %v6374, %v6380
    %vm6382 = vcmp.eq.s32.totalorder %v6377, 2
    %v6383 = vxor.u32 %v6374, 2147483648
    %v6384 = vsel %vm6382, %v6383, %v6375
    %v6385 = vsel %vm6378, %v6381, %v6384
    %v6386 = vsel %vm6376, nan, %v6385
    %v6387 = vld [vmem:[%s9] sm:$0x1]
    %v6388 = vld [vmem:[#allocation2] sm:$0x1]
    %6390 = vset.pattern.permute.xlu0 0
    %6391 = vperm.xlu0 %6390, %v6388
    %v6392 = vpop.permute.xlu0 %6391
    %v6394 = vlaneseq
    %v6395 = vshrl.u32 %v6394, 7
    %v6396 = vsub.s32 0, %v6395
    %v6397 = vrot.slane %v6392, %v6396
    %v6399 = vsel %vm1776, %v6387, 0
    %6401 = vmatprep.subr.mxu0 0.0
    %6402 = vmatpush1.msra.mxu0 %v5665
    %6403 = vmatprep.subr.mxu0 0.0
    %6404 = vmatpush1.msra.mxu0 %v5768
    %6405 = vmatprep.subr.mxu0 0.0
    %6406 = vmatpush1.msra.mxu0 %v5871
    %6407 = vmatprep.subr.mxu0 0.0
    %6408 = vmatpush1.msra.mxu0 %v5974
    %6409 = vmatprep.subr.mxu0 0.0
    %6410 = vmatpush1.msra.mxu0 %v6077
    %6411 = vmatprep.subr.mxu0 0.0
    %6412 = vmatpush1.msra.mxu0 %v6180
    %6413 = vmatprep.subr.mxu0 0.0
    %6414 = vmatpush1.msra.mxu0 %v6283
    %6415 = vmatprep.subr.mxu0 0.0
    %6416 = vmatpush1.msra.mxu0 %v6386
    %6417 = vmatprep.subr.mxu0 0.0
    %6418 = vmatpush1.msra.mxu0 0.0
    %6419 = vmatprep.subr.mxu0 0.0
    %6420 = vmatpush1.msra.mxu0 0.0
    %6421 = vmatprep.subr.mxu0 0.0
    %6422 = vmatpush1.msra.mxu0 0.0
    %6423 = vmatprep.subr.mxu0 0.0
    %6424 = vmatpush1.msra.mxu0 0.0
    %6425 = vmatprep.subr.mxu0 0.0
    %6426 = vmatpush1.msra.mxu0 0.0
    %6427 = vmatprep.subr.mxu0 0.0
    %6428 = vmatpush1.msra.mxu0 0.0
    %6429 = vmatprep.subr.mxu0 0.0
    %6430 = vmatpush1.msra.mxu0 0.0
    %6431 = vmatprep.subr.mxu0 0.0
    %6432 = vmatpush1.msra.mxu0 0.0
    %6433 = vmatprep.subr.mxu0 0.0
    %6434 = vmatpush1.msra.mxu0 0.0
    %6435 = vmatprep.subr.mxu0 0.0
    %6436 = vmatpush1.msra.mxu0 0.0
    %6437 = vmatprep.subr.mxu0 0.0
    %6438 = vmatpush1.msra.mxu0 0.0
    %6439 = vmatprep.subr.mxu0 0.0
    %6440 = vmatpush1.msra.mxu0 0.0
    %6441 = vmatprep.subr.mxu0 0.0
    %6442 = vmatpush1.msra.mxu0 0.0
    %6443 = vmatprep.subr.mxu0 0.0
    %6444 = vmatpush1.msra.mxu0 0.0
    %6445 = vmatprep.subr.mxu0 0.0
    %6446 = vmatpush1.msra.mxu0 0.0
    %6447 = vmatprep.subr.mxu0 0.0
    %6448 = vmatpush1.msra.mxu0 0.0
    %6449 = vmatprep.subr.mxu0 0.0
    %6450 = vmatpush1.msra.mxu0 0.0
    %6451 = vmatprep.subr.mxu0 0.0
    %6452 = vmatpush1.msra.mxu0 0.0
    %6453 = vmatprep.subr.mxu0 0.0
    %6454 = vmatpush1.msra.mxu0 0.0
    %6455 = vmatprep.subr.mxu0 0.0
    %6456 = vmatpush1.msra.mxu0 0.0
    %6457 = vmatprep.subr.mxu0 0.0
    %6458 = vmatpush1.msra.mxu0 0.0
    %6459 = vmatprep.subr.mxu0 0.0
    %6460 = vmatpush1.msra.mxu0 0.0
    %6461 = vmatprep.subr.mxu0 0.0
    %6462 = vmatpush1.msra.mxu0 0.0
    %6463 = vmatprep.subr.mxu0 0.0
    %6464 = vmatpush1.msra.mxu0 0.0
    %6465 = vmatprep.mubr.f32.mxu0 0.0
    %6466 = vmatmul.mubr.f32.gmra.mrb[0].mxu0 %v6399
    %v6467 = vpop.f32.mrb[0].mxu0
    %v6468 = vadd.f32 %v6397, %v6467
    %v6469 = vpop.f32.mrb[0].mxu0
    %6470 = vdwg.mxu0
    %6471 = vst [vmem:[#allocation3] sm:$0x1] %v6468
    // Predicated region
    $region46: #{tpu_custom_call.1} parent=1 // pred_check
      _
    $region47: #{tpu_custom_call.1} parent=1 // pred_check_branch
      %6473 = sbr.rel (0) target = $region49
    $region48: #{tpu_custom_call.1} parent=1 // pred_region
      %s6475 = ssub.s32 16, 16
      %6476 = vsyncadd [#allocation4], %s6475
      %s6478 = sshll.u32 [#allocation3], 4
      %s6479 = int_to_ptr.vmem [resolvable:$true] %s6478
      %6481 = dma.vmem_to_hbm [thread:$0]  %s6479, 16, %s11, [#allocation4]
    $region49: #{tpu_custom_call.1} parent=1 // pred_fallthru
      _
    // Predicated region
    $region50: #{tpu_custom_call.1} parent=1 // pred_check
      _
    $region51: #{tpu_custom_call.1} parent=1 // pred_check_branch
      %6483 = sbr.rel (0) target = $region53
    $region52: #{tpu_custom_call.1} parent=1 // pred_region
      %6484 = dma.done [#allocation4], 16
    $region53: #{tpu_custom_call.1} parent=1 // pred_fallthru
      _
    %6485 = vsyncpa [#allocation4], 1

</llo_original>
